<compile_context>
chip_gen: v6e
topology: v6e:2x2x1
jax: 0.10.0
libtpu: 0.0.40
codegen_flags: <defaults>
</compile_context>

<pallas_src>
import functools

import jax
import jax.numpy as jnp
from jax import lax
from jax.experimental import pallas as pl
from jax.experimental.pallas import tpu as pltpu


LN_EPS = 1e-6       # matches nn.LayerNorm(in_dim, eps=1e-06)
N_AUX = 6           # position (3) + uv (2) + inter (1)
AUX_PAD = 8         # aux columns padded to 8 for clean row alignment


def _round_up(x, m):
    return (x + m - 1) // m * m


def _num_tensorcores():
    """Best-effort TensorCore count; falls back to 1 (no single-tile splitting)."""
    try:
        info = pltpu.get_tpu_info()
    except Exception:
        return 1
    for name in ("num_cores", "core_count", "num_tensorcores",
                 "cores_per_chip", "num_cores_per_chip"):
        v = getattr(info, name, None)
        if isinstance(v, int) and v > 0:
            return v
    return 1


# -----------------------------------------------------------------------------
# Kernel
# -----------------------------------------------------------------------------
def _vert_inter_kernel(
    fp_ref,    # (tm, p*D)        p verts_f rows packed per 128-lane row
    ap_ref,    # (tm, p*AUX_PAD)  p aux rows ([pos|uv|inter|0|0]) packed per row
    w_ref,     # (RW, p*D)        packed weight slab (mm dtype)
    vec_ref,   # (4, p*D)         packed bias slab (f32)
    o_ref,     # (tm, p*D)        packed output
    *, p, d, aux_p, n_aux, hid1, o_w1f, o_w1a, o_w12, o_w21, o_w4,
):
    f32 = jnp.float32
    in1 = d + n_aux
    fp = fp_ref[...].astype(f32)
    ap = ap_ref[...].astype(f32)
    mm = w_ref.dtype
    tm = fp.shape[0]
    pd = p * d

    # static slab views (zero-cost slices; LN affines already folded wrapper-side)
    w1f = w_ref[o_w1f:o_w1f + d,     0:hid1]    # (D, hid1)
    w1a = w_ref[o_w1a:o_w1a + aux_p, 0:hid1]    # (AUX_PAD, hid1), pad rows are zero
    w12 = w_ref[o_w12:o_w12 + hid1,  0:hid1]    # (hid1, hid1)
    w21 = w_ref[o_w21:o_w21 + hid1,  0:d]       # (hid1, D)

    vec = vec_ref[...]
    b1 = vec[0:1, 0:hid1]
    b2 = vec[1:2, 0:hid1]
    b3 = vec[2:3, 0:d]
    b4 = vec[3:4, :]                            # (1, p*D): b22 tiled per segment

    # mask that zeroes the AUX_PAD-N_AUX padded aux columns (kept out of LN variance)
    mask_a = (lax.broadcasted_iota(jnp.int32, (1, aux_p), 1) < n_aux).astype(f32)

    def mmul(x, w):
        return jnp.dot(x.astype(mm), w, preferred_element_type=f32)

    y_acc = jnp.zeros((tm, pd), f32)
    for s in range(p):                          # static unroll over packed segments
        xs = fp[:, s * d:(s + 1) * d]           # (tm, D)
        au = ap[:, s * aux_p:(s + 1) * aux_p]   # (tm, AUX_PAD), pad cols are zero

        # ---- LayerNorm-1 over the virtual concat [verts_f | pos | uv | inter] ----
        mu = (jnp.sum(xs, -1, keepdims=True)
              + jnp.sum(au, -1, keepdims=True)) * (1.0 / in1)
        dx = xs - mu
        da = (au - mu) * mask_a
        var = (jnp.sum(dx * dx, -1, keepdims=True)
               + jnp.sum(da * da, -1, keepdims=True)) * (1.0 / in1)
        inv = lax.rsqrt(var + LN_EPS)

        # ---- MLP block 1 (dropout == identity in eval) ----
        h = mmul(dx * inv, w1f) + mmul(da * inv, w1a) + b1
        h = jnp.maximum(h, 0.0)
        h = mmul(h, w12) + b2                   # (tm, hid1)

        # ---- LayerNorm-2 ----
        mu2 = jnp.mean(h, -1, keepdims=True)
        dh = h - mu2
        var2 = jnp.mean(dh * dh, -1, keepdims=True)
        x2 = dh * lax.rsqrt(var2 + LN_EPS)

        # ---- MLP block 2; last matmul is lane-placed into the packed output ----
        y = jnp.maximum(mmul(x2, w21) + b3, 0.0)                # (tm, D)
        w4s = w_ref[o_w4 + s * d:o_w4 + (s + 1) * d, :]          # (D, p*D) placed block
        y_acc = y_acc + mmul(y, w4s)

    o_ref[...] = (y_acc + b4).astype(o_ref.dtype)                # single dense store


# -----------------------------------------------------------------------------
# Parameters (PyTorch-style init: xavier_uniform weights, zero biases, LN defaults)
# -----------------------------------------------------------------------------
def _xavier_uniform(key, fan_in, fan_out):
    bound = (6.0 / (fan_in + fan_out)) ** 0.5
    # stored as (in, out) so x @ W == PyTorch's x @ W.T
    return jax.random.uniform(key, (fan_in, fan_out), jnp.float32, -bound, bound)


def init_params(key, verts_f_dim):
    in1 = verts_f_dim + 6
    hid1 = in1 // 2
    hid2 = verts_f_dim
    ks = jax.random.split(key, 4)
    return dict(
        g1=jnp.ones((in1,), jnp.float32), be1=jnp.zeros((in1,), jnp.float32),
        w11=_xavier_uniform(ks[0], in1, hid1), b11=jnp.zeros((hid1,), jnp.float32),
        w12=_xavier_uniform(ks[1], hid1, hid1), b12=jnp.zeros((hid1,), jnp.float32),
        g2=jnp.ones((hid1,), jnp.float32), be2=jnp.zeros((hid1,), jnp.float32),
        w21=_xavier_uniform(ks[2], hid1, hid2), b21=jnp.zeros((hid2,), jnp.float32),
        w22=_xavier_uniform(ks[3], hid2, hid2), b22=jnp.zeros((hid2,), jnp.float32),
    )


# -----------------------------------------------------------------------------
# Wrapper
# -----------------------------------------------------------------------------
@functools.partial(jax.jit, static_argnames=("tm", "use_bf16_matmul"))
def vert_inter_info_forward(params, verts_f, verts_position, verts_uv, verts_inter,
                            tm=2048, use_bf16_matmul=True):
    D = verts_f.shape[-1]
    B, N = verts_f.shape[:2]
    M = B * N
    out_dtype = verts_f.dtype
    in1 = D + N_AUX
    hid1 = in1 // 2
    assert params["w11"].shape[0] == in1
    assert D >= 6, "verts_f_dim must be >= 6"

    # lane packing factor: p consecutive rows share one 128-lane packed row
    p = 128 // D if (D <= 128 and 128 % D == 0) else 1
    aux_p = AUX_PAD
    pd = p * D
    pa = p * aux_p

    mm_dtype = jnp.bfloat16 if use_bf16_matmul else jnp.float32

    # ---- fold LayerNorm affines into the following matmuls (tiny, wrapper-side) ----
    g1, be1 = params["g1"], params["be1"]
    w11, b11 = params["w11"], params["b11"]
    w12, b12 = params["w12"], params["b12"]
    g2, be2 = params["g2"], params["be2"]
    w21, b21 = params["w21"], params["b21"]
    w22, b22 = params["w22"], params["b22"]

    w11p = g1[:, None] * w11                      # (D+6, hid1)
    b11p = b11 + be1 @ w11                        # (hid1,)
    w21p = g2[:, None] * w21                      # (hid1, D)
    b21p = b21 + be2 @ w21                        # (D,)

    # ---- pack all weights into one slab (width p*D), biases into one (4, p*D) slab ----
    def _pad2(w, rows, cols):
        z = jnp.zeros((rows, cols), jnp.float32)
        return z.at[:w.shape[0], :w.shape[1]].set(w.astype(jnp.float32))

    r_w1f, r_w1a = D, aux_p
    r_w12 = _round_up(hid1, 8)
    r_w21 = _round_up(hid1, 8)
    o_w1f = 0
    o_w1a = o_w1f + r_w1f
    o_w12 = o_w1a + r_w1a
    o_w21 = o_w12 + r_w12
    o_w4 = o_w21 + r_w21
    w4_blk = jnp.kron(jnp.eye(p, dtype=jnp.float32), w22.astype(jnp.float32))  # (pD, pD)
    w_slab = jnp.concatenate(
        [_pad2(w11p[:D], r_w1f, pd),              # rows for verts_f
         _pad2(w11p[D:], r_w1a, pd),              # rows for [pos|uv|inter] (+2 zero rows)
         _pad2(w12, r_w12, pd),
         _pad2(w21p, r_w21, pd),
         w4_blk],
        axis=0).astype(mm_dtype)

    def _pad_vec(v, width):
        z = jnp.zeros((width,), jnp.float32)
        return z.at[:v.shape[0]].set(v.astype(jnp.float32))

    vec_slab = jnp.stack([_pad_vec(b11p, pd),
                          _pad_vec(b12, pd),
                          _pad_vec(b21p, pd),
                          jnp.tile(b22.astype(jnp.float32), p)])   # (4, pD)

    # ---- data prep: pack p rows per 128-lane row (free row-major reshapes) ----
    f2 = verts_f.reshape(M, D)
    aux = jnp.concatenate(
        [verts_position.astype(verts_f.dtype),
         verts_uv.astype(verts_f.dtype),
         verts_inter.astype(verts_f.dtype),
         jnp.zeros((B, N, aux_p - N_AUX), verts_f.dtype)],
        axis=-1).reshape(M, aux_p)

    row_quant = 8 * p
    Mp = _round_up(M, row_quant)
    if Mp != M:
        # TODO(synk): ragged M still costs one pad copy of the inputs and one output
        # slice; an in-kernel masked tail store would remove it.
        f2 = jnp.pad(f2, ((0, Mp - M), (0, 0)))
        aux = jnp.pad(aux, ((0, Mp - M), (0, 0)))
    Mp4 = Mp // p
    fp = f2.reshape(Mp4, pd)
    ap = aux.reshape(Mp4, pa)

    # ---- tile sizing: big tiles, ragged grid via cdiv, gen-aware single-tile split ----
    tm_p = min(_round_up(max(tm // p, 8), 8), Mp4)
    n_steps = -(-Mp4 // tm_p)
    if n_steps == 1 and Mp4 >= 16 and _num_tensorcores() >= 2:
        tm_p = _round_up(-(-Mp4 // 2), 8)          # feed both TensorCores on 2-TC chips
        n_steps = -(-Mp4 // tm_p)

    kernel = functools.partial(
        _vert_inter_kernel, p=p, d=D, aux_p=aux_p, n_aux=N_AUX, hid1=hid1,
        o_w1f=o_w1f, o_w1a=o_w1a, o_w12=o_w12, o_w21=o_w21, o_w4=o_w4)

    out = pl.pallas_call(
        kernel,
        out_shape=jax.ShapeDtypeStruct((Mp4, pd), out_dtype),
        grid=(n_steps,),
        in_specs=[pl.BlockSpec((tm_p, pd), lambda i: (i, 0)),
                  pl.BlockSpec((tm_p, pa), lambda i: (i, 0)),
                  pl.BlockSpec(w_slab.shape, lambda i: (0, 0)),
                  pl.BlockSpec(vec_slab.shape, lambda i: (0, 0))],
        out_specs=pl.BlockSpec((tm_p, pd), lambda i: (i, 0)),
        compiler_params=pltpu.CompilerParams(dimension_semantics=("parallel",)),
    )(fp, ap, w_slab, vec_slab)

    out = out.reshape(Mp, D)
    if Mp != M:
        out = out[:M]
    return out.reshape(B, N, D)


# -----------------------------------------------------------------------------
# Pure-JAX reference (unfolded params; validates the folding / packing too)
# -----------------------------------------------------------------------------
def _reference(params, verts_f, verts_position, verts_uv, verts_inter):
    x = jnp.concatenate([verts_f, verts_position, verts_uv, verts_inter],
                        axis=-1).astype(jnp.float32)

    def ln(v, g, b):
        mu = jnp.mean(v, -1, keepdims=True)
        var = jnp.mean((v - mu) ** 2, -1, keepdims=True)
        return (v - mu) * lax.rsqrt(var + LN_EPS) * g + b

    h = ln(x, params["g1"], params["be1"])
    h = jnp.maximum(h @ params["w11"] + params["b11"], 0.0)
    h = h @ params["w12"] + params["b12"]
    y = ln(h, params["g2"], params["be2"])
    y = jnp.maximum(y @ params["w21"] + params["b21"], 0.0)
    y = y @ params["w22"] + params["b22"]
    return y


if __name__ == "__main__":
    key = jax.random.PRNGKey(0)
    kp, kf, kpos, kuv, kint = jax.random.split(key, 5)

    B, N, D = 2, 128, 32          # verts_f_dim = 32 -> in1 = 38, hid1 = 19
    params = init_params(kp, D)

    verts_f = jax.random.normal(kf, (B, N, D), jnp.float32)
    verts_position = jax.random.normal(kpos, (B, N, 3), jnp.float32)
    verts_uv = jax.random.normal(kuv, (B, N, 2), jnp.float32)
    verts_inter = jax.random.normal(kint, (B, N, 1), jnp.float32)

    ref = _reference(params, verts_f, verts_position, verts_uv, verts_inter)

    # f32-matmul path: strict check
    out = vert_inter_info_forward(params, verts_f, verts_position, verts_uv,
                                  verts_inter, use_bf16_matmul=False)
    out = jax.block_until_ready(out)
    assert out.shape == (B, N, D)
    assert jnp.allclose(out, ref, atol=1e-4, rtol=1e-4), \
        float(jnp.max(jnp.abs(out - ref)))

    # default path (bf16 MXU operands, f32 accumulation / elementwise): loose check
    out_bf16 = jax.block_until_ready(
        vert_inter_info_forward(params, verts_f, verts_position, verts_uv, verts_inter))
    assert out_bf16.shape == (B, N, D)
    assert float(jnp.max(jnp.abs(out_bf16.astype(jnp.float32) - ref))) < 0.25

    # ragged row count: exercises the pad-to-8p path
    B2, N2 = 1, 50
    vf2 = jax.random.normal(kf, (B2, N2, D), jnp.float32)
    vp2 = jax.random.normal(kpos, (B2, N2, 3), jnp.float32)
    vu2 = jax.random.normal(kuv, (B2, N2, 2), jnp.float32)
    vi2 = jax.random.normal(kint, (B2, N2, 1), jnp.float32)
    out2 = jax.block_until_ready(
        vert_inter_info_forward(params, vf2, vp2, vu2, vi2, use_bf16_matmul=False))
    ref2 = _reference(params, vf2, vp2, vu2, vi2)
    assert out2.shape == (B2, N2, D)
    assert jnp.allclose(out2, ref2, atol=1e-4, rtol=1e-4)

    print("KERNEL_OK")
</pallas_src>

<mosaic_0001>
module attributes {stable_mosaic.version = 11 : i64} {
  func.func @_vert_inter_kernel(%arg0: i32, %arg1: memref<64x128xf32, #tpu.memory_space<vmem>>, %arg2: memref<64x32xf32, #tpu.memory_space<vmem>>, %arg3: memref<216x128xf32, #tpu.memory_space<vmem>>, %arg4: memref<4x128xf32, #tpu.memory_space<vmem>>, %arg5: memref<64x128xf32, #tpu.memory_space<vmem>>) attributes {dimension_semantics = [#tpu.dimension_semantics<parallel>], iteration_bounds = array<i64: 1>, scalar_prefetch = 0 : i64, scratch_operands = 0 : i64, tpu.core_type = #tpu.core_type<tc>, window_params = [{transform_indices = @transform_0, window_bounds = array<i64: 64, 128>}, {transform_indices = @transform_1, window_bounds = array<i64: 64, 32>}, {pipeline_mode = #tpu.pipeline_mode<synchronous>, transform_indices = @transform_2, window_bounds = array<i64: 216, 128>}, {pipeline_mode = #tpu.pipeline_mode<synchronous>, transform_indices = @transform_3, window_bounds = array<i64: 4, 128>}, {transform_indices = @transform_4, window_bounds = array<i64: 64, 128>}]} {
    %c0 = arith.constant 0 : index
    %c0_0 = arith.constant 0 : index
    %0 = vector.load %arg1[%c0, %c0_0] : memref<64x128xf32, #tpu.memory_space<vmem>>, vector<64x128xf32>
    %c0_1 = arith.constant 0 : index
    %c0_2 = arith.constant 0 : index
    %1 = vector.load %arg2[%c0_1, %c0_2] : memref<64x32xf32, #tpu.memory_space<vmem>>, vector<64x32xf32>
    %c0_3 = arith.constant 0 : index
    %c0_4 = arith.constant 0 : index
    %2 = vector.load %arg3[%c0_3, %c0_4] : memref<216x128xf32, #tpu.memory_space<vmem>>, vector<32x19xf32>
    %c32 = arith.constant 32 : index
    %c0_5 = arith.constant 0 : index
    %3 = vector.load %arg3[%c32, %c0_5] : memref<216x128xf32, #tpu.memory_space<vmem>>, vector<8x19xf32>
    %c40 = arith.constant 40 : index
    %c0_6 = arith.constant 0 : index
    %4 = vector.load %arg3[%c40, %c0_6] : memref<216x128xf32, #tpu.memory_space<vmem>>, vector<19x19xf32>
    %c64 = arith.constant 64 : index
    %c0_7 = arith.constant 0 : index
    %5 = vector.load %arg3[%c64, %c0_7] : memref<216x128xf32, #tpu.memory_space<vmem>>, vector<19x32xf32>
    %c0_8 = arith.constant 0 : index
    %c0_9 = arith.constant 0 : index
    %6 = vector.load %arg4[%c0_8, %c0_9] : memref<4x128xf32, #tpu.memory_space<vmem>>, vector<4x128xf32>
    %7 = vector.extract_strided_slice %6 {offsets = [0, 0], sizes = [1, 19], strides = [1, 1]} : vector<4x128xf32> to vector<1x19xf32>
    %8 = vector.extract_strided_slice %6 {offsets = [1, 0], sizes = [1, 19], strides = [1, 1]} : vector<4x128xf32> to vector<1x19xf32>
    %9 = vector.extract_strided_slice %6 {offsets = [2, 0], sizes = [1, 32], strides = [1, 1]} : vector<4x128xf32> to vector<1x32xf32>
    %10 = vector.extract_strided_slice %6 {offsets = [3, 0], sizes = [1, 128], strides = [1, 1]} : vector<4x128xf32> to vector<1x128xf32>
    %11 = tpu.iota {dimensions = array<i32: 1>} : vector<1x8xi32>
    %c6_i32 = arith.constant 6 : i32
    %12 = vector.broadcast %c6_i32 : i32 to vector<1x8xi32>
    %13 = arith.cmpi slt, %11, %12 : vector<1x8xi32>
    %14 = arith.extui %13 : vector<1x8xi1> to vector<1x8xi32>
    %15 = arith.sitofp %14 : vector<1x8xi32> to vector<1x8xf32>
    %cst = arith.constant 0.000000e+00 : f32
    %16 = vector.broadcast %cst : f32 to vector<64x128xf32>
    %17 = vector.extract_strided_slice %0 {offsets = [0, 0], sizes = [64, 32], strides = [1, 1]} : vector<64x128xf32> to vector<64x32xf32>
    %18 = vector.extract_strided_slice %1 {offsets = [0, 0], sizes = [64, 8], strides = [1, 1]} : vector<64x32xf32> to vector<64x8xf32>
    %cst_10 = arith.constant dense<0.000000e+00> : vector<64xf32>
    %19 = vector.multi_reduction <add>, %17, %cst_10 [1] : vector<64x32xf32> to vector<64xf32>
    %20 = vector.shape_cast %19 : vector<64xf32> to vector<64x1xf32>
    %cst_11 = arith.constant dense<0.000000e+00> : vector<64xf32>
    %21 = vector.multi_reduction <add>, %18, %cst_11 [1] : vector<64x8xf32> to vector<64xf32>
    %22 = vector.shape_cast %21 : vector<64xf32> to vector<64x1xf32>
    %23 = arith.addf %20, %22 : vector<64x1xf32>
    %cst_12 = arith.constant 0.0263157897 : f32
    %24 = vector.broadcast %cst_12 : f32 to vector<64x1xf32>
    %25 = arith.mulf %23, %24 : vector<64x1xf32>
    %26 = vector.broadcast %25 : vector<64x1xf32> to vector<64x32xf32>
    %27 = arith.subf %17, %26 : vector<64x32xf32>
    %28 = vector.broadcast %25 : vector<64x1xf32> to vector<64x8xf32>
    %29 = arith.subf %18, %28 : vector<64x8xf32>
    %30 = vector.broadcast %15 : vector<1x8xf32> to vector<64x8xf32>
    %31 = arith.mulf %29, %30 : vector<64x8xf32>
    %32 = arith.mulf %27, %27 : vector<64x32xf32>
    %cst_13 = arith.constant dense<0.000000e+00> : vector<64xf32>
    %33 = vector.multi_reduction <add>, %32, %cst_13 [1] : vector<64x32xf32> to vector<64xf32>
    %34 = vector.shape_cast %33 : vector<64xf32> to vector<64x1xf32>
    %35 = arith.mulf %31, %31 : vector<64x8xf32>
    %cst_14 = arith.constant dense<0.000000e+00> : vector<64xf32>
    %36 = vector.multi_reduction <add>, %35, %cst_14 [1] : vector<64x8xf32> to vector<64xf32>
    %37 = vector.shape_cast %36 : vector<64xf32> to vector<64x1xf32>
    %38 = arith.addf %34, %37 : vector<64x1xf32>
    %cst_15 = arith.constant 0.0263157897 : f32
    %39 = vector.broadcast %cst_15 : f32 to vector<64x1xf32>
    %40 = arith.mulf %38, %39 : vector<64x1xf32>
    %cst_16 = arith.constant 9.99999997E-7 : f32
    %41 = vector.broadcast %cst_16 : f32 to vector<64x1xf32>
    %42 = arith.addf %40, %41 : vector<64x1xf32>
    %43 = math.rsqrt %42 : vector<64x1xf32>
    %44 = vector.broadcast %43 : vector<64x1xf32> to vector<64x32xf32>
    %45 = arith.mulf %27, %44 : vector<64x32xf32>
    %cst_17 = arith.constant dense<0.000000e+00> : vector<64x19xf32>
    %46 = tpu.matmul %45, %2, %cst_17 {dimension_numbers = #tpu.dot_dimension_numbers<[1], [0], [0], [1], [0, 0, 1, 1], [], []>} : vector<64x32xf32>, vector<32x19xf32>, vector<64x19xf32> -> vector<64x19xf32>
    %47 = vector.broadcast %43 : vector<64x1xf32> to vector<64x8xf32>
    %48 = arith.mulf %31, %47 : vector<64x8xf32>
    %cst_18 = arith.constant dense<0.000000e+00> : vector<64x19xf32>
    %49 = tpu.matmul %48, %3, %cst_18 {dimension_numbers = #tpu.dot_dimension_numbers<[1], [0], [0], [1], [0, 0, 1, 1], [], []>} : vector<64x8xf32>, vector<8x19xf32>, vector<64x19xf32> -> vector<64x19xf32>
    %50 = arith.addf %46, %49 : vector<64x19xf32>
    %51 = vector.broadcast %7 : vector<1x19xf32> to vector<64x19xf32>
    %52 = arith.addf %50, %51 : vector<64x19xf32>
    %cst_19 = arith.constant 0.000000e+00 : f32
    %53 = vector.broadcast %cst_19 : f32 to vector<64x19xf32>
    %54 = arith.maximumf %52, %53 : vector<64x19xf32>
    %cst_20 = arith.constant dense<0.000000e+00> : vector<64x19xf32>
    %55 = tpu.matmul %54, %4, %cst_20 {dimension_numbers = #tpu.dot_dimension_numbers<[1], [0], [0], [1], [0, 0, 1, 1], [], []>} : vector<64x19xf32>, vector<19x19xf32>, vector<64x19xf32> -> vector<64x19xf32>
    %56 = vector.broadcast %8 : vector<1x19xf32> to vector<64x19xf32>
    %57 = arith.addf %55, %56 : vector<64x19xf32>
    %cst_21 = arith.constant dense<0.000000e+00> : vector<64xf32>
    %58 = vector.multi_reduction <add>, %57, %cst_21 [1] : vector<64x19xf32> to vector<64xf32>
    %59 = vector.shape_cast %58 : vector<64xf32> to vector<64x1xf32>
    %cst_22 = arith.constant 1.900000e+01 : f32
    %60 = vector.broadcast %cst_22 : f32 to vector<64x1xf32>
    %61 = arith.divf %59, %60 : vector<64x1xf32>
    %62 = vector.broadcast %61 : vector<64x1xf32> to vector<64x19xf32>
    %63 = arith.subf %57, %62 : vector<64x19xf32>
    %64 = arith.mulf %63, %63 : vector<64x19xf32>
    %cst_23 = arith.constant dense<0.000000e+00> : vector<64xf32>
    %65 = vector.multi_reduction <add>, %64, %cst_23 [1] : vector<64x19xf32> to vector<64xf32>
    %66 = vector.shape_cast %65 : vector<64xf32> to vector<64x1xf32>
    %cst_24 = arith.constant 1.900000e+01 : f32
    %67 = vector.broadcast %cst_24 : f32 to vector<64x1xf32>
    %68 = arith.divf %66, %67 : vector<64x1xf32>
    %cst_25 = arith.constant 9.99999997E-7 : f32
    %69 = vector.broadcast %cst_25 : f32 to vector<64x1xf32>
    %70 = arith.addf %68, %69 : vector<64x1xf32>
    %71 = math.rsqrt %70 : vector<64x1xf32>
    %72 = vector.broadcast %71 : vector<64x1xf32> to vector<64x19xf32>
    %73 = arith.mulf %63, %72 : vector<64x19xf32>
    %cst_26 = arith.constant dense<0.000000e+00> : vector<64x32xf32>
    %74 = tpu.matmul %73, %5, %cst_26 {dimension_numbers = #tpu.dot_dimension_numbers<[1], [0], [0], [1], [0, 0, 1, 1], [], []>} : vector<64x19xf32>, vector<19x32xf32>, vector<64x32xf32> -> vector<64x32xf32>
    %75 = vector.broadcast %9 : vector<1x32xf32> to vector<64x32xf32>
    %76 = arith.addf %74, %75 : vector<64x32xf32>
    %cst_27 = arith.constant 0.000000e+00 : f32
    %77 = vector.broadcast %cst_27 : f32 to vector<64x32xf32>
    %78 = arith.maximumf %76, %77 : vector<64x32xf32>
    %c88 = arith.constant 88 : index
    %c0_28 = arith.constant 0 : index
    %79 = vector.load %arg3[%c88, %c0_28] : memref<216x128xf32, #tpu.memory_space<vmem>>, vector<32x128xf32>
    %cst_29 = arith.constant dense<0.000000e+00> : vector<64x128xf32>
    %80 = tpu.matmul %78, %79, %cst_29 {dimension_numbers = #tpu.dot_dimension_numbers<[1], [0], [0], [1], [0, 0, 1, 1], [], []>} : vector<64x32xf32>, vector<32x128xf32>, vector<64x128xf32> -> vector<64x128xf32>
    %81 = arith.addf %16, %80 : vector<64x128xf32>
    %82 = vector.extract_strided_slice %0 {offsets = [0, 32], sizes = [64, 32], strides = [1, 1]} : vector<64x128xf32> to vector<64x32xf32>
    %83 = vector.extract_strided_slice %1 {offsets = [0, 8], sizes = [64, 8], strides = [1, 1]} : vector<64x32xf32> to vector<64x8xf32>
    %cst_30 = arith.constant dense<0.000000e+00> : vector<64xf32>
    %84 = vector.multi_reduction <add>, %82, %cst_30 [1] : vector<64x32xf32> to vector<64xf32>
    %85 = vector.shape_cast %84 : vector<64xf32> to vector<64x1xf32>
    %cst_31 = arith.constant dense<0.000000e+00> : vector<64xf32>
    %86 = vector.multi_reduction <add>, %83, %cst_31 [1] : vector<64x8xf32> to vector<64xf32>
    %87 = vector.shape_cast %86 : vector<64xf32> to vector<64x1xf32>
    %88 = arith.addf %85, %87 : vector<64x1xf32>
    %cst_32 = arith.constant 0.0263157897 : f32
    %89 = vector.broadcast %cst_32 : f32 to vector<64x1xf32>
    %90 = arith.mulf %88, %89 : vector<64x1xf32>
    %91 = vector.broadcast %90 : vector<64x1xf32> to vector<64x32xf32>
    %92 = arith.subf %82, %91 : vector<64x32xf32>
    %93 = vector.broadcast %90 : vector<64x1xf32> to vector<64x8xf32>
    %94 = arith.subf %83, %93 : vector<64x8xf32>
    %95 = vector.broadcast %15 : vector<1x8xf32> to vector<64x8xf32>
    %96 = arith.mulf %94, %95 : vector<64x8xf32>
    %97 = arith.mulf %92, %92 : vector<64x32xf32>
    %cst_33 = arith.constant dense<0.000000e+00> : vector<64xf32>
    %98 = vector.multi_reduction <add>, %97, %cst_33 [1] : vector<64x32xf32> to vector<64xf32>
    %99 = vector.shape_cast %98 : vector<64xf32> to vector<64x1xf32>
    %100 = arith.mulf %96, %96 : vector<64x8xf32>
    %cst_34 = arith.constant dense<0.000000e+00> : vector<64xf32>
    %101 = vector.multi_reduction <add>, %100, %cst_34 [1] : vector<64x8xf32> to vector<64xf32>
    %102 = vector.shape_cast %101 : vector<64xf32> to vector<64x1xf32>
    %103 = arith.addf %99, %102 : vector<64x1xf32>
    %cst_35 = arith.constant 0.0263157897 : f32
    %104 = vector.broadcast %cst_35 : f32 to vector<64x1xf32>
    %105 = arith.mulf %103, %104 : vector<64x1xf32>
    %cst_36 = arith.constant 9.99999997E-7 : f32
    %106 = vector.broadcast %cst_36 : f32 to vector<64x1xf32>
    %107 = arith.addf %105, %106 : vector<64x1xf32>
    %108 = math.rsqrt %107 : vector<64x1xf32>
    %109 = vector.broadcast %108 : vector<64x1xf32> to vector<64x32xf32>
    %110 = arith.mulf %92, %109 : vector<64x32xf32>
    %cst_37 = arith.constant dense<0.000000e+00> : vector<64x19xf32>
    %111 = tpu.matmul %110, %2, %cst_37 {dimension_numbers = #tpu.dot_dimension_numbers<[1], [0], [0], [1], [0, 0, 1, 1], [], []>} : vector<64x32xf32>, vector<32x19xf32>, vector<64x19xf32> -> vector<64x19xf32>
    %112 = vector.broadcast %108 : vector<64x1xf32> to vector<64x8xf32>
    %113 = arith.mulf %96, %112 : vector<64x8xf32>
    %cst_38 = arith.constant dense<0.000000e+00> : vector<64x19xf32>
    %114 = tpu.matmul %113, %3, %cst_38 {dimension_numbers = #tpu.dot_dimension_numbers<[1], [0], [0], [1], [0, 0, 1, 1], [], []>} : vector<64x8xf32>, vector<8x19xf32>, vector<64x19xf32> -> vector<64x19xf32>
    %115 = arith.addf %111, %114 : vector<64x19xf32>
    %116 = vector.broadcast %7 : vector<1x19xf32> to vector<64x19xf32>
    %117 = arith.addf %115, %116 : vector<64x19xf32>
    %cst_39 = arith.constant 0.000000e+00 : f32
    %118 = vector.broadcast %cst_39 : f32 to vector<64x19xf32>
    %119 = arith.maximumf %117, %118 : vector<64x19xf32>
    %cst_40 = arith.constant dense<0.000000e+00> : vector<64x19xf32>
    %120 = tpu.matmul %119, %4, %cst_40 {dimension_numbers = #tpu.dot_dimension_numbers<[1], [0], [0], [1], [0, 0, 1, 1], [], []>} : vector<64x19xf32>, vector<19x19xf32>, vector<64x19xf32> -> vector<64x19xf32>
    %121 = vector.broadcast %8 : vector<1x19xf32> to vector<64x19xf32>
    %122 = arith.addf %120, %121 : vector<64x19xf32>
    %cst_41 = arith.constant dense<0.000000e+00> : vector<64xf32>
    %123 = vector.multi_reduction <add>, %122, %cst_41 [1] : vector<64x19xf32> to vector<64xf32>
    %124 = vector.shape_cast %123 : vector<64xf32> to vector<64x1xf32>
    %cst_42 = arith.constant 1.900000e+01 : f32
    %125 = vector.broadcast %cst_42 : f32 to vector<64x1xf32>
    %126 = arith.divf %124, %125 : vector<64x1xf32>
    %127 = vector.broadcast %126 : vector<64x1xf32> to vector<64x19xf32>
    %128 = arith.subf %122, %127 : vector<64x19xf32>
    %129 = arith.mulf %128, %128 : vector<64x19xf32>
    %cst_43 = arith.constant dense<0.000000e+00> : vector<64xf32>
    %130 = vector.multi_reduction <add>, %129, %cst_43 [1] : vector<64x19xf32> to vector<64xf32>
    %131 = vector.shape_cast %130 : vector<64xf32> to vector<64x1xf32>
    %cst_44 = arith.constant 1.900000e+01 : f32
    %132 = vector.broadcast %cst_44 : f32 to vector<64x1xf32>
    %133 = arith.divf %131, %132 : vector<64x1xf32>
    %cst_45 = arith.constant 9.99999997E-7 : f32
    %134 = vector.broadcast %cst_45 : f32 to vector<64x1xf32>
    %135 = arith.addf %133, %134 : vector<64x1xf32>
    %136 = math.rsqrt %135 : vector<64x1xf32>
    %137 = vector.broadcast %136 : vector<64x1xf32> to vector<64x19xf32>
    %138 = arith.mulf %128, %137 : vector<64x19xf32>
    %cst_46 = arith.constant dense<0.000000e+00> : vector<64x32xf32>
    %139 = tpu.matmul %138, %5, %cst_46 {dimension_numbers = #tpu.dot_dimension_numbers<[1], [0], [0], [1], [0, 0, 1, 1], [], []>} : vector<64x19xf32>, vector<19x32xf32>, vector<64x32xf32> -> vector<64x32xf32>
    %140 = vector.broadcast %9 : vector<1x32xf32> to vector<64x32xf32>
    %141 = arith.addf %139, %140 : vector<64x32xf32>
    %cst_47 = arith.constant 0.000000e+00 : f32
    %142 = vector.broadcast %cst_47 : f32 to vector<64x32xf32>
    %143 = arith.maximumf %141, %142 : vector<64x32xf32>
    %c120 = arith.constant 120 : index
    %c0_48 = arith.constant 0 : index
    %144 = vector.load %arg3[%c120, %c0_48] : memref<216x128xf32, #tpu.memory_space<vmem>>, vector<32x128xf32>
    %cst_49 = arith.constant dense<0.000000e+00> : vector<64x128xf32>
    %145 = tpu.matmul %143, %144, %cst_49 {dimension_numbers = #tpu.dot_dimension_numbers<[1], [0], [0], [1], [0, 0, 1, 1], [], []>} : vector<64x32xf32>, vector<32x128xf32>, vector<64x128xf32> -> vector<64x128xf32>
    %146 = arith.addf %81, %145 : vector<64x128xf32>
    %147 = vector.extract_strided_slice %0 {offsets = [0, 64], sizes = [64, 32], strides = [1, 1]} : vector<64x128xf32> to vector<64x32xf32>
    %148 = vector.extract_strided_slice %1 {offsets = [0, 16], sizes = [64, 8], strides = [1, 1]} : vector<64x32xf32> to vector<64x8xf32>
    %cst_50 = arith.constant dense<0.000000e+00> : vector<64xf32>
    %149 = vector.multi_reduction <add>, %147, %cst_50 [1] : vector<64x32xf32> to vector<64xf32>
    %150 = vector.shape_cast %149 : vector<64xf32> to vector<64x1xf32>
    %cst_51 = arith.constant dense<0.000000e+00> : vector<64xf32>
    %151 = vector.multi_reduction <add>, %148, %cst_51 [1] : vector<64x8xf32> to vector<64xf32>
    %152 = vector.shape_cast %151 : vector<64xf32> to vector<64x1xf32>
    %153 = arith.addf %150, %152 : vector<64x1xf32>
    %cst_52 = arith.constant 0.0263157897 : f32
    %154 = vector.broadcast %cst_52 : f32 to vector<64x1xf32>
    %155 = arith.mulf %153, %154 : vector<64x1xf32>
    %156 = vector.broadcast %155 : vector<64x1xf32> to vector<64x32xf32>
    %157 = arith.subf %147, %156 : vector<64x32xf32>
    %158 = vector.broadcast %155 : vector<64x1xf32> to vector<64x8xf32>
    %159 = arith.subf %148, %158 : vector<64x8xf32>
    %160 = vector.broadcast %15 : vector<1x8xf32> to vector<64x8xf32>
    %161 = arith.mulf %159, %160 : vector<64x8xf32>
    %162 = arith.mulf %157, %157 : vector<64x32xf32>
    %cst_53 = arith.constant dense<0.000000e+00> : vector<64xf32>
    %163 = vector.multi_reduction <add>, %162, %cst_53 [1] : vector<64x32xf32> to vector<64xf32>
    %164 = vector.shape_cast %163 : vector<64xf32> to vector<64x1xf32>
    %165 = arith.mulf %161, %161 : vector<64x8xf32>
    %cst_54 = arith.constant dense<0.000000e+00> : vector<64xf32>
    %166 = vector.multi_reduction <add>, %165, %cst_54 [1] : vector<64x8xf32> to vector<64xf32>
    %167 = vector.shape_cast %166 : vector<64xf32> to vector<64x1xf32>
    %168 = arith.addf %164, %167 : vector<64x1xf32>
    %cst_55 = arith.constant 0.0263157897 : f32
    %169 = vector.broadcast %cst_55 : f32 to vector<64x1xf32>
    %170 = arith.mulf %168, %169 : vector<64x1xf32>
    %cst_56 = arith.constant 9.99999997E-7 : f32
    %171 = vector.broadcast %cst_56 : f32 to vector<64x1xf32>
    %172 = arith.addf %170, %171 : vector<64x1xf32>
    %173 = math.rsqrt %172 : vector<64x1xf32>
    %174 = vector.broadcast %173 : vector<64x1xf32> to vector<64x32xf32>
    %175 = arith.mulf %157, %174 : vector<64x32xf32>
    %cst_57 = arith.constant dense<0.000000e+00> : vector<64x19xf32>
    %176 = tpu.matmul %175, %2, %cst_57 {dimension_numbers = #tpu.dot_dimension_numbers<[1], [0], [0], [1], [0, 0, 1, 1], [], []>} : vector<64x32xf32>, vector<32x19xf32>, vector<64x19xf32> -> vector<64x19xf32>
    %177 = vector.broadcast %173 : vector<64x1xf32> to vector<64x8xf32>
    %178 = arith.mulf %161, %177 : vector<64x8xf32>
    %cst_58 = arith.constant dense<0.000000e+00> : vector<64x19xf32>
    %179 = tpu.matmul %178, %3, %cst_58 {dimension_numbers = #tpu.dot_dimension_numbers<[1], [0], [0], [1], [0, 0, 1, 1], [], []>} : vector<64x8xf32>, vector<8x19xf32>, vector<64x19xf32> -> vector<64x19xf32>
    %180 = arith.addf %176, %179 : vector<64x19xf32>
    %181 = vector.broadcast %7 : vector<1x19xf32> to vector<64x19xf32>
    %182 = arith.addf %180, %181 : vector<64x19xf32>
    %cst_59 = arith.constant 0.000000e+00 : f32
    %183 = vector.broadcast %cst_59 : f32 to vector<64x19xf32>
    %184 = arith.maximumf %182, %183 : vector<64x19xf32>
    %cst_60 = arith.constant dense<0.000000e+00> : vector<64x19xf32>
    %185 = tpu.matmul %184, %4, %cst_60 {dimension_numbers = #tpu.dot_dimension_numbers<[1], [0], [0], [1], [0, 0, 1, 1], [], []>} : vector<64x19xf32>, vector<19x19xf32>, vector<64x19xf32> -> vector<64x19xf32>
    %186 = vector.broadcast %8 : vector<1x19xf32> to vector<64x19xf32>
    %187 = arith.addf %185, %186 : vector<64x19xf32>
    %cst_61 = arith.constant dense<0.000000e+00> : vector<64xf32>
    %188 = vector.multi_reduction <add>, %187, %cst_61 [1] : vector<64x19xf32> to vector<64xf32>
    %189 = vector.shape_cast %188 : vector<64xf32> to vector<64x1xf32>
    %cst_62 = arith.constant 1.900000e+01 : f32
    %190 = vector.broadcast %cst_62 : f32 to vector<64x1xf32>
    %191 = arith.divf %189, %190 : vector<64x1xf32>
    %192 = vector.broadcast %191 : vector<64x1xf32> to vector<64x19xf32>
    %193 = arith.subf %187, %192 : vector<64x19xf32>
    %194 = arith.mulf %193, %193 : vector<64x19xf32>
    %cst_63 = arith.constant dense<0.000000e+00> : vector<64xf32>
    %195 = vector.multi_reduction <add>, %194, %cst_63 [1] : vector<64x19xf32> to vector<64xf32>
    %196 = vector.shape_cast %195 : vector<64xf32> to vector<64x1xf32>
    %cst_64 = arith.constant 1.900000e+01 : f32
    %197 = vector.broadcast %cst_64 : f32 to vector<64x1xf32>
    %198 = arith.divf %196, %197 : vector<64x1xf32>
    %cst_65 = arith.constant 9.99999997E-7 : f32
    %199 = vector.broadcast %cst_65 : f32 to vector<64x1xf32>
    %200 = arith.addf %198, %199 : vector<64x1xf32>
    %201 = math.rsqrt %200 : vector<64x1xf32>
    %202 = vector.broadcast %201 : vector<64x1xf32> to vector<64x19xf32>
    %203 = arith.mulf %193, %202 : vector<64x19xf32>
    %cst_66 = arith.constant dense<0.000000e+00> : vector<64x32xf32>
    %204 = tpu.matmul %203, %5, %cst_66 {dimension_numbers = #tpu.dot_dimension_numbers<[1], [0], [0], [1], [0, 0, 1, 1], [], []>} : vector<64x19xf32>, vector<19x32xf32>, vector<64x32xf32> -> vector<64x32xf32>
    %205 = vector.broadcast %9 : vector<1x32xf32> to vector<64x32xf32>
    %206 = arith.addf %204, %205 : vector<64x32xf32>
    %cst_67 = arith.constant 0.000000e+00 : f32
    %207 = vector.broadcast %cst_67 : f32 to vector<64x32xf32>
    %208 = arith.maximumf %206, %207 : vector<64x32xf32>
    %c152 = arith.constant 152 : index
    %c0_68 = arith.constant 0 : index
    %209 = vector.load %arg3[%c152, %c0_68] : memref<216x128xf32, #tpu.memory_space<vmem>>, vector<32x128xf32>
    %cst_69 = arith.constant dense<0.000000e+00> : vector<64x128xf32>
    %210 = tpu.matmul %208, %209, %cst_69 {dimension_numbers = #tpu.dot_dimension_numbers<[1], [0], [0], [1], [0, 0, 1, 1], [], []>} : vector<64x32xf32>, vector<32x128xf32>, vector<64x128xf32> -> vector<64x128xf32>
    %211 = arith.addf %146, %210 : vector<64x128xf32>
    %212 = vector.extract_strided_slice %0 {offsets = [0, 96], sizes = [64, 32], strides = [1, 1]} : vector<64x128xf32> to vector<64x32xf32>
    %213 = vector.extract_strided_slice %1 {offsets = [0, 24], sizes = [64, 8], strides = [1, 1]} : vector<64x32xf32> to vector<64x8xf32>
    %cst_70 = arith.constant dense<0.000000e+00> : vector<64xf32>
    %214 = vector.multi_reduction <add>, %212, %cst_70 [1] : vector<64x32xf32> to vector<64xf32>
    %215 = vector.shape_cast %214 : vector<64xf32> to vector<64x1xf32>
    %cst_71 = arith.constant dense<0.000000e+00> : vector<64xf32>
    %216 = vector.multi_reduction <add>, %213, %cst_71 [1] : vector<64x8xf32> to vector<64xf32>
    %217 = vector.shape_cast %216 : vector<64xf32> to vector<64x1xf32>
    %218 = arith.addf %215, %217 : vector<64x1xf32>
    %cst_72 = arith.constant 0.0263157897 : f32
    %219 = vector.broadcast %cst_72 : f32 to vector<64x1xf32>
    %220 = arith.mulf %218, %219 : vector<64x1xf32>
    %221 = vector.broadcast %220 : vector<64x1xf32> to vector<64x32xf32>
    %222 = arith.subf %212, %221 : vector<64x32xf32>
    %223 = vector.broadcast %220 : vector<64x1xf32> to vector<64x8xf32>
    %224 = arith.subf %213, %223 : vector<64x8xf32>
    %225 = vector.broadcast %15 : vector<1x8xf32> to vector<64x8xf32>
    %226 = arith.mulf %224, %225 : vector<64x8xf32>
    %227 = arith.mulf %222, %222 : vector<64x32xf32>
    %cst_73 = arith.constant dense<0.000000e+00> : vector<64xf32>
    %228 = vector.multi_reduction <add>, %227, %cst_73 [1] : vector<64x32xf32> to vector<64xf32>
    %229 = vector.shape_cast %228 : vector<64xf32> to vector<64x1xf32>
    %230 = arith.mulf %226, %226 : vector<64x8xf32>
    %cst_74 = arith.constant dense<0.000000e+00> : vector<64xf32>
    %231 = vector.multi_reduction <add>, %230, %cst_74 [1] : vector<64x8xf32> to vector<64xf32>
    %232 = vector.shape_cast %231 : vector<64xf32> to vector<64x1xf32>
    %233 = arith.addf %229, %232 : vector<64x1xf32>
    %cst_75 = arith.constant 0.0263157897 : f32
    %234 = vector.broadcast %cst_75 : f32 to vector<64x1xf32>
    %235 = arith.mulf %233, %234 : vector<64x1xf32>
    %cst_76 = arith.constant 9.99999997E-7 : f32
    %236 = vector.broadcast %cst_76 : f32 to vector<64x1xf32>
    %237 = arith.addf %235, %236 : vector<64x1xf32>
    %238 = math.rsqrt %237 : vector<64x1xf32>
    %239 = vector.broadcast %238 : vector<64x1xf32> to vector<64x32xf32>
    %240 = arith.mulf %222, %239 : vector<64x32xf32>
    %cst_77 = arith.constant dense<0.000000e+00> : vector<64x19xf32>
    %241 = tpu.matmul %240, %2, %cst_77 {dimension_numbers = #tpu.dot_dimension_numbers<[1], [0], [0], [1], [0, 0, 1, 1], [], []>} : vector<64x32xf32>, vector<32x19xf32>, vector<64x19xf32> -> vector<64x19xf32>
    %242 = vector.broadcast %238 : vector<64x1xf32> to vector<64x8xf32>
    %243 = arith.mulf %226, %242 : vector<64x8xf32>
    %cst_78 = arith.constant dense<0.000000e+00> : vector<64x19xf32>
    %244 = tpu.matmul %243, %3, %cst_78 {dimension_numbers = #tpu.dot_dimension_numbers<[1], [0], [0], [1], [0, 0, 1, 1], [], []>} : vector<64x8xf32>, vector<8x19xf32>, vector<64x19xf32> -> vector<64x19xf32>
    %245 = arith.addf %241, %244 : vector<64x19xf32>
    %246 = vector.broadcast %7 : vector<1x19xf32> to vector<64x19xf32>
    %247 = arith.addf %245, %246 : vector<64x19xf32>
    %cst_79 = arith.constant 0.000000e+00 : f32
    %248 = vector.broadcast %cst_79 : f32 to vector<64x19xf32>
    %249 = arith.maximumf %247, %248 : vector<64x19xf32>
    %cst_80 = arith.constant dense<0.000000e+00> : vector<64x19xf32>
    %250 = tpu.matmul %249, %4, %cst_80 {dimension_numbers = #tpu.dot_dimension_numbers<[1], [0], [0], [1], [0, 0, 1, 1], [], []>} : vector<64x19xf32>, vector<19x19xf32>, vector<64x19xf32> -> vector<64x19xf32>
    %251 = vector.broadcast %8 : vector<1x19xf32> to vector<64x19xf32>
    %252 = arith.addf %250, %251 : vector<64x19xf32>
    %cst_81 = arith.constant dense<0.000000e+00> : vector<64xf32>
    %253 = vector.multi_reduction <add>, %252, %cst_81 [1] : vector<64x19xf32> to vector<64xf32>
    %254 = vector.shape_cast %253 : vector<64xf32> to vector<64x1xf32>
    %cst_82 = arith.constant 1.900000e+01 : f32
    %255 = vector.broadcast %cst_82 : f32 to vector<64x1xf32>
    %256 = arith.divf %254, %255 : vector<64x1xf32>
    %257 = vector.broadcast %256 : vector<64x1xf32> to vector<64x19xf32>
    %258 = arith.subf %252, %257 : vector<64x19xf32>
    %259 = arith.mulf %258, %258 : vector<64x19xf32>
    %cst_83 = arith.constant dense<0.000000e+00> : vector<64xf32>
    %260 = vector.multi_reduction <add>, %259, %cst_83 [1] : vector<64x19xf32> to vector<64xf32>
    %261 = vector.shape_cast %260 : vector<64xf32> to vector<64x1xf32>
    %cst_84 = arith.constant 1.900000e+01 : f32
    %262 = vector.broadcast %cst_84 : f32 to vector<64x1xf32>
    %263 = arith.divf %261, %262 : vector<64x1xf32>
    %cst_85 = arith.constant 9.99999997E-7 : f32
    %264 = vector.broadcast %cst_85 : f32 to vector<64x1xf32>
    %265 = arith.addf %263, %264 : vector<64x1xf32>
    %266 = math.rsqrt %265 : vector<64x1xf32>
    %267 = vector.broadcast %266 : vector<64x1xf32> to vector<64x19xf32>
    %268 = arith.mulf %258, %267 : vector<64x19xf32>
    %cst_86 = arith.constant dense<0.000000e+00> : vector<64x32xf32>
    %269 = tpu.matmul %268, %5, %cst_86 {dimension_numbers = #tpu.dot_dimension_numbers<[1], [0], [0], [1], [0, 0, 1, 1], [], []>} : vector<64x19xf32>, vector<19x32xf32>, vector<64x32xf32> -> vector<64x32xf32>
    %270 = vector.broadcast %9 : vector<1x32xf32> to vector<64x32xf32>
    %271 = arith.addf %269, %270 : vector<64x32xf32>
    %cst_87 = arith.constant 0.000000e+00 : f32
    %272 = vector.broadcast %cst_87 : f32 to vector<64x32xf32>
    %273 = arith.maximumf %271, %272 : vector<64x32xf32>
    %c184 = arith.constant 184 : index
    %c0_88 = arith.constant 0 : index
    %274 = vector.load %arg3[%c184, %c0_88] : memref<216x128xf32, #tpu.memory_space<vmem>>, vector<32x128xf32>
    %cst_89 = arith.constant dense<0.000000e+00> : vector<64x128xf32>
    %275 = tpu.matmul %273, %274, %cst_89 {dimension_numbers = #tpu.dot_dimension_numbers<[1], [0], [0], [1], [0, 0, 1, 1], [], []>} : vector<64x32xf32>, vector<32x128xf32>, vector<64x128xf32> -> vector<64x128xf32>
    %276 = arith.addf %211, %275 : vector<64x128xf32>
    %277 = vector.broadcast %10 : vector<1x128xf32> to vector<64x128xf32>
    %278 = arith.addf %276, %277 : vector<64x128xf32>
    %c0_90 = arith.constant 0 : index
    %c0_91 = arith.constant 0 : index
    %279 = vector.load %arg5[%c0_90, %c0_91] : memref<64x128xf32, #tpu.memory_space<vmem>>, vector<64x128xf32>
    tpu.vector_store %arg5[%c0_90, %c0_91], %278 {strides = array<i32>} : memref<64x128xf32, #tpu.memory_space<vmem>>, vector<64x128xf32>,
    return
  }
  func.func @transform_0(%arg0: i32) -> (i32, i32) {
    %c0_i32 = arith.constant 0 : i32
    %c0_i32_0 = arith.constant 0 : i32
    return %arg0, %c0_i32 : i32, i32
  }
  func.func @transform_1(%arg0: i32) -> (i32, i32) {
    %c0_i32 = arith.constant 0 : i32
    %c0_i32_0 = arith.constant 0 : i32
    return %arg0, %c0_i32 : i32, i32
  }
  func.func @transform_2(%arg0: i32) -> (i32, i32) {
    %c0_i32 = arith.constant 0 : i32
    %c0_i32_0 = arith.constant 0 : i32
    %c0_i32_1 = arith.constant 0 : i32
    return %c0_i32, %c0_i32_0 : i32, i32
  }
  func.func @transform_3(%arg0: i32) -> (i32, i32) {
    %c0_i32 = arith.constant 0 : i32
    %c0_i32_0 = arith.constant 0 : i32
    %c0_i32_1 = arith.constant 0 : i32
    return %c0_i32, %c0_i32_0 : i32, i32
  }
  func.func @transform_4(%arg0: i32) -> (i32, i32) {
    %c0_i32 = arith.constant 0 : i32
    %c0_i32_0 = arith.constant 0 : i32
    return %arg0, %c0_i32 : i32, i32
  }
}

</mosaic_0001>

<llo_original>
// kernel: tile.8
$region0: #{tile.8}
  #allocation0 [shape = 's32[1]{0}', space=sflag, size = 0x4, scoped, tag = 'scoped memory for tile.8']
  %s0 = inlined_call_operand.vmem [shape: f32[32], index: 0, kind: input, shape index: {}]
  %s1 = inlined_call_operand.vmem [shape: f32[4,32], index: 1, kind: output, shape index: {}]
  // Predicated region
  $region2: #{tile.8} parent=0 // pred_check
    _
  $region3: #{tile.8} parent=0 // pred_check_branch
    %3 = sbr.rel (0) target = $region5
  $region4: #{tile.8} parent=0 // pred_region
    _
  $region5: #{tile.8} parent=0 // pred_fallthru
    _
  %v4 = vld [vmem:[%s0] ss:$0 sm:$0xff]
  %5 = vst [vmem:[%s1] sm:$0xf] %v4

// kernel: tile.9
$region0: #{tile.9}
  %s0 = inlined_call_operand.vmem [shape: f32[4,32], index: 0, kind: input, shape index: {}]
  %s1 = inlined_call_operand.vmem [shape: f32[1,128], index: 1, kind: output, shape index: {}]
  $region1: #{tile.9} parent=0
    #allocation0 [shape = 'u8[4096]{0}', space=vmem, size = 0x1000, scoped, tag = 'scoped mem for output reshape']
    #allocation1 [shape = 'u8[4096]{0}', space=vmem, size = 0x1000, scoped, tag = 'scoped mem for input reshape']
    %s3 = sshll.u32 1, 4
    %s4 = ssub.s32 %s3, 1
    %v5 = vld [vmem:[%s0] sm:%s4]
    %6 = vst [vmem:[#allocation1] sm:%s4] %v5
    %v7 = vld [vmem:[#allocation1] sm:$0x1]
    %vm8 = vcmask 261120
    %9 = vst.msk [vmem:[#allocation0] sm:$0x1] %vm8, %v7
    %s10 = scalar_lea.vmem [#allocation1], 3
    %v11 = vld [vmem:[%s10] sm:$0x1]
    %12 = vrot.lane.b32.xlu0 %v11, 96
    %v13 = vpop.permute.xlu0 %12
    %vm14 = vcmask 1048320
    %15 = vst.msk [vmem:[#allocation0] sm:$0x1] %vm14, %v13
    %s16 = scalar_lea.vmem [#allocation1], 2
    %v17 = vld [vmem:[%s16] sm:$0x1]
    %18 = vrot.lane.b32.xlu0 %v17, 64
    %v19 = vpop.permute.xlu0 %18
    %vm20 = vcmask 785920
    %21 = vst.msk [vmem:[#allocation0] sm:$0x1] %vm20, %v19
    %s22 = scalar_lea.vmem [#allocation1], 1
    %v23 = vld [vmem:[%s22] sm:$0x1]
    %24 = vrot.lane.b32.xlu0 %v23, 32
    %v25 = vpop.permute.xlu0 %24
    %vm26 = vcmask 523520
    %27 = vst.msk [vmem:[#allocation0] sm:$0x1] %vm26, %v25
    %s29 = sshll.u32 1, 1
    %s30 = ssub.s32 %s29, 1
    %v32 = vld [vmem:[#allocation0] sm:%s30]
    %s33 = sshll.u32 1, 1
    %s34 = ssub.s32 %s33, 1
    %35 = vst [vmem:[%s1] sm:%s34] %v32

// kernel: vert_inter_info_forward.1
$region0: #{vert_inter_info_forward.1}
  #allocation0 [shape = 'u32[]', space=smem, size = 0x4, offset = 0x4, fixed_abs, tag = 'smem constant byte address 0x4 - core index']
  #allocation1 [shape = 'u32[144,128]{1,0:T(1,128)}', space=vmem, size = 0x12000, scoped, tag = 'internal scratch']
  %s0 = inlined_call_operand.vmem [shape: f32[64,128], index: 0, kind: input, shape index: {}]
  %s1 = inlined_call_operand.vmem [shape: f32[64,32], index: 1, kind: input, shape index: {}]
  %s2 = inlined_call_operand.vmem [shape: f32[216,128], index: 2, kind: input, shape index: {}]
  %s3 = inlined_call_operand.vmem [shape: f32[4,128], index: 3, kind: input, shape index: {}]
  %s4 = inlined_call_operand.vmem [shape: f32[64,128], index: 4, kind: output, shape index: {}]
  %s5 = sld [smem:[#allocation0]]
  $region26: #{vert_inter_info_forward.1} parent=0
    _
  %s7 = ssub.s32 1, %s5
  %s8 = scalar_select 0, %s7, %s5
  // Predicated region
  $region2: #{vert_inter_info_forward.1} parent=0 // pred_check
    _
  $region3: #{vert_inter_info_forward.1} parent=0 // pred_check_branch
    %10 = sbr.rel (0) target = $region5
  $region4: #{vert_inter_info_forward.1} parent=0 // pred_region
    _
  $region5: #{vert_inter_info_forward.1} parent=0 // pred_fallthru
    _
  // Predicated region
  $region6: #{vert_inter_info_forward.1} parent=0 // pred_check
    _
  $region7: #{vert_inter_info_forward.1} parent=0 // pred_check_branch
    %12 = sbr.rel (0) target = $region9
  $region8: #{vert_inter_info_forward.1} parent=0 // pred_region
    _
  $region9: #{vert_inter_info_forward.1} parent=0 // pred_fallthru
    _
  // Predicated region
  $region10: #{vert_inter_info_forward.1} parent=0 // pred_check
    _
  $region11: #{vert_inter_info_forward.1} parent=0 // pred_check_branch
    %14 = sbr.rel (0) target = $region13
  $region12: #{vert_inter_info_forward.1} parent=0 // pred_region
    _
  $region13: #{vert_inter_info_forward.1} parent=0 // pred_fallthru
    _
  // Predicated region
  $region14: #{vert_inter_info_forward.1} parent=0 // pred_check
    _
  $region15: #{vert_inter_info_forward.1} parent=0 // pred_check_branch
    %16 = sbr.rel (0) target = $region17
  $region16: #{vert_inter_info_forward.1} parent=0 // pred_region
    _
  $region17: #{vert_inter_info_forward.1} parent=0 // pred_fallthru
    _
  %v17 = vld [vmem:[%s0] sm:$0xff]
  %v18 = vld [vmem:[%s0 + $0x8] sm:$0xff]
  %v19 = vld [vmem:[%s0 + $0x10] sm:$0xff]
  %v20 = vld [vmem:[%s0 + $0x18] sm:$0xff]
  %v21 = vld [vmem:[%s0 + $0x20] sm:$0xff]
  %v22 = vld [vmem:[%s0 + $0x28] sm:$0xff]
  %v23 = vld [vmem:[%s0 + $0x30] sm:$0xff]
  %v24 = vld [vmem:[%s0 + $0x38] sm:$0xff]
  %v25 = vld [vmem:[%s1] sm:$0xff]
  %v26 = vld [vmem:[%s1 + $0x8] sm:$0xff]
  %v27 = vld [vmem:[%s1 + $0x10] sm:$0xff]
  %v28 = vld [vmem:[%s1 + $0x18] sm:$0xff]
  %v29 = vld [vmem:[%s1 + $0x20] sm:$0xff]
  %v30 = vld [vmem:[%s1 + $0x28] sm:$0xff]
  %v31 = vld [vmem:[%s1 + $0x30] sm:$0xff]
  %v32 = vld [vmem:[%s1 + $0x38] sm:$0xff]
  %v33 = vld [vmem:[%s2] sm:$0xff]
  %v34 = vld [vmem:[%s2 + $0x8] sm:$0xff]
  %v35 = vld [vmem:[%s2 + $0x10] sm:$0xff]
  %v36 = vld [vmem:[%s2 + $0x18] sm:$0xff]
  %v37 = vld [vmem:[%s2 + $0x20] sm:$0xff]
  %v38 = vld [vmem:[%s2 + $0x28] sm:$0xff]
  %v39 = vld [vmem:[%s2 + $0x30] sm:$0xff]
  %v40 = vld [vmem:[%s2 + $0x38] sm:$0x7]
  %v41 = vld [vmem:[%s2 + $0x40] sm:$0xff]
  %v42 = vld [vmem:[%s2 + $0x48] sm:$0xff]
  %v43 = vld [vmem:[%s2 + $0x50] sm:$0x7]
  %v44 = vld [vmem:[%s3] sm:$0xf]
  %v45 = vlaneseq
  %v46 = vand.u32 %v45, 127
  %vm47 = vcmp.lt.s32.totalorder %v46, 6
  %v48 = vsel %vm47, 1, 0
  %v49 = vcvt.s32.f32 %v48
  %vm50 = vcmask 261120
  %v51 = vsel %vm50, %v17, 0.0
  %52 = vadd.xlane.f32.xlu0 %v51
  %v53 = vpop.xlane.xlu0 %52
  %v54 = vsel %vm50, %v18, 0.0
  %55 = vadd.xlane.f32.xlu0 %v54
  %v56 = vpop.xlane.xlu0 %55
  %v57 = vsel %vm50, %v19, 0.0
  %58 = vadd.xlane.f32.xlu0 %v57
  %v59 = vpop.xlane.xlu0 %58
  %v60 = vsel %vm50, %v20, 0.0
  %61 = vadd.xlane.f32.xlu0 %v60
  %v62 = vpop.xlane.xlu0 %61
  %v63 = vsel %vm50, %v21, 0.0
  %64 = vadd.xlane.f32.xlu0 %v63
  %v65 = vpop.xlane.xlu0 %64
  %v66 = vsel %vm50, %v22, 0.0
  %67 = vadd.xlane.f32.xlu0 %v66
  %v68 = vpop.xlane.xlu0 %67
  %v69 = vsel %vm50, %v23, 0.0
  %70 = vadd.xlane.f32.xlu0 %v69
  %v71 = vpop.xlane.xlu0 %70
  %v72 = vsel %vm50, %v24, 0.0
  %73 = vadd.xlane.f32.xlu0 %v72
  %v74 = vpop.xlane.xlu0 %73
  %vm75 = vcmask 64512
  %v76 = vsel %vm75, %v25, 0.0
  %77 = vadd.xlane.f32.xlu0 %v76
  %v78 = vpop.xlane.xlu0 %77
  %v79 = vsel %vm75, %v26, 0.0
  %80 = vadd.xlane.f32.xlu0 %v79
  %v81 = vpop.xlane.xlu0 %80
  %v82 = vsel %vm75, %v27, 0.0
  %83 = vadd.xlane.f32.xlu0 %v82
  %v84 = vpop.xlane.xlu0 %83
  %v85 = vsel %vm75, %v28, 0.0
  %86 = vadd.xlane.f32.xlu0 %v85
  %v87 = vpop.xlane.xlu0 %86
  %v88 = vsel %vm75, %v29, 0.0
  %89 = vadd.xlane.f32.xlu0 %v88
  %v90 = vpop.xlane.xlu0 %89
  %v91 = vsel %vm75, %v30, 0.0
  %92 = vadd.xlane.f32.xlu0 %v91
  %v93 = vpop.xlane.xlu0 %92
  %v94 = vsel %vm75, %v31, 0.0
  %95 = vadd.xlane.f32.xlu0 %v94
  %v96 = vpop.xlane.xlu0 %95
  %v97 = vsel %vm75, %v32, 0.0
  %98 = vadd.xlane.f32.xlu0 %v97
  %v99 = vpop.xlane.xlu0 %98
  %v100 = vadd.f32 %v53, %v78
  %v101 = vadd.f32 %v56, %v81
  %v102 = vadd.f32 %v59, %v84
  %v103 = vadd.f32 %v62, %v87
  %v104 = vadd.f32 %v65, %v90
  %v105 = vadd.f32 %v68, %v93
  %v106 = vadd.f32 %v71, %v96
  %v107 = vadd.f32 %v74, %v99
  %v108 = vmul.f32 %v100, 0.02631579
  %v109 = vmul.f32 %v101, 0.02631579
  %v110 = vmul.f32 %v102, 0.02631579
  %v111 = vmul.f32 %v103, 0.02631579
  %v112 = vmul.f32 %v104, 0.02631579
  %v113 = vmul.f32 %v105, 0.02631579
  %v114 = vmul.f32 %v106, 0.02631579
  %v115 = vmul.f32 %v107, 0.02631579
  %v116 = vsub.f32 %v17, %v108
  %v117 = vsub.f32 %v18, %v109
  %v118 = vsub.f32 %v19, %v110
  %v119 = vsub.f32 %v20, %v111
  %v120 = vsub.f32 %v21, %v112
  %v121 = vsub.f32 %v22, %v113
  %v122 = vsub.f32 %v23, %v114
  %v123 = vsub.f32 %v24, %v115
  %v124 = vsub.f32 %v25, %v108
  %v125 = vsub.f32 %v26, %v109
  %v126 = vsub.f32 %v27, %v110
  %v127 = vsub.f32 %v28, %v111
  %v128 = vsub.f32 %v29, %v112
  %v129 = vsub.f32 %v30, %v113
  %v130 = vsub.f32 %v31, %v114
  %v131 = vsub.f32 %v32, %v115
  %v132 = vmul.f32 %v124, %v49
  %v133 = vmul.f32 %v125, %v49
  %v134 = vmul.f32 %v126, %v49
  %v135 = vmul.f32 %v127, %v49
  %v136 = vmul.f32 %v128, %v49
  %v137 = vmul.f32 %v129, %v49
  %v138 = vmul.f32 %v130, %v49
  %v139 = vmul.f32 %v131, %v49
  %v140 = vmul.f32 %v116, %v116
  %v141 = vmul.f32 %v117, %v117
  %v142 = vmul.f32 %v118, %v118
  %v143 = vmul.f32 %v119, %v119
  %v144 = vmul.f32 %v120, %v120
  %v145 = vmul.f32 %v121, %v121
  %v146 = vmul.f32 %v122, %v122
  %v147 = vmul.f32 %v123, %v123
  %v148 = vsel %vm50, %v140, 0.0
  %149 = vadd.xlane.f32.xlu0 %v148
  %v150 = vpop.xlane.xlu0 %149
  %v151 = vsel %vm50, %v141, 0.0
  %152 = vadd.xlane.f32.xlu0 %v151
  %v153 = vpop.xlane.xlu0 %152
  %v154 = vsel %vm50, %v142, 0.0
  %155 = vadd.xlane.f32.xlu0 %v154
  %v156 = vpop.xlane.xlu0 %155
  %v157 = vsel %vm50, %v143, 0.0
  %158 = vadd.xlane.f32.xlu0 %v157
  %v159 = vpop.xlane.xlu0 %158
  %v160 = vsel %vm50, %v144, 0.0
  %161 = vadd.xlane.f32.xlu0 %v160
  %v162 = vpop.xlane.xlu0 %161
  %v163 = vsel %vm50, %v145, 0.0
  %164 = vadd.xlane.f32.xlu0 %v163
  %v165 = vpop.xlane.xlu0 %164
  %v166 = vsel %vm50, %v146, 0.0
  %167 = vadd.xlane.f32.xlu0 %v166
  %v168 = vpop.xlane.xlu0 %167
  %v169 = vsel %vm50, %v147, 0.0
  %170 = vadd.xlane.f32.xlu0 %v169
  %v171 = vpop.xlane.xlu0 %170
  %v172 = vmul.f32 %v132, %v132
  %v173 = vmul.f32 %v133, %v133
  %v174 = vmul.f32 %v134, %v134
  %v175 = vmul.f32 %v135, %v135
  %v176 = vmul.f32 %v136, %v136
  %v177 = vmul.f32 %v137, %v137
  %v178 = vmul.f32 %v138, %v138
  %v179 = vmul.f32 %v139, %v139
  %v180 = vsel %vm75, %v172, 0.0
  %181 = vadd.xlane.f32.xlu0 %v180
  %v182 = vpop.xlane.xlu0 %181
  %v183 = vsel %vm75, %v173, 0.0
  %184 = vadd.xlane.f32.xlu0 %v183
  %v185 = vpop.xlane.xlu0 %184
  %v186 = vsel %vm75, %v174, 0.0
  %187 = vadd.xlane.f32.xlu0 %v186
  %v188 = vpop.xlane.xlu0 %187
  %v189 = vsel %vm75, %v175, 0.0
  %190 = vadd.xlane.f32.xlu0 %v189
  %v191 = vpop.xlane.xlu0 %190
  %v192 = vsel %vm75, %v176, 0.0
  %193 = vadd.xlane.f32.xlu0 %v192
  %v194 = vpop.xlane.xlu0 %193
  %v195 = vsel %vm75, %v177, 0.0
  %196 = vadd.xlane.f32.xlu0 %v195
  %v197 = vpop.xlane.xlu0 %196
  %v198 = vsel %vm75, %v178, 0.0
  %199 = vadd.xlane.f32.xlu0 %v198
  %v200 = vpop.xlane.xlu0 %199
  %v201 = vsel %vm75, %v179, 0.0
  %202 = vadd.xlane.f32.xlu0 %v201
  %v203 = vpop.xlane.xlu0 %202
  %v204 = vadd.f32 %v150, %v182
  %v205 = vadd.f32 %v153, %v185
  %v206 = vadd.f32 %v156, %v188
  %v207 = vadd.f32 %v159, %v191
  %v208 = vadd.f32 %v162, %v194
  %v209 = vadd.f32 %v165, %v197
  %v210 = vadd.f32 %v168, %v200
  %v211 = vadd.f32 %v171, %v203
  %v212 = vmul.f32 %v204, 0.02631579
  %v213 = vmul.f32 %v205, 0.02631579
  %v214 = vmul.f32 %v206, 0.02631579
  %v215 = vmul.f32 %v207, 0.02631579
  %v216 = vmul.f32 %v208, 0.02631579
  %v217 = vmul.f32 %v209, 0.02631579
  %v218 = vmul.f32 %v210, 0.02631579
  %v219 = vmul.f32 %v211, 0.02631579
  %v220 = vadd.f32 %v212, 1e-06
  %v221 = vadd.f32 %v213, 1e-06
  %v222 = vadd.f32 %v214, 1e-06
  %v223 = vadd.f32 %v215, 1e-06
  %v224 = vadd.f32 %v216, 1e-06
  %v225 = vadd.f32 %v217, 1e-06
  %v226 = vadd.f32 %v218, 1e-06
  %v227 = vadd.f32 %v219, 1e-06
  %v228 = vrsqrt.pop %v220
  %v229 = vrsqrt.pop %v221
  %v230 = vrsqrt.pop %v222
  %v231 = vrsqrt.pop %v223
  %v232 = vrsqrt.pop %v224
  %v233 = vrsqrt.pop %v225
  %v234 = vrsqrt.pop %v226
  %v235 = vrsqrt.pop %v227
  %v236 = vmul.f32 %v116, %v228
  %v237 = vmul.f32 %v117, %v229
  %v238 = vmul.f32 %v118, %v230
  %v239 = vmul.f32 %v119, %v231
  %v240 = vmul.f32 %v120, %v232
  %v241 = vmul.f32 %v121, %v233
  %v242 = vmul.f32 %v122, %v234
  %v243 = vmul.f32 %v123, %v235
  %v244 = vmul.f32 %v132, %v228
  %v245 = vmul.f32 %v133, %v229
  %v246 = vmul.f32 %v134, %v230
  %v247 = vmul.f32 %v135, %v231
  %v248 = vmul.f32 %v136, %v232
  %v249 = vmul.f32 %v137, %v233
  %v250 = vmul.f32 %v138, %v234
  %v251 = vmul.f32 %v139, %v235
  %v253 = vsel %vm75, %v244, 0
  %v256 = vsel %vm75, %v245, 0
  %v259 = vsel %vm75, %v246, 0
  %v262 = vsel %vm75, %v247, 0
  %v265 = vsel %vm75, %v248, 0
  %v268 = vsel %vm75, %v249, 0
  %v271 = vsel %vm75, %v250, 0
  %v274 = vsel %vm75, %v251, 0
  %276 = vmatprep.subr.mxu0 0.0
  %277 = vmatpush1.msra.mxu0 0.0
  %278 = vmatprep.subr.mxu0 0.0
  %279 = vmatpush1.msra.mxu0 0.0
  %280 = vmatprep.subr.mxu0 0.0
  %281 = vmatpush1.msra.mxu0 0.0
  %282 = vmatprep.subr.mxu0 0.0
  %283 = vmatpush1.msra.mxu0 0.0
  %284 = vmatprep.subr.mxu0 0.0
  %285 = vmatpush1.msra.mxu0 0.0
  %286 = vmatprep.subr.mxu0 0.0
  %287 = vmatpush1.msra.mxu0 0.0
  %288 = vmatprep.subr.mxu0 0.0
  %289 = vmatpush1.msra.mxu0 0.0
  %290 = vmatprep.subr.mxu0 0.0
  %291 = vmatpush1.msra.mxu0 0.0
  %292 = vmatprep.subr.mxu0 0.0
  %293 = vmatpush1.msra.mxu0 0.0
  %294 = vmatprep.subr.mxu0 0.0
  %295 = vmatpush1.msra.mxu0 0.0
  %296 = vmatprep.subr.mxu0 0.0
  %297 = vmatpush1.msra.mxu0 0.0
  %298 = vmatprep.subr.mxu0 0.0
  %299 = vmatpush1.msra.mxu0 0.0
  %300 = vmatprep.subr.mxu0 0.0
  %301 = vmatpush1.msra.mxu0 0.0
  %302 = vmatprep.subr.mxu0 0.0
  %303 = vmatpush1.msra.mxu0 0.0
  %304 = vmatprep.subr.mxu0 0.0
  %305 = vmatpush1.msra.mxu0 0.0
  %306 = vmatprep.subr.mxu0 0.0
  %307 = vmatpush1.msra.mxu0 %v37
  %308 = vmatprep.subr.mxu0 0.0
  %309 = vmatpush2.msra.mxu0 0.0
  %310 = vmatprep.subr.mxu0 0.0
  %311 = vmatpush2.msra.mxu0 0.0
  %312 = vmatprep.subr.mxu0 0.0
  %313 = vmatpush2.msra.mxu0 0.0
  %314 = vmatprep.subr.mxu0 0.0
  %315 = vmatpush2.msra.mxu0 0.0
  %316 = vmatprep.subr.mxu0 0.0
  %317 = vmatpush2.msra.mxu0 0.0
  %318 = vmatprep.subr.mxu0 0.0
  %319 = vmatpush2.msra.mxu0 0.0
  %320 = vmatprep.subr.mxu0 0.0
  %321 = vmatpush2.msra.mxu0 0.0
  %322 = vmatprep.subr.mxu0 0.0
  %323 = vmatpush2.msra.mxu0 0.0
  %324 = vmatprep.subr.mxu0 0.0
  %325 = vmatpush2.msra.mxu0 0.0
  %326 = vmatprep.subr.mxu0 0.0
  %327 = vmatpush2.msra.mxu0 0.0
  %328 = vmatprep.subr.mxu0 0.0
  %329 = vmatpush2.msra.mxu0 0.0
  %330 = vmatprep.subr.mxu0 0.0
  %331 = vmatpush2.msra.mxu0 0.0
  %332 = vmatprep.subr.mxu0 0.0
  %333 = vmatpush2.msra.mxu0 0.0
  %334 = vmatprep.subr.mxu0 0.0
  %335 = vmatpush2.msra.mxu0 0.0
  %336 = vmatprep.subr.mxu0 0.0
  %337 = vmatpush2.msra.mxu0 0.0
  %338 = vmatprep.subr.mxu0 0.0
  %339 = vmatpush2.msra.mxu0 0.0
  %340 = vmatprep.mubr.f32.mxu0 0.0
  %341 = vmatmul.mubr.f32.gmra.mxu0 %v253
  %v342 = vpop.f32.mrf.mxu0
  %v343 = vadd.f32 0.0, %v342
  %v344 = vpop.f32.mrf.mxu0
  %345 = vmatprep.mubr.f32.mxu0 0.0
  %346 = vmatmul.mubr.f32.gmra.mxu0 %v256
  %v347 = vpop.f32.mrf.mxu0
  %v348 = vadd.f32 0.0, %v347
  %v349 = vpop.f32.mrf.mxu0
  %350 = vmatprep.mubr.f32.mxu0 0.0
  %351 = vmatmul.mubr.f32.gmra.mxu0 %v259
  %v352 = vpop.f32.mrf.mxu0
  %v353 = vadd.f32 0.0, %v352
  %v354 = vpop.f32.mrf.mxu0
  %355 = vmatprep.mubr.f32.mxu0 0.0
  %356 = vmatmul.mubr.f32.gmra.mxu0 %v262
  %v357 = vpop.f32.mrf.mxu0
  %v358 = vadd.f32 0.0, %v357
  %v359 = vpop.f32.mrf.mxu0
  %360 = vmatprep.mubr.f32.mxu0 0.0
  %361 = vmatmul.mubr.f32.gmra.mxu0 %v265
  %v362 = vpop.f32.mrf.mxu0
  %v363 = vadd.f32 0.0, %v362
  %v364 = vpop.f32.mrf.mxu0
  %365 = vmatprep.mubr.f32.mxu0 0.0
  %366 = vmatmul.mubr.f32.gmra.mxu0 %v268
  %v367 = vpop.f32.mrf.mxu0
  %v368 = vadd.f32 0.0, %v367
  %v369 = vpop.f32.mrf.mxu0
  %370 = vmatprep.mubr.f32.mxu0 0.0
  %371 = vmatmul.mubr.f32.gmra.mxu0 %v271
  %v372 = vpop.f32.mrf.mxu0
  %v373 = vadd.f32 0.0, %v372
  %v374 = vpop.f32.mrf.mxu0
  %375 = vmatprep.mubr.f32.mxu0 0.0
  %376 = vmatmul.mubr.f32.gmra.mxu0 %v274
  %v377 = vpop.f32.mrf.mxu0
  %v378 = vadd.f32 0.0, %v377
  %v379 = vpop.f32.mrf.mxu0
  %380 = vdwg.mxu0
  %v382 = vsel %vm50, %v236, 0
  %v385 = vsel %vm50, %v237, 0
  %v388 = vsel %vm50, %v238, 0
  %v391 = vsel %vm50, %v239, 0
  %v394 = vsel %vm50, %v240, 0
  %v397 = vsel %vm50, %v241, 0
  %v400 = vsel %vm50, %v242, 0
  %v403 = vsel %vm50, %v243, 0
  %405 = vmatprep.subr.mxu0 0.0
  %406 = vmatpush1.msra.mxu0 0.0
  %407 = vmatprep.subr.mxu0 0.0
  %408 = vmatpush1.msra.mxu0 0.0
  %409 = vmatprep.subr.mxu0 0.0
  %410 = vmatpush1.msra.mxu0 0.0
  %411 = vmatprep.subr.mxu0 0.0
  %412 = vmatpush1.msra.mxu0 0.0
  %413 = vmatprep.subr.mxu0 0.0
  %414 = vmatpush1.msra.mxu0 0.0
  %415 = vmatprep.subr.mxu0 0.0
  %416 = vmatpush1.msra.mxu0 0.0
  %417 = vmatprep.subr.mxu0 0.0
  %418 = vmatpush1.msra.mxu0 0.0
  %419 = vmatprep.subr.mxu0 0.0
  %420 = vmatpush1.msra.mxu0 0.0
  %421 = vmatprep.subr.mxu0 0.0
  %422 = vmatpush1.msra.mxu0 0.0
  %423 = vmatprep.subr.mxu0 0.0
  %424 = vmatpush1.msra.mxu0 0.0
  %425 = vmatprep.subr.mxu0 0.0
  %426 = vmatpush1.msra.mxu0 0.0
  %427 = vmatprep.subr.mxu0 0.0
  %428 = vmatpush1.msra.mxu0 0.0
  %429 = vmatprep.subr.mxu0 0.0
  %430 = vmatpush1.msra.mxu0 %v36
  %431 = vmatprep.subr.mxu0 0.0
  %432 = vmatpush1.msra.mxu0 %v35
  %433 = vmatprep.subr.mxu0 0.0
  %434 = vmatpush1.msra.mxu0 %v34
  %435 = vmatprep.subr.mxu0 0.0
  %436 = vmatpush1.msra.mxu0 %v33
  %437 = vmatprep.subr.mxu0 0.0
  %438 = vmatpush2.msra.mxu0 0.0
  %439 = vmatprep.subr.mxu0 0.0
  %440 = vmatpush2.msra.mxu0 0.0
  %441 = vmatprep.subr.mxu0 0.0
  %442 = vmatpush2.msra.mxu0 0.0
  %443 = vmatprep.subr.mxu0 0.0
  %444 = vmatpush2.msra.mxu0 0.0
  %445 = vmatprep.subr.mxu0 0.0
  %446 = vmatpush2.msra.mxu0 0.0
  %447 = vmatprep.subr.mxu0 0.0
  %448 = vmatpush2.msra.mxu0 0.0
  %449 = vmatprep.subr.mxu0 0.0
  %450 = vmatpush2.msra.mxu0 0.0
  %451 = vmatprep.subr.mxu0 0.0
  %452 = vmatpush2.msra.mxu0 0.0
  %453 = vmatprep.subr.mxu0 0.0
  %454 = vmatpush2.msra.mxu0 0.0
  %455 = vmatprep.subr.mxu0 0.0
  %456 = vmatpush2.msra.mxu0 0.0
  %457 = vmatprep.subr.mxu0 0.0
  %458 = vmatpush2.msra.mxu0 0.0
  %459 = vmatprep.subr.mxu0 0.0
  %460 = vmatpush2.msra.mxu0 0.0
  %461 = vmatprep.subr.mxu0 0.0
  %462 = vmatpush2.msra.mxu0 0.0
  %463 = vmatprep.subr.mxu0 0.0
  %464 = vmatpush2.msra.mxu0 0.0
  %465 = vmatprep.subr.mxu0 0.0
  %466 = vmatpush2.msra.mxu0 0.0
  %467 = vmatprep.subr.mxu0 0.0
  %468 = vmatpush2.msra.mxu0 0.0
  %469 = vmatprep.mubr.f32.mxu0 0.0
  %470 = vmatmul.mubr.f32.gmra.mxu0 %v382
  %v471 = vpop.f32.mrf.mxu0
  %v472 = vadd.f32 %v343, %v471
  %v473 = vpop.f32.mrf.mxu0
  %474 = vmatprep.mubr.f32.mxu0 0.0
  %475 = vmatmul.mubr.f32.gmra.mxu0 %v385
  %v476 = vpop.f32.mrf.mxu0
  %v477 = vadd.f32 %v348, %v476
  %v478 = vpop.f32.mrf.mxu0
  %479 = vmatprep.mubr.f32.mxu0 0.0
  %480 = vmatmul.mubr.f32.gmra.mxu0 %v388
  %v481 = vpop.f32.mrf.mxu0
  %v482 = vadd.f32 %v353, %v481
  %v483 = vpop.f32.mrf.mxu0
  %484 = vmatprep.mubr.f32.mxu0 0.0
  %485 = vmatmul.mubr.f32.gmra.mxu0 %v391
  %v486 = vpop.f32.mrf.mxu0
  %v487 = vadd.f32 %v358, %v486
  %v488 = vpop.f32.mrf.mxu0
  %489 = vmatprep.mubr.f32.mxu0 0.0
  %490 = vmatmul.mubr.f32.gmra.mxu0 %v394
  %v491 = vpop.f32.mrf.mxu0
  %v492 = vadd.f32 %v363, %v491
  %v493 = vpop.f32.mrf.mxu0
  %494 = vmatprep.mubr.f32.mxu0 0.0
  %495 = vmatmul.mubr.f32.gmra.mxu0 %v397
  %v496 = vpop.f32.mrf.mxu0
  %v497 = vadd.f32 %v368, %v496
  %v498 = vpop.f32.mrf.mxu0
  %499 = vmatprep.mubr.f32.mxu0 0.0
  %500 = vmatmul.mubr.f32.gmra.mxu0 %v400
  %v501 = vpop.f32.mrf.mxu0
  %v502 = vadd.f32 %v373, %v501
  %v503 = vpop.f32.mrf.mxu0
  %504 = vmatprep.mubr.f32.mxu0 0.0
  %505 = vmatmul.mubr.f32.gmra.mxu0 %v403
  %v506 = vpop.f32.mrf.mxu0
  %v507 = vadd.f32 %v378, %v506
  %v508 = vpop.f32.mrf.mxu0
  %509 = vdwg.mxu0
  %v510 = vlaneseq
  %v511 = vshrl.u32 %v510, 7
  %v512 = vsub.s32 0, %v511
  %v513 = vrot.slane %v44, %v512
  %v514 = vadd.f32 %v472, %v513
  %v515 = vadd.f32 %v477, %v513
  %v516 = vadd.f32 %v482, %v513
  %v517 = vadd.f32 %v487, %v513
  %v518 = vadd.f32 %v492, %v513
  %v519 = vadd.f32 %v497, %v513
  %v520 = vadd.f32 %v502, %v513
  %v521 = vadd.f32 %v507, %v513
  %v522 = vmax.f32 %v514, 0.0
  %v523 = vmax.f32 %v515, 0.0
  %v524 = vmax.f32 %v516, 0.0
  %v525 = vmax.f32 %v517, 0.0
  %v526 = vmax.f32 %v518, 0.0
  %v527 = vmax.f32 %v519, 0.0
  %v528 = vmax.f32 %v520, 0.0
  %v529 = vmax.f32 %v521, 0.0
  %v530 = vlaneseq
  %v531 = vshrl.u32 %v530, 7
  %v532 = vsub.s32 1, %v531
  %v533 = vrot.slane %v44, %v532
  %vm534 = vcmask 154624
  %v536 = vsel %vm534, %v522, 0
  %v539 = vsel %vm534, %v523, 0
  %v542 = vsel %vm534, %v524, 0
  %v545 = vsel %vm534, %v525, 0
  %v548 = vsel %vm534, %v526, 0
  %v551 = vsel %vm534, %v527, 0
  %v554 = vsel %vm534, %v528, 0
  %v557 = vsel %vm534, %v529, 0
  %vm559 = vcmask 1042432
  %v561 = vsel %vm559, %v40, 0
  %563 = vmatprep.subr.mxu0 0.0
  %564 = vmatpush1.msra.mxu0 0.0
  %565 = vmatprep.subr.mxu0 0.0
  %566 = vmatpush1.msra.mxu0 0.0
  %567 = vmatprep.subr.mxu0 0.0
  %568 = vmatpush1.msra.mxu0 0.0
  %569 = vmatprep.subr.mxu0 0.0
  %570 = vmatpush1.msra.mxu0 0.0
  %571 = vmatprep.subr.mxu0 0.0
  %572 = vmatpush1.msra.mxu0 0.0
  %573 = vmatprep.subr.mxu0 0.0
  %574 = vmatpush1.msra.mxu0 0.0
  %575 = vmatprep.subr.mxu0 0.0
  %576 = vmatpush1.msra.mxu0 0.0
  %577 = vmatprep.subr.mxu0 0.0
  %578 = vmatpush1.msra.mxu0 0.0
  %579 = vmatprep.subr.mxu0 0.0
  %580 = vmatpush1.msra.mxu0 0.0
  %581 = vmatprep.subr.mxu0 0.0
  %582 = vmatpush1.msra.mxu0 0.0
  %583 = vmatprep.subr.mxu0 0.0
  %584 = vmatpush1.msra.mxu0 0.0
  %585 = vmatprep.subr.mxu0 0.0
  %586 = vmatpush1.msra.mxu0 0.0
  %587 = vmatprep.subr.mxu0 0.0
  %588 = vmatpush1.msra.mxu0 0.0
  %589 = vmatprep.subr.mxu0 0.0
  %590 = vmatpush1.msra.mxu0 %v561
  %591 = vmatprep.subr.mxu0 0.0
  %592 = vmatpush1.msra.mxu0 %v39
  %593 = vmatprep.subr.mxu0 0.0
  %594 = vmatpush1.msra.mxu0 %v38
  %595 = vmatprep.subr.mxu0 0.0
  %596 = vmatpush2.msra.mxu0 0.0
  %597 = vmatprep.subr.mxu0 0.0
  %598 = vmatpush2.msra.mxu0 0.0
  %599 = vmatprep.subr.mxu0 0.0
  %600 = vmatpush2.msra.mxu0 0.0
  %601 = vmatprep.subr.mxu0 0.0
  %602 = vmatpush2.msra.mxu0 0.0
  %603 = vmatprep.subr.mxu0 0.0
  %604 = vmatpush2.msra.mxu0 0.0
  %605 = vmatprep.subr.mxu0 0.0
  %606 = vmatpush2.msra.mxu0 0.0
  %607 = vmatprep.subr.mxu0 0.0
  %608 = vmatpush2.msra.mxu0 0.0
  %609 = vmatprep.subr.mxu0 0.0
  %610 = vmatpush2.msra.mxu0 0.0
  %611 = vmatprep.subr.mxu0 0.0
  %612 = vmatpush2.msra.mxu0 0.0
  %613 = vmatprep.subr.mxu0 0.0
  %614 = vmatpush2.msra.mxu0 0.0
  %615 = vmatprep.subr.mxu0 0.0
  %616 = vmatpush2.msra.mxu0 0.0
  %617 = vmatprep.subr.mxu0 0.0
  %618 = vmatpush2.msra.mxu0 0.0
  %619 = vmatprep.subr.mxu0 0.0
  %620 = vmatpush2.msra.mxu0 0.0
  %621 = vmatprep.subr.mxu0 0.0
  %622 = vmatpush2.msra.mxu0 0.0
  %623 = vmatprep.subr.mxu0 0.0
  %624 = vmatpush2.msra.mxu0 0.0
  %625 = vmatprep.subr.mxu0 0.0
  %626 = vmatpush2.msra.mxu0 0.0
  %627 = vmatprep.mubr.f32.mxu0 0.0
  %628 = vmatmul.mubr.f32.gmra.mxu0 %v536
  %v629 = vpop.f32.mrf.mxu0
  %v630 = vadd.f32 %v533, %v629
  %v631 = vpop.f32.mrf.mxu0
  %632 = vmatprep.mubr.f32.mxu0 0.0
  %633 = vmatmul.mubr.f32.gmra.mxu0 %v539
  %v634 = vpop.f32.mrf.mxu0
  %v635 = vadd.f32 %v533, %v634
  %v636 = vpop.f32.mrf.mxu0
  %637 = vmatprep.mubr.f32.mxu0 0.0
  %638 = vmatmul.mubr.f32.gmra.mxu0 %v542
  %v639 = vpop.f32.mrf.mxu0
  %v640 = vadd.f32 %v533, %v639
  %v641 = vpop.f32.mrf.mxu0
  %642 = vmatprep.mubr.f32.mxu0 0.0
  %643 = vmatmul.mubr.f32.gmra.mxu0 %v545
  %v644 = vpop.f32.mrf.mxu0
  %v645 = vadd.f32 %v533, %v644
  %v646 = vpop.f32.mrf.mxu0
  %647 = vmatprep.mubr.f32.mxu0 0.0
  %648 = vmatmul.mubr.f32.gmra.mxu0 %v548
  %v649 = vpop.f32.mrf.mxu0
  %v650 = vadd.f32 %v533, %v649
  %v651 = vpop.f32.mrf.mxu0
  %652 = vmatprep.mubr.f32.mxu0 0.0
  %653 = vmatmul.mubr.f32.gmra.mxu0 %v551
  %v654 = vpop.f32.mrf.mxu0
  %v655 = vadd.f32 %v533, %v654
  %v656 = vpop.f32.mrf.mxu0
  %657 = vmatprep.mubr.f32.mxu0 0.0
  %658 = vmatmul.mubr.f32.gmra.mxu0 %v554
  %v659 = vpop.f32.mrf.mxu0
  %v660 = vadd.f32 %v533, %v659
  %v661 = vpop.f32.mrf.mxu0
  %662 = vmatprep.mubr.f32.mxu0 0.0
  %663 = vmatmul.mubr.f32.gmra.mxu0 %v557
  %v664 = vpop.f32.mrf.mxu0
  %v665 = vadd.f32 %v533, %v664
  %v666 = vpop.f32.mrf.mxu0
  %667 = vdwg.mxu0
  %v668 = vsel %vm534, %v630, 0.0
  %669 = vadd.xlane.f32.xlu0 %v668
  %v670 = vpop.xlane.xlu0 %669
  %v671 = vsel %vm534, %v635, 0.0
  %672 = vadd.xlane.f32.xlu0 %v671
  %v673 = vpop.xlane.xlu0 %672
  %v674 = vsel %vm534, %v640, 0.0
  %675 = vadd.xlane.f32.xlu0 %v674
  %v676 = vpop.xlane.xlu0 %675
  %v677 = vsel %vm534, %v645, 0.0
  %678 = vadd.xlane.f32.xlu0 %v677
  %v679 = vpop.xlane.xlu0 %678
  %v680 = vsel %vm534, %v650, 0.0
  %681 = vadd.xlane.f32.xlu0 %v680
  %v682 = vpop.xlane.xlu0 %681
  %v683 = vsel %vm534, %v655, 0.0
  %684 = vadd.xlane.f32.xlu0 %v683
  %v685 = vpop.xlane.xlu0 %684
  %v686 = vsel %vm534, %v660, 0.0
  %687 = vadd.xlane.f32.xlu0 %v686
  %v688 = vpop.xlane.xlu0 %687
  %v689 = vsel %vm534, %v665, 0.0
  %690 = vadd.xlane.f32.xlu0 %v689
  %v691 = vpop.xlane.xlu0 %690
  %v692 = vrcp.pop 19.0
  %v693 = vmul.f32 %v670, %v692
  %v694 = vmul.f32 %v673, %v692
  %v695 = vmul.f32 %v676, %v692
  %v696 = vmul.f32 %v679, %v692
  %v697 = vmul.f32 %v682, %v692
  %v698 = vmul.f32 %v685, %v692
  %v699 = vmul.f32 %v688, %v692
  %v700 = vmul.f32 %v691, %v692
  %v701 = vsub.f32 %v630, %v693
  %v702 = vsub.f32 %v635, %v694
  %v703 = vsub.f32 %v640, %v695
  %v704 = vsub.f32 %v645, %v696
  %v705 = vsub.f32 %v650, %v697
  %v706 = vsub.f32 %v655, %v698
  %v707 = vsub.f32 %v660, %v699
  %v708 = vsub.f32 %v665, %v700
  %v709 = vmul.f32 %v701, %v701
  %v710 = vmul.f32 %v702, %v702
  %v711 = vmul.f32 %v703, %v703
  %v712 = vmul.f32 %v704, %v704
  %v713 = vmul.f32 %v705, %v705
  %v714 = vmul.f32 %v706, %v706
  %v715 = vmul.f32 %v707, %v707
  %v716 = vmul.f32 %v708, %v708
  %v717 = vsel %vm534, %v709, 0.0
  %718 = vadd.xlane.f32.xlu0 %v717
  %v719 = vpop.xlane.xlu0 %718
  %v720 = vsel %vm534, %v710, 0.0
  %721 = vadd.xlane.f32.xlu0 %v720
  %v722 = vpop.xlane.xlu0 %721
  %v723 = vsel %vm534, %v711, 0.0
  %724 = vadd.xlane.f32.xlu0 %v723
  %v725 = vpop.xlane.xlu0 %724
  %v726 = vsel %vm534, %v712, 0.0
  %727 = vadd.xlane.f32.xlu0 %v726
  %v728 = vpop.xlane.xlu0 %727
  %v729 = vsel %vm534, %v713, 0.0
  %730 = vadd.xlane.f32.xlu0 %v729
  %v731 = vpop.xlane.xlu0 %730
  %v732 = vsel %vm534, %v714, 0.0
  %733 = vadd.xlane.f32.xlu0 %v732
  %v734 = vpop.xlane.xlu0 %733
  %v735 = vsel %vm534, %v715, 0.0
  %736 = vadd.xlane.f32.xlu0 %v735
  %v737 = vpop.xlane.xlu0 %736
  %v738 = vsel %vm534, %v716, 0.0
  %739 = vadd.xlane.f32.xlu0 %v738
  %v740 = vpop.xlane.xlu0 %739
  %v741 = vmul.f32 %v719, %v692
  %v742 = vmul.f32 %v722, %v692
  %v743 = vmul.f32 %v725, %v692
  %v744 = vmul.f32 %v728, %v692
  %v745 = vmul.f32 %v731, %v692
  %v746 = vmul.f32 %v734, %v692
  %v747 = vmul.f32 %v737, %v692
  %v748 = vmul.f32 %v740, %v692
  %v749 = vadd.f32 %v741, 1e-06
  %v750 = vadd.f32 %v742, 1e-06
  %v751 = vadd.f32 %v743, 1e-06
  %v752 = vadd.f32 %v744, 1e-06
  %v753 = vadd.f32 %v745, 1e-06
  %v754 = vadd.f32 %v746, 1e-06
  %v755 = vadd.f32 %v747, 1e-06
  %v756 = vadd.f32 %v748, 1e-06
  %v757 = vrsqrt.pop %v749
  %v758 = vrsqrt.pop %v750
  %v759 = vrsqrt.pop %v751
  %v760 = vrsqrt.pop %v752
  %v761 = vrsqrt.pop %v753
  %v762 = vrsqrt.pop %v754
  %v763 = vrsqrt.pop %v755
  %v764 = vrsqrt.pop %v756
  %v765 = vmul.f32 %v701, %v757
  %v766 = vmul.f32 %v702, %v758
  %v767 = vmul.f32 %v703, %v759
  %v768 = vmul.f32 %v704, %v760
  %v769 = vmul.f32 %v705, %v761
  %v770 = vmul.f32 %v706, %v762
  %v771 = vmul.f32 %v707, %v763
  %v772 = vmul.f32 %v708, %v764
  %v773 = vlaneseq
  %v774 = vshrl.u32 %v773, 7
  %v775 = vsub.s32 2, %v774
  %v776 = vrot.slane %v44, %v775
  %v778 = vsel %vm534, %v765, 0
  %v781 = vsel %vm534, %v766, 0
  %v784 = vsel %vm534, %v767, 0
  %v787 = vsel %vm534, %v768, 0
  %v790 = vsel %vm534, %v769, 0
  %v793 = vsel %vm534, %v770, 0
  %v796 = vsel %vm534, %v771, 0
  %v799 = vsel %vm534, %v772, 0
  %v802 = vsel %vm559, %v43, 0
  %804 = vmatprep.subr.mxu0 0.0
  %805 = vmatpush1.msra.mxu0 0.0
  %806 = vmatprep.subr.mxu0 0.0
  %807 = vmatpush1.msra.mxu0 0.0
  %808 = vmatprep.subr.mxu0 0.0
  %809 = vmatpush1.msra.mxu0 0.0
  %810 = vmatprep.subr.mxu0 0.0
  %811 = vmatpush1.msra.mxu0 0.0
  %812 = vmatprep.subr.mxu0 0.0
  %813 = vmatpush1.msra.mxu0 0.0
  %814 = vmatprep.subr.mxu0 0.0
  %815 = vmatpush1.msra.mxu0 0.0
  %816 = vmatprep.subr.mxu0 0.0
  %817 = vmatpush1.msra.mxu0 0.0
  %818 = vmatprep.subr.mxu0 0.0
  %819 = vmatpush1.msra.mxu0 0.0
  %820 = vmatprep.subr.mxu0 0.0
  %821 = vmatpush1.msra.mxu0 0.0
  %822 = vmatprep.subr.mxu0 0.0
  %823 = vmatpush1.msra.mxu0 0.0
  %824 = vmatprep.subr.mxu0 0.0
  %825 = vmatpush1.msra.mxu0 0.0
  %826 = vmatprep.subr.mxu0 0.0
  %827 = vmatpush1.msra.mxu0 0.0
  %828 = vmatprep.subr.mxu0 0.0
  %829 = vmatpush1.msra.mxu0 0.0
  %830 = vmatprep.subr.mxu0 0.0
  %831 = vmatpush1.msra.mxu0 %v802
  %832 = vmatprep.subr.mxu0 0.0
  %833 = vmatpush1.msra.mxu0 %v42
  %834 = vmatprep.subr.mxu0 0.0
  %835 = vmatpush1.msra.mxu0 %v41
  %836 = vmatprep.subr.mxu0 0.0
  %837 = vmatpush2.msra.mxu0 0.0
  %838 = vmatprep.subr.mxu0 0.0
  %839 = vmatpush2.msra.mxu0 0.0
  %840 = vmatprep.subr.mxu0 0.0
  %841 = vmatpush2.msra.mxu0 0.0
  %842 = vmatprep.subr.mxu0 0.0
  %843 = vmatpush2.msra.mxu0 0.0
  %844 = vmatprep.subr.mxu0 0.0
  %845 = vmatpush2.msra.mxu0 0.0
  %846 = vmatprep.subr.mxu0 0.0
  %847 = vmatpush2.msra.mxu0 0.0
  %848 = vmatprep.subr.mxu0 0.0
  %849 = vmatpush2.msra.mxu0 0.0
  %850 = vmatprep.subr.mxu0 0.0
  %851 = vmatpush2.msra.mxu0 0.0
  %852 = vmatprep.subr.mxu0 0.0
  %853 = vmatpush2.msra.mxu0 0.0
  %854 = vmatprep.subr.mxu0 0.0
  %855 = vmatpush2.msra.mxu0 0.0
  %856 = vmatprep.subr.mxu0 0.0
  %857 = vmatpush2.msra.mxu0 0.0
  %858 = vmatprep.subr.mxu0 0.0
  %859 = vmatpush2.msra.mxu0 0.0
  %860 = vmatprep.subr.mxu0 0.0
  %861 = vmatpush2.msra.mxu0 0.0
  %862 = vmatprep.subr.mxu0 0.0
  %863 = vmatpush2.msra.mxu0 0.0
  %864 = vmatprep.subr.mxu0 0.0
  %865 = vmatpush2.msra.mxu0 0.0
  %866 = vmatprep.subr.mxu0 0.0
  %867 = vmatpush2.msra.mxu0 0.0
  %868 = vmatprep.mubr.f32.mxu0 0.0
  %869 = vmatmul.mubr.f32.gmra.mxu0 %v778
  %v870 = vpop.f32.mrf.mxu0
  %v871 = vadd.f32 %v776, %v870
  %v872 = vpop.f32.mrf.mxu0
  %873 = vmatprep.mubr.f32.mxu0 0.0
  %874 = vmatmul.mubr.f32.gmra.mxu0 %v781
  %v875 = vpop.f32.mrf.mxu0
  %v876 = vadd.f32 %v776, %v875
  %v877 = vpop.f32.mrf.mxu0
  %878 = vmatprep.mubr.f32.mxu0 0.0
  %879 = vmatmul.mubr.f32.gmra.mxu0 %v784
  %v880 = vpop.f32.mrf.mxu0
  %v881 = vadd.f32 %v776, %v880
  %v882 = vpop.f32.mrf.mxu0
  %883 = vmatprep.mubr.f32.mxu0 0.0
  %884 = vmatmul.mubr.f32.gmra.mxu0 %v787
  %v885 = vpop.f32.mrf.mxu0
  %v886 = vadd.f32 %v776, %v885
  %v887 = vpop.f32.mrf.mxu0
  %888 = vmatprep.mubr.f32.mxu0 0.0
  %889 = vmatmul.mubr.f32.gmra.mxu0 %v790
  %v890 = vpop.f32.mrf.mxu0
  %v891 = vadd.f32 %v776, %v890
  %v892 = vpop.f32.mrf.mxu0
  %893 = vmatprep.mubr.f32.mxu0 0.0
  %894 = vmatmul.mubr.f32.gmra.mxu0 %v793
  %v895 = vpop.f32.mrf.mxu0
  %v896 = vadd.f32 %v776, %v895
  %v897 = vpop.f32.mrf.mxu0
  %898 = vmatprep.mubr.f32.mxu0 0.0
  %899 = vmatmul.mubr.f32.gmra.mxu0 %v796
  %v900 = vpop.f32.mrf.mxu0
  %v901 = vadd.f32 %v776, %v900
  %v902 = vpop.f32.mrf.mxu0
  %903 = vmatprep.mubr.f32.mxu0 0.0
  %904 = vmatmul.mubr.f32.gmra.mxu0 %v799
  %v905 = vpop.f32.mrf.mxu0
  %v906 = vadd.f32 %v776, %v905
  %v907 = vpop.f32.mrf.mxu0
  %908 = vdwg.mxu0
  %v909 = vmax.f32 %v871, 0.0
  %v910 = vmax.f32 %v876, 0.0
  %v911 = vmax.f32 %v881, 0.0
  %v912 = vmax.f32 %v886, 0.0
  %v913 = vmax.f32 %v891, 0.0
  %v914 = vmax.f32 %v896, 0.0
  %v915 = vmax.f32 %v901, 0.0
  %v916 = vmax.f32 %v906, 0.0
  %v917 = vld [vmem:[%s2 + $0x58] sm:$0xff]
  %v918 = vld [vmem:[%s2 + $0x60] sm:$0xff]
  %v919 = vld [vmem:[%s2 + $0x68] sm:$0xff]
  %v920 = vld [vmem:[%s2 + $0x70] sm:$0xff]
  %929 = vrot.lane.b32.xlu0 %v17, 96
  %v930 = vpop.permute.xlu0 %929
  %931 = vrot.lane.b32.xlu0 %v18, 96
  %v932 = vpop.permute.xlu0 %931
  %933 = vrot.lane.b32.xlu0 %v19, 96
  %v934 = vpop.permute.xlu0 %933
  %935 = vrot.lane.b32.xlu0 %v20, 96
  %v936 = vpop.permute.xlu0 %935
  %937 = vrot.lane.b32.xlu0 %v21, 96
  %v938 = vpop.permute.xlu0 %937
  %939 = vrot.lane.b32.xlu0 %v22, 96
  %v940 = vpop.permute.xlu0 %939
  %941 = vrot.lane.b32.xlu0 %v23, 96
  %v942 = vpop.permute.xlu0 %941
  %943 = vrot.lane.b32.xlu0 %v24, 96
  %v944 = vpop.permute.xlu0 %943
  %v953 = vsel %vm50, %v930, 0.0
  %954 = vadd.xlane.f32.xlu0 %v953
  %v955 = vpop.xlane.xlu0 %954
  %v956 = vsel %vm50, %v932, 0.0
  %957 = vadd.xlane.f32.xlu0 %v956
  %v958 = vpop.xlane.xlu0 %957
  %v959 = vsel %vm50, %v934, 0.0
  %960 = vadd.xlane.f32.xlu0 %v959
  %v961 = vpop.xlane.xlu0 %960
  %v962 = vsel %vm50, %v936, 0.0
  %963 = vadd.xlane.f32.xlu0 %v962
  %v964 = vpop.xlane.xlu0 %963
  %v965 = vsel %vm50, %v938, 0.0
  %966 = vadd.xlane.f32.xlu0 %v965
  %v967 = vpop.xlane.xlu0 %966
  %v968 = vsel %vm50, %v940, 0.0
  %969 = vadd.xlane.f32.xlu0 %v968
  %v970 = vpop.xlane.xlu0 %969
  %v971 = vsel %vm50, %v942, 0.0
  %972 = vadd.xlane.f32.xlu0 %v971
  %v973 = vpop.xlane.xlu0 %972
  %v974 = vsel %vm50, %v944, 0.0
  %975 = vadd.xlane.f32.xlu0 %v974
  %v976 = vpop.xlane.xlu0 %975
  %985 = vrot.lane.b32.xlu0 %v25, 120
  %v986 = vpop.permute.xlu0 %985
  %987 = vrot.lane.b32.xlu0 %v26, 120
  %v988 = vpop.permute.xlu0 %987
  %989 = vrot.lane.b32.xlu0 %v27, 120
  %v990 = vpop.permute.xlu0 %989
  %991 = vrot.lane.b32.xlu0 %v28, 120
  %v992 = vpop.permute.xlu0 %991
  %993 = vrot.lane.b32.xlu0 %v29, 120
  %v994 = vpop.permute.xlu0 %993
  %995 = vrot.lane.b32.xlu0 %v30, 120
  %v996 = vpop.permute.xlu0 %995
  %997 = vrot.lane.b32.xlu0 %v31, 120
  %v998 = vpop.permute.xlu0 %997
  %999 = vrot.lane.b32.xlu0 %v32, 120
  %v1000 = vpop.permute.xlu0 %999
  %v1009 = vsel %vm75, %v986, 0.0
  %1010 = vadd.xlane.f32.xlu0 %v1009
  %v1011 = vpop.xlane.xlu0 %1010
  %v1012 = vsel %vm75, %v988, 0.0
  %1013 = vadd.xlane.f32.xlu0 %v1012
  %v1014 = vpop.xlane.xlu0 %1013
  %v1015 = vsel %vm75, %v990, 0.0
  %1016 = vadd.xlane.f32.xlu0 %v1015
  %v1017 = vpop.xlane.xlu0 %1016
  %v1018 = vsel %vm75, %v992, 0.0
  %1019 = vadd.xlane.f32.xlu0 %v1018
  %v1020 = vpop.xlane.xlu0 %1019
  %v1021 = vsel %vm75, %v994, 0.0
  %1022 = vadd.xlane.f32.xlu0 %v1021
  %v1023 = vpop.xlane.xlu0 %1022
  %v1024 = vsel %vm75, %v996, 0.0
  %1025 = vadd.xlane.f32.xlu0 %v1024
  %v1026 = vpop.xlane.xlu0 %1025
  %v1027 = vsel %vm75, %v998, 0.0
  %1028 = vadd.xlane.f32.xlu0 %v1027
  %v1029 = vpop.xlane.xlu0 %1028
  %v1030 = vsel %vm75, %v1000, 0.0
  %1031 = vadd.xlane.f32.xlu0 %v1030
  %v1032 = vpop.xlane.xlu0 %1031
  %v1033 = vadd.f32 %v955, %v1011
  %v1034 = vadd.f32 %v958, %v1014
  %v1035 = vadd.f32 %v961, %v1017
  %v1036 = vadd.f32 %v964, %v1020
  %v1037 = vadd.f32 %v967, %v1023
  %v1038 = vadd.f32 %v970, %v1026
  %v1039 = vadd.f32 %v973, %v1029
  %v1040 = vadd.f32 %v976, %v1032
  %v1041 = vmul.f32 %v1033, 0.02631579
  %v1042 = vmul.f32 %v1034, 0.02631579
  %v1043 = vmul.f32 %v1035, 0.02631579
  %v1044 = vmul.f32 %v1036, 0.02631579
  %v1045 = vmul.f32 %v1037, 0.02631579
  %v1046 = vmul.f32 %v1038, 0.02631579
  %v1047 = vmul.f32 %v1039, 0.02631579
  %v1048 = vmul.f32 %v1040, 0.02631579
  %v1049 = vsub.f32 %v17, %v1041
  %v1050 = vsub.f32 %v18, %v1042
  %v1051 = vsub.f32 %v19, %v1043
  %v1052 = vsub.f32 %v20, %v1044
  %v1053 = vsub.f32 %v21, %v1045
  %v1054 = vsub.f32 %v22, %v1046
  %v1055 = vsub.f32 %v23, %v1047
  %v1056 = vsub.f32 %v24, %v1048
  %v1057 = vsub.f32 %v25, %v1041
  %v1058 = vsub.f32 %v26, %v1042
  %v1059 = vsub.f32 %v27, %v1043
  %v1060 = vsub.f32 %v28, %v1044
  %v1061 = vsub.f32 %v29, %v1045
  %v1062 = vsub.f32 %v30, %v1046
  %v1063 = vsub.f32 %v31, %v1047
  %v1064 = vsub.f32 %v32, %v1048
  %1066 = vrot.lane.b32.xlu0 %v49, 8
  %v1067 = vpop.permute.xlu0 %1066
  %v1069 = vmul.f32 %v1057, %v1067
  %v1070 = vmul.f32 %v1058, %v1067
  %v1071 = vmul.f32 %v1059, %v1067
  %v1072 = vmul.f32 %v1060, %v1067
  %v1073 = vmul.f32 %v1061, %v1067
  %v1074 = vmul.f32 %v1062, %v1067
  %v1075 = vmul.f32 %v1063, %v1067
  %v1076 = vmul.f32 %v1064, %v1067
  %v1077 = vmul.f32 %v1049, %v1049
  %v1078 = vmul.f32 %v1050, %v1050
  %v1079 = vmul.f32 %v1051, %v1051
  %v1080 = vmul.f32 %v1052, %v1052
  %v1081 = vmul.f32 %v1053, %v1053
  %v1082 = vmul.f32 %v1054, %v1054
  %v1083 = vmul.f32 %v1055, %v1055
  %v1084 = vmul.f32 %v1056, %v1056
  %1093 = vrot.lane.b32.xlu0 %v1077, 96
  %v1094 = vpop.permute.xlu0 %1093
  %1095 = vrot.lane.b32.xlu0 %v1078, 96
  %v1096 = vpop.permute.xlu0 %1095
  %1097 = vrot.lane.b32.xlu0 %v1079, 96
  %v1098 = vpop.permute.xlu0 %1097
  %1099 = vrot.lane.b32.xlu0 %v1080, 96
  %v1100 = vpop.permute.xlu0 %1099
  %1101 = vrot.lane.b32.xlu0 %v1081, 96
  %v1102 = vpop.permute.xlu0 %1101
  %1103 = vrot.lane.b32.xlu0 %v1082, 96
  %v1104 = vpop.permute.xlu0 %1103
  %1105 = vrot.lane.b32.xlu0 %v1083, 96
  %v1106 = vpop.permute.xlu0 %1105
  %1107 = vrot.lane.b32.xlu0 %v1084, 96
  %v1108 = vpop.permute.xlu0 %1107
  %v1117 = vsel %vm50, %v1094, 0.0
  %1118 = vadd.xlane.f32.xlu0 %v1117
  %v1119 = vpop.xlane.xlu0 %1118
  %v1120 = vsel %vm50, %v1096, 0.0
  %1121 = vadd.xlane.f32.xlu0 %v1120
  %v1122 = vpop.xlane.xlu0 %1121
  %v1123 = vsel %vm50, %v1098, 0.0
  %1124 = vadd.xlane.f32.xlu0 %v1123
  %v1125 = vpop.xlane.xlu0 %1124
  %v1126 = vsel %vm50, %v1100, 0.0
  %1127 = vadd.xlane.f32.xlu0 %v1126
  %v1128 = vpop.xlane.xlu0 %1127
  %v1129 = vsel %vm50, %v1102, 0.0
  %1130 = vadd.xlane.f32.xlu0 %v1129
  %v1131 = vpop.xlane.xlu0 %1130
  %v1132 = vsel %vm50, %v1104, 0.0
  %1133 = vadd.xlane.f32.xlu0 %v1132
  %v1134 = vpop.xlane.xlu0 %1133
  %v1135 = vsel %vm50, %v1106, 0.0
  %1136 = vadd.xlane.f32.xlu0 %v1135
  %v1137 = vpop.xlane.xlu0 %1136
  %v1138 = vsel %vm50, %v1108, 0.0
  %1139 = vadd.xlane.f32.xlu0 %v1138
  %v1140 = vpop.xlane.xlu0 %1139
  %v1141 = vmul.f32 %v1069, %v1069
  %v1142 = vmul.f32 %v1070, %v1070
  %v1143 = vmul.f32 %v1071, %v1071
  %v1144 = vmul.f32 %v1072, %v1072
  %v1145 = vmul.f32 %v1073, %v1073
  %v1146 = vmul.f32 %v1074, %v1074
  %v1147 = vmul.f32 %v1075, %v1075
  %v1148 = vmul.f32 %v1076, %v1076
  %1157 = vrot.lane.b32.xlu0 %v1141, 120
  %v1158 = vpop.permute.xlu0 %1157
  %1159 = vrot.lane.b32.xlu0 %v1142, 120
  %v1160 = vpop.permute.xlu0 %1159
  %1161 = vrot.lane.b32.xlu0 %v1143, 120
  %v1162 = vpop.permute.xlu0 %1161
  %1163 = vrot.lane.b32.xlu0 %v1144, 120
  %v1164 = vpop.permute.xlu0 %1163
  %1165 = vrot.lane.b32.xlu0 %v1145, 120
  %v1166 = vpop.permute.xlu0 %1165
  %1167 = vrot.lane.b32.xlu0 %v1146, 120
  %v1168 = vpop.permute.xlu0 %1167
  %1169 = vrot.lane.b32.xlu0 %v1147, 120
  %v1170 = vpop.permute.xlu0 %1169
  %1171 = vrot.lane.b32.xlu0 %v1148, 120
  %v1172 = vpop.permute.xlu0 %1171
  %v1181 = vsel %vm75, %v1158, 0.0
  %1182 = vadd.xlane.f32.xlu0 %v1181
  %v1183 = vpop.xlane.xlu0 %1182
  %v1184 = vsel %vm75, %v1160, 0.0
  %1185 = vadd.xlane.f32.xlu0 %v1184
  %v1186 = vpop.xlane.xlu0 %1185
  %v1187 = vsel %vm75, %v1162, 0.0
  %1188 = vadd.xlane.f32.xlu0 %v1187
  %v1189 = vpop.xlane.xlu0 %1188
  %v1190 = vsel %vm75, %v1164, 0.0
  %1191 = vadd.xlane.f32.xlu0 %v1190
  %v1192 = vpop.xlane.xlu0 %1191
  %v1193 = vsel %vm75, %v1166, 0.0
  %1194 = vadd.xlane.f32.xlu0 %v1193
  %v1195 = vpop.xlane.xlu0 %1194
  %v1196 = vsel %vm75, %v1168, 0.0
  %1197 = vadd.xlane.f32.xlu0 %v1196
  %v1198 = vpop.xlane.xlu0 %1197
  %v1199 = vsel %vm75, %v1170, 0.0
  %1200 = vadd.xlane.f32.xlu0 %v1199
  %v1201 = vpop.xlane.xlu0 %1200
  %v1202 = vsel %vm75, %v1172, 0.0
  %1203 = vadd.xlane.f32.xlu0 %v1202
  %v1204 = vpop.xlane.xlu0 %1203
  %v1205 = vadd.f32 %v1119, %v1183
  %v1206 = vadd.f32 %v1122, %v1186
  %v1207 = vadd.f32 %v1125, %v1189
  %v1208 = vadd.f32 %v1128, %v1192
  %v1209 = vadd.f32 %v1131, %v1195
  %v1210 = vadd.f32 %v1134, %v1198
  %v1211 = vadd.f32 %v1137, %v1201
  %v1212 = vadd.f32 %v1140, %v1204
  %v1213 = vmul.f32 %v1205, 0.02631579
  %v1214 = vmul.f32 %v1206, 0.02631579
  %v1215 = vmul.f32 %v1207, 0.02631579
  %v1216 = vmul.f32 %v1208, 0.02631579
  %v1217 = vmul.f32 %v1209, 0.02631579
  %v1218 = vmul.f32 %v1210, 0.02631579
  %v1219 = vmul.f32 %v1211, 0.02631579
  %v1220 = vmul.f32 %v1212, 0.02631579
  %v1221 = vadd.f32 %v1213, 1e-06
  %v1222 = vadd.f32 %v1214, 1e-06
  %v1223 = vadd.f32 %v1215, 1e-06
  %v1224 = vadd.f32 %v1216, 1e-06
  %v1225 = vadd.f32 %v1217, 1e-06
  %v1226 = vadd.f32 %v1218, 1e-06
  %v1227 = vadd.f32 %v1219, 1e-06
  %v1228 = vadd.f32 %v1220, 1e-06
  %v1229 = vrsqrt.pop %v1221
  %v1230 = vrsqrt.pop %v1222
  %v1231 = vrsqrt.pop %v1223
  %v1232 = vrsqrt.pop %v1224
  %v1233 = vrsqrt.pop %v1225
  %v1234 = vrsqrt.pop %v1226
  %v1235 = vrsqrt.pop %v1227
  %v1236 = vrsqrt.pop %v1228
  %v1237 = vmul.f32 %v1049, %v1229
  %v1238 = vmul.f32 %v1050, %v1230
  %v1239 = vmul.f32 %v1051, %v1231
  %v1240 = vmul.f32 %v1052, %v1232
  %v1241 = vmul.f32 %v1053, %v1233
  %v1242 = vmul.f32 %v1054, %v1234
  %v1243 = vmul.f32 %v1055, %v1235
  %v1244 = vmul.f32 %v1056, %v1236
  %v1245 = vmul.f32 %v1069, %v1229
  %v1246 = vmul.f32 %v1070, %v1230
  %v1247 = vmul.f32 %v1071, %v1231
  %v1248 = vmul.f32 %v1072, %v1232
  %v1249 = vmul.f32 %v1073, %v1233
  %v1250 = vmul.f32 %v1074, %v1234
  %v1251 = vmul.f32 %v1075, %v1235
  %v1252 = vmul.f32 %v1076, %v1236
  %1261 = vrot.lane.b32.xlu0 %v1245, 120
  %v1262 = vpop.permute.xlu0 %1261
  %1263 = vrot.lane.b32.xlu0 %v1246, 120
  %v1264 = vpop.permute.xlu0 %1263
  %1265 = vrot.lane.b32.xlu0 %v1247, 120
  %v1266 = vpop.permute.xlu0 %1265
  %1267 = vrot.lane.b32.xlu0 %v1248, 120
  %v1268 = vpop.permute.xlu0 %1267
  %1269 = vrot.lane.b32.xlu0 %v1249, 120
  %v1270 = vpop.permute.xlu0 %1269
  %1271 = vrot.lane.b32.xlu0 %v1250, 120
  %v1272 = vpop.permute.xlu0 %1271
  %1273 = vrot.lane.b32.xlu0 %v1251, 120
  %v1274 = vpop.permute.xlu0 %1273
  %1275 = vrot.lane.b32.xlu0 %v1252, 120
  %v1276 = vpop.permute.xlu0 %1275
  %v1277 = vsel %vm75, %v1262, 0
  %v1279 = vsel %vm75, %v1264, 0
  %v1281 = vsel %vm75, %v1266, 0
  %v1283 = vsel %vm75, %v1268, 0
  %v1285 = vsel %vm75, %v1270, 0
  %v1287 = vsel %vm75, %v1272, 0
  %v1289 = vsel %vm75, %v1274, 0
  %v1291 = vsel %vm75, %v1276, 0
  %1293 = vmatprep.subr.mxu0 0.0
  %1294 = vmatpush1.msra.mxu0 0.0
  %1295 = vmatprep.subr.mxu0 0.0
  %1296 = vmatpush1.msra.mxu0 0.0
  %1297 = vmatprep.subr.mxu0 0.0
  %1298 = vmatpush1.msra.mxu0 0.0
  %1299 = vmatprep.subr.mxu0 0.0
  %1300 = vmatpush1.msra.mxu0 0.0
  %1301 = vmatprep.subr.mxu0 0.0
  %1302 = vmatpush1.msra.mxu0 0.0
  %1303 = vmatprep.subr.mxu0 0.0
  %1304 = vmatpush1.msra.mxu0 0.0
  %1305 = vmatprep.subr.mxu0 0.0
  %1306 = vmatpush1.msra.mxu0 0.0
  %1307 = vmatprep.subr.mxu0 0.0
  %1308 = vmatpush1.msra.mxu0 0.0
  %1309 = vmatprep.subr.mxu0 0.0
  %1310 = vmatpush1.msra.mxu0 0.0
  %1311 = vmatprep.subr.mxu0 0.0
  %1312 = vmatpush1.msra.mxu0 0.0
  %1313 = vmatprep.subr.mxu0 0.0
  %1314 = vmatpush1.msra.mxu0 0.0
  %1315 = vmatprep.subr.mxu0 0.0
  %1316 = vmatpush1.msra.mxu0 0.0
  %1317 = vmatprep.subr.mxu0 0.0
  %1318 = vmatpush1.msra.mxu0 0.0
  %1319 = vmatprep.subr.mxu0 0.0
  %1320 = vmatpush1.msra.mxu0 0.0
  %1321 = vmatprep.subr.mxu0 0.0
  %1322 = vmatpush1.msra.mxu0 0.0
  %1323 = vmatprep.subr.mxu0 0.0
  %1324 = vmatpush1.msra.mxu0 %v37
  %1325 = vmatprep.subr.mxu0 0.0
  %1326 = vmatpush2.msra.mxu0 0.0
  %1327 = vmatprep.subr.mxu0 0.0
  %1328 = vmatpush2.msra.mxu0 0.0
  %1329 = vmatprep.subr.mxu0 0.0
  %1330 = vmatpush2.msra.mxu0 0.0
  %1331 = vmatprep.subr.mxu0 0.0
  %1332 = vmatpush2.msra.mxu0 0.0
  %1333 = vmatprep.subr.mxu0 0.0
  %1334 = vmatpush2.msra.mxu0 0.0
  %1335 = vmatprep.subr.mxu0 0.0
  %1336 = vmatpush2.msra.mxu0 0.0
  %1337 = vmatprep.subr.mxu0 0.0
  %1338 = vmatpush2.msra.mxu0 0.0
  %1339 = vmatprep.subr.mxu0 0.0
  %1340 = vmatpush2.msra.mxu0 0.0
  %1341 = vmatprep.subr.mxu0 0.0
  %1342 = vmatpush2.msra.mxu0 0.0
  %1343 = vmatprep.subr.mxu0 0.0
  %1344 = vmatpush2.msra.mxu0 0.0
  %1345 = vmatprep.subr.mxu0 0.0
  %1346 = vmatpush2.msra.mxu0 0.0
  %1347 = vmatprep.subr.mxu0 0.0
  %1348 = vmatpush2.msra.mxu0 0.0
  %1349 = vmatprep.subr.mxu0 0.0
  %1350 = vmatpush2.msra.mxu0 0.0
  %1351 = vmatprep.subr.mxu0 0.0
  %1352 = vmatpush2.msra.mxu0 0.0
  %1353 = vmatprep.subr.mxu0 0.0
  %1354 = vmatpush2.msra.mxu0 0.0
  %1355 = vmatprep.subr.mxu0 0.0
  %1356 = vmatpush2.msra.mxu0 0.0
  %1357 = vmatprep.mubr.f32.mxu0 0.0
  %1358 = vmatmul.mubr.f32.gmra.mxu0 %v1277
  %v1359 = vpop.f32.mrf.mxu0
  %v1360 = vadd.f32 0.0, %v1359
  %v1361 = vpop.f32.mrf.mxu0
  %1362 = vmatprep.mubr.f32.mxu0 0.0
  %1363 = vmatmul.mubr.f32.gmra.mxu0 %v1279
  %v1364 = vpop.f32.mrf.mxu0
  %v1365 = vadd.f32 0.0, %v1364
  %v1366 = vpop.f32.mrf.mxu0
  %1367 = vmatprep.mubr.f32.mxu0 0.0
  %1368 = vmatmul.mubr.f32.gmra.mxu0 %v1281
  %v1369 = vpop.f32.mrf.mxu0
  %v1370 = vadd.f32 0.0, %v1369
  %v1371 = vpop.f32.mrf.mxu0
  %1372 = vmatprep.mubr.f32.mxu0 0.0
  %1373 = vmatmul.mubr.f32.gmra.mxu0 %v1283
  %v1374 = vpop.f32.mrf.mxu0
  %v1375 = vadd.f32 0.0, %v1374
  %v1376 = vpop.f32.mrf.mxu0
  %1377 = vmatprep.mubr.f32.mxu0 0.0
  %1378 = vmatmul.mubr.f32.gmra.mxu0 %v1285
  %v1379 = vpop.f32.mrf.mxu0
  %v1380 = vadd.f32 0.0, %v1379
  %v1381 = vpop.f32.mrf.mxu0
  %1382 = vmatprep.mubr.f32.mxu0 0.0
  %1383 = vmatmul.mubr.f32.gmra.mxu0 %v1287
  %v1384 = vpop.f32.mrf.mxu0
  %v1385 = vadd.f32 0.0, %v1384
  %v1386 = vpop.f32.mrf.mxu0
  %1387 = vmatprep.mubr.f32.mxu0 0.0
  %1388 = vmatmul.mubr.f32.gmra.mxu0 %v1289
  %v1389 = vpop.f32.mrf.mxu0
  %v1390 = vadd.f32 0.0, %v1389
  %v1391 = vpop.f32.mrf.mxu0
  %1392 = vmatprep.mubr.f32.mxu0 0.0
  %1393 = vmatmul.mubr.f32.gmra.mxu0 %v1291
  %v1394 = vpop.f32.mrf.mxu0
  %v1395 = vadd.f32 0.0, %v1394
  %v1396 = vpop.f32.mrf.mxu0
  %1397 = vdwg.mxu0
  %1406 = vrot.lane.b32.xlu0 %v1237, 96
  %v1407 = vpop.permute.xlu0 %1406
  %1408 = vrot.lane.b32.xlu0 %v1238, 96
  %v1409 = vpop.permute.xlu0 %1408
  %1410 = vrot.lane.b32.xlu0 %v1239, 96
  %v1411 = vpop.permute.xlu0 %1410
  %1412 = vrot.lane.b32.xlu0 %v1240, 96
  %v1413 = vpop.permute.xlu0 %1412
  %1414 = vrot.lane.b32.xlu0 %v1241, 96
  %v1415 = vpop.permute.xlu0 %1414
  %1416 = vrot.lane.b32.xlu0 %v1242, 96
  %v1417 = vpop.permute.xlu0 %1416
  %1418 = vrot.lane.b32.xlu0 %v1243, 96
  %v1419 = vpop.permute.xlu0 %1418
  %1420 = vrot.lane.b32.xlu0 %v1244, 96
  %v1421 = vpop.permute.xlu0 %1420
  %v1422 = vsel %vm50, %v1407, 0
  %v1424 = vsel %vm50, %v1409, 0
  %v1426 = vsel %vm50, %v1411, 0
  %v1428 = vsel %vm50, %v1413, 0
  %v1430 = vsel %vm50, %v1415, 0
  %v1432 = vsel %vm50, %v1417, 0
  %v1434 = vsel %vm50, %v1419, 0
  %v1436 = vsel %vm50, %v1421, 0
  %1438 = vmatprep.subr.mxu0 0.0
  %1439 = vmatpush1.msra.mxu0 0.0
  %1440 = vmatprep.subr.mxu0 0.0
  %1441 = vmatpush1.msra.mxu0 0.0
  %1442 = vmatprep.subr.mxu0 0.0
  %1443 = vmatpush1.msra.mxu0 0.0
  %1444 = vmatprep.subr.mxu0 0.0
  %1445 = vmatpush1.msra.mxu0 0.0
  %1446 = vmatprep.subr.mxu0 0.0
  %1447 = vmatpush1.msra.mxu0 0.0
  %1448 = vmatprep.subr.mxu0 0.0
  %1449 = vmatpush1.msra.mxu0 0.0
  %1450 = vmatprep.subr.mxu0 0.0
  %1451 = vmatpush1.msra.mxu0 0.0
  %1452 = vmatprep.subr.mxu0 0.0
  %1453 = vmatpush1.msra.mxu0 0.0
  %1454 = vmatprep.subr.mxu0 0.0
  %1455 = vmatpush1.msra.mxu0 0.0
  %1456 = vmatprep.subr.mxu0 0.0
  %1457 = vmatpush1.msra.mxu0 0.0
  %1458 = vmatprep.subr.mxu0 0.0
  %1459 = vmatpush1.msra.mxu0 0.0
  %1460 = vmatprep.subr.mxu0 0.0
  %1461 = vmatpush1.msra.mxu0 0.0
  %1462 = vmatprep.subr.mxu0 0.0
  %1463 = vmatpush1.msra.mxu0 %v36
  %1464 = vmatprep.subr.mxu0 0.0
  %1465 = vmatpush1.msra.mxu0 %v35
  %1466 = vmatprep.subr.mxu0 0.0
  %1467 = vmatpush1.msra.mxu0 %v34
  %1468 = vmatprep.subr.mxu0 0.0
  %1469 = vmatpush1.msra.mxu0 %v33
  %1470 = vmatprep.subr.mxu0 0.0
  %1471 = vmatpush2.msra.mxu0 0.0
  %1472 = vmatprep.subr.mxu0 0.0
  %1473 = vmatpush2.msra.mxu0 0.0
  %1474 = vmatprep.subr.mxu0 0.0
  %1475 = vmatpush2.msra.mxu0 0.0
  %1476 = vmatprep.subr.mxu0 0.0
  %1477 = vmatpush2.msra.mxu0 0.0
  %1478 = vmatprep.subr.mxu0 0.0
  %1479 = vmatpush2.msra.mxu0 0.0
  %1480 = vmatprep.subr.mxu0 0.0
  %1481 = vmatpush2.msra.mxu0 0.0
  %1482 = vmatprep.subr.mxu0 0.0
  %1483 = vmatpush2.msra.mxu0 0.0
  %1484 = vmatprep.subr.mxu0 0.0
  %1485 = vmatpush2.msra.mxu0 0.0
  %1486 = vmatprep.subr.mxu0 0.0
  %1487 = vmatpush2.msra.mxu0 0.0
  %1488 = vmatprep.subr.mxu0 0.0
  %1489 = vmatpush2.msra.mxu0 0.0
  %1490 = vmatprep.subr.mxu0 0.0
  %1491 = vmatpush2.msra.mxu0 0.0
  %1492 = vmatprep.subr.mxu0 0.0
  %1493 = vmatpush2.msra.mxu0 0.0
  %1494 = vmatprep.subr.mxu0 0.0
  %1495 = vmatpush2.msra.mxu0 0.0
  %1496 = vmatprep.subr.mxu0 0.0
  %1497 = vmatpush2.msra.mxu0 0.0
  %1498 = vmatprep.subr.mxu0 0.0
  %1499 = vmatpush2.msra.mxu0 0.0
  %1500 = vmatprep.subr.mxu0 0.0
  %1501 = vmatpush2.msra.mxu0 0.0
  %1502 = vmatprep.mubr.f32.mxu0 0.0
  %1503 = vmatmul.mubr.f32.gmra.mxu0 %v1422
  %v1504 = vpop.f32.mrf.mxu0
  %v1505 = vadd.f32 %v1360, %v1504
  %v1506 = vpop.f32.mrf.mxu0
  %1507 = vmatprep.mubr.f32.mxu0 0.0
  %1508 = vmatmul.mubr.f32.gmra.mxu0 %v1424
  %v1509 = vpop.f32.mrf.mxu0
  %v1510 = vadd.f32 %v1365, %v1509
  %v1511 = vpop.f32.mrf.mxu0
  %1512 = vmatprep.mubr.f32.mxu0 0.0
  %1513 = vmatmul.mubr.f32.gmra.mxu0 %v1426
  %v1514 = vpop.f32.mrf.mxu0
  %v1515 = vadd.f32 %v1370, %v1514
  %v1516 = vpop.f32.mrf.mxu0
  %1517 = vmatprep.mubr.f32.mxu0 0.0
  %1518 = vmatmul.mubr.f32.gmra.mxu0 %v1428
  %v1519 = vpop.f32.mrf.mxu0
  %v1520 = vadd.f32 %v1375, %v1519
  %v1521 = vpop.f32.mrf.mxu0
  %1522 = vmatprep.mubr.f32.mxu0 0.0
  %1523 = vmatmul.mubr.f32.gmra.mxu0 %v1430
  %v1524 = vpop.f32.mrf.mxu0
  %v1525 = vadd.f32 %v1380, %v1524
  %v1526 = vpop.f32.mrf.mxu0
  %1527 = vmatprep.mubr.f32.mxu0 0.0
  %1528 = vmatmul.mubr.f32.gmra.mxu0 %v1432
  %v1529 = vpop.f32.mrf.mxu0
  %v1530 = vadd.f32 %v1385, %v1529
  %v1531 = vpop.f32.mrf.mxu0
  %1532 = vmatprep.mubr.f32.mxu0 0.0
  %1533 = vmatmul.mubr.f32.gmra.mxu0 %v1434
  %v1534 = vpop.f32.mrf.mxu0
  %v1535 = vadd.f32 %v1390, %v1534
  %v1536 = vpop.f32.mrf.mxu0
  %1537 = vmatprep.mubr.f32.mxu0 0.0
  %1538 = vmatmul.mubr.f32.gmra.mxu0 %v1436
  %v1539 = vpop.f32.mrf.mxu0
  %v1540 = vadd.f32 %v1395, %v1539
  %v1541 = vpop.f32.mrf.mxu0
  %1542 = vdwg.mxu0
  %v1543 = vadd.f32 %v1505, %v513
  %v1544 = vadd.f32 %v1510, %v513
  %v1545 = vadd.f32 %v1515, %v513
  %v1546 = vadd.f32 %v1520, %v513
  %v1547 = vadd.f32 %v1525, %v513
  %v1548 = vadd.f32 %v1530, %v513
  %v1549 = vadd.f32 %v1535, %v513
  %v1550 = vadd.f32 %v1540, %v513
  %v1551 = vmax.f32 %v1543, 0.0
  %v1552 = vmax.f32 %v1544, 0.0
  %v1553 = vmax.f32 %v1545, 0.0
  %v1554 = vmax.f32 %v1546, 0.0
  %v1555 = vmax.f32 %v1547, 0.0
  %v1556 = vmax.f32 %v1548, 0.0
  %v1557 = vmax.f32 %v1549, 0.0
  %v1558 = vmax.f32 %v1550, 0.0
  %v1560 = vsel %vm534, %v1551, 0
  %v1563 = vsel %vm534, %v1552, 0
  %v1566 = vsel %vm534, %v1553, 0
  %v1569 = vsel %vm534, %v1554, 0
  %v1572 = vsel %vm534, %v1555, 0
  %v1575 = vsel %vm534, %v1556, 0
  %v1578 = vsel %vm534, %v1557, 0
  %v1581 = vsel %vm534, %v1558, 0
  %1583 = vmatprep.subr.mxu0 0.0
  %1584 = vmatpush1.msra.mxu0 0.0
  %1585 = vmatprep.subr.mxu0 0.0
  %1586 = vmatpush1.msra.mxu0 0.0
  %1587 = vmatprep.subr.mxu0 0.0
  %1588 = vmatpush1.msra.mxu0 0.0
  %1589 = vmatprep.subr.mxu0 0.0
  %1590 = vmatpush1.msra.mxu0 0.0
  %1591 = vmatprep.subr.mxu0 0.0
  %1592 = vmatpush1.msra.mxu0 0.0
  %1593 = vmatprep.subr.mxu0 0.0
  %1594 = vmatpush1.msra.mxu0 0.0
  %1595 = vmatprep.subr.mxu0 0.0
  %1596 = vmatpush1.msra.mxu0 0.0
  %1597 = vmatprep.subr.mxu0 0.0
  %1598 = vmatpush1.msra.mxu0 0.0
  %1599 = vmatprep.subr.mxu0 0.0
  %1600 = vmatpush1.msra.mxu0 0.0
  %1601 = vmatprep.subr.mxu0 0.0
  %1602 = vmatpush1.msra.mxu0 0.0
  %1603 = vmatprep.subr.mxu0 0.0
  %1604 = vmatpush1.msra.mxu0 0.0
  %1605 = vmatprep.subr.mxu0 0.0
  %1606 = vmatpush1.msra.mxu0 0.0
  %1607 = vmatprep.subr.mxu0 0.0
  %1608 = vmatpush1.msra.mxu0 0.0
  %1609 = vmatprep.subr.mxu0 0.0
  %1610 = vmatpush1.msra.mxu0 %v561
  %1611 = vmatprep.subr.mxu0 0.0
  %1612 = vmatpush1.msra.mxu0 %v39
  %1613 = vmatprep.subr.mxu0 0.0
  %1614 = vmatpush1.msra.mxu0 %v38
  %1615 = vmatprep.subr.mxu0 0.0
  %1616 = vmatpush2.msra.mxu0 0.0
  %1617 = vmatprep.subr.mxu0 0.0
  %1618 = vmatpush2.msra.mxu0 0.0
  %1619 = vmatprep.subr.mxu0 0.0
  %1620 = vmatpush2.msra.mxu0 0.0
  %1621 = vmatprep.subr.mxu0 0.0
  %1622 = vmatpush2.msra.mxu0 0.0
  %1623 = vmatprep.subr.mxu0 0.0
  %1624 = vmatpush2.msra.mxu0 0.0
  %1625 = vmatprep.subr.mxu0 0.0
  %1626 = vmatpush2.msra.mxu0 0.0
  %1627 = vmatprep.subr.mxu0 0.0
  %1628 = vmatpush2.msra.mxu0 0.0
  %1629 = vmatprep.subr.mxu0 0.0
  %1630 = vmatpush2.msra.mxu0 0.0
  %1631 = vmatprep.subr.mxu0 0.0
  %1632 = vmatpush2.msra.mxu0 0.0
  %1633 = vmatprep.subr.mxu0 0.0
  %1634 = vmatpush2.msra.mxu0 0.0
  %1635 = vmatprep.subr.mxu0 0.0
  %1636 = vmatpush2.msra.mxu0 0.0
  %1637 = vmatprep.subr.mxu0 0.0
  %1638 = vmatpush2.msra.mxu0 0.0
  %1639 = vmatprep.subr.mxu0 0.0
  %1640 = vmatpush2.msra.mxu0 0.0
  %1641 = vmatprep.subr.mxu0 0.0
  %1642 = vmatpush2.msra.mxu0 0.0
  %1643 = vmatprep.subr.mxu0 0.0
  %1644 = vmatpush2.msra.mxu0 0.0
  %1645 = vmatprep.subr.mxu0 0.0
  %1646 = vmatpush2.msra.mxu0 0.0
  %1647 = vmatprep.mubr.f32.mxu0 0.0
  %1648 = vmatmul.mubr.f32.gmra.mxu0 %v1560
  %v1649 = vpop.f32.mrf.mxu0
  %v1650 = vadd.f32 %v533, %v1649
  %v1651 = vpop.f32.mrf.mxu0
  %1652 = vmatprep.mubr.f32.mxu0 0.0
  %1653 = vmatmul.mubr.f32.gmra.mxu0 %v1563
  %v1654 = vpop.f32.mrf.mxu0
  %v1655 = vadd.f32 %v533, %v1654
  %v1656 = vpop.f32.mrf.mxu0
  %1657 = vmatprep.mubr.f32.mxu0 0.0
  %1658 = vmatmul.mubr.f32.gmra.mxu0 %v1566
  %v1659 = vpop.f32.mrf.mxu0
  %v1660 = vadd.f32 %v533, %v1659
  %v1661 = vpop.f32.mrf.mxu0
  %1662 = vmatprep.mubr.f32.mxu0 0.0
  %1663 = vmatmul.mubr.f32.gmra.mxu0 %v1569
  %v1664 = vpop.f32.mrf.mxu0
  %v1665 = vadd.f32 %v533, %v1664
  %v1666 = vpop.f32.mrf.mxu0
  %1667 = vmatprep.mubr.f32.mxu0 0.0
  %1668 = vmatmul.mubr.f32.gmra.mxu0 %v1572
  %v1669 = vpop.f32.mrf.mxu0
  %v1670 = vadd.f32 %v533, %v1669
  %v1671 = vpop.f32.mrf.mxu0
  %1672 = vmatprep.mubr.f32.mxu0 0.0
  %1673 = vmatmul.mubr.f32.gmra.mxu0 %v1575
  %v1674 = vpop.f32.mrf.mxu0
  %v1675 = vadd.f32 %v533, %v1674
  %v1676 = vpop.f32.mrf.mxu0
  %1677 = vmatprep.mubr.f32.mxu0 0.0
  %1678 = vmatmul.mubr.f32.gmra.mxu0 %v1578
  %v1679 = vpop.f32.mrf.mxu0
  %v1680 = vadd.f32 %v533, %v1679
  %v1681 = vpop.f32.mrf.mxu0
  %1682 = vmatprep.mubr.f32.mxu0 0.0
  %1683 = vmatmul.mubr.f32.gmra.mxu0 %v1581
  %v1684 = vpop.f32.mrf.mxu0
  %v1685 = vadd.f32 %v533, %v1684
  %v1686 = vpop.f32.mrf.mxu0
  %1687 = vdwg.mxu0
  %v1688 = vsel %vm534, %v1650, 0.0
  %1689 = vadd.xlane.f32.xlu0 %v1688
  %v1690 = vpop.xlane.xlu0 %1689
  %v1691 = vsel %vm534, %v1655, 0.0
  %1692 = vadd.xlane.f32.xlu0 %v1691
  %v1693 = vpop.xlane.xlu0 %1692
  %v1694 = vsel %vm534, %v1660, 0.0
  %1695 = vadd.xlane.f32.xlu0 %v1694
  %v1696 = vpop.xlane.xlu0 %1695
  %v1697 = vsel %vm534, %v1665, 0.0
  %1698 = vadd.xlane.f32.xlu0 %v1697
  %v1699 = vpop.xlane.xlu0 %1698
  %v1700 = vsel %vm534, %v1670, 0.0
  %1701 = vadd.xlane.f32.xlu0 %v1700
  %v1702 = vpop.xlane.xlu0 %1701
  %v1703 = vsel %vm534, %v1675, 0.0
  %1704 = vadd.xlane.f32.xlu0 %v1703
  %v1705 = vpop.xlane.xlu0 %1704
  %v1706 = vsel %vm534, %v1680, 0.0
  %1707 = vadd.xlane.f32.xlu0 %v1706
  %v1708 = vpop.xlane.xlu0 %1707
  %v1709 = vsel %vm534, %v1685, 0.0
  %1710 = vadd.xlane.f32.xlu0 %v1709
  %v1711 = vpop.xlane.xlu0 %1710
  %v1712 = vmul.f32 %v1690, %v692
  %v1713 = vmul.f32 %v1693, %v692
  %v1714 = vmul.f32 %v1696, %v692
  %v1715 = vmul.f32 %v1699, %v692
  %v1716 = vmul.f32 %v1702, %v692
  %v1717 = vmul.f32 %v1705, %v692
  %v1718 = vmul.f32 %v1708, %v692
  %v1719 = vmul.f32 %v1711, %v692
  %v1720 = vsub.f32 %v1650, %v1712
  %v1721 = vsub.f32 %v1655, %v1713
  %v1722 = vsub.f32 %v1660, %v1714
  %v1723 = vsub.f32 %v1665, %v1715
  %v1724 = vsub.f32 %v1670, %v1716
  %v1725 = vsub.f32 %v1675, %v1717
  %v1726 = vsub.f32 %v1680, %v1718
  %v1727 = vsub.f32 %v1685, %v1719
  %v1728 = vmul.f32 %v1720, %v1720
  %v1729 = vmul.f32 %v1721, %v1721
  %v1730 = vmul.f32 %v1722, %v1722
  %v1731 = vmul.f32 %v1723, %v1723
  %v1732 = vmul.f32 %v1724, %v1724
  %v1733 = vmul.f32 %v1725, %v1725
  %v1734 = vmul.f32 %v1726, %v1726
  %v1735 = vmul.f32 %v1727, %v1727
  %v1736 = vsel %vm534, %v1728, 0.0
  %1737 = vadd.xlane.f32.xlu0 %v1736
  %v1738 = vpop.xlane.xlu0 %1737
  %v1739 = vsel %vm534, %v1729, 0.0
  %1740 = vadd.xlane.f32.xlu0 %v1739
  %v1741 = vpop.xlane.xlu0 %1740
  %v1742 = vsel %vm534, %v1730, 0.0
  %1743 = vadd.xlane.f32.xlu0 %v1742
  %v1744 = vpop.xlane.xlu0 %1743
  %v1745 = vsel %vm534, %v1731, 0.0
  %1746 = vadd.xlane.f32.xlu0 %v1745
  %v1747 = vpop.xlane.xlu0 %1746
  %v1748 = vsel %vm534, %v1732, 0.0
  %1749 = vadd.xlane.f32.xlu0 %v1748
  %v1750 = vpop.xlane.xlu0 %1749
  %v1751 = vsel %vm534, %v1733, 0.0
  %1752 = vadd.xlane.f32.xlu0 %v1751
  %v1753 = vpop.xlane.xlu0 %1752
  %v1754 = vsel %vm534, %v1734, 0.0
  %1755 = vadd.xlane.f32.xlu0 %v1754
  %v1756 = vpop.xlane.xlu0 %1755
  %v1757 = vsel %vm534, %v1735, 0.0
  %1758 = vadd.xlane.f32.xlu0 %v1757
  %v1759 = vpop.xlane.xlu0 %1758
  %v1760 = vmul.f32 %v1738, %v692
  %v1761 = vmul.f32 %v1741, %v692
  %v1762 = vmul.f32 %v1744, %v692
  %v1763 = vmul.f32 %v1747, %v692
  %v1764 = vmul.f32 %v1750, %v692
  %v1765 = vmul.f32 %v1753, %v692
  %v1766 = vmul.f32 %v1756, %v692
  %v1767 = vmul.f32 %v1759, %v692
  %v1768 = vadd.f32 %v1760, 1e-06
  %v1769 = vadd.f32 %v1761, 1e-06
  %v1770 = vadd.f32 %v1762, 1e-06
  %v1771 = vadd.f32 %v1763, 1e-06
  %v1772 = vadd.f32 %v1764, 1e-06
  %v1773 = vadd.f32 %v1765, 1e-06
  %v1774 = vadd.f32 %v1766, 1e-06
  %v1775 = vadd.f32 %v1767, 1e-06
  %v1776 = vrsqrt.pop %v1768
  %v1777 = vrsqrt.pop %v1769
  %v1778 = vrsqrt.pop %v1770
  %v1779 = vrsqrt.pop %v1771
  %v1780 = vrsqrt.pop %v1772
  %v1781 = vrsqrt.pop %v1773
  %v1782 = vrsqrt.pop %v1774
  %v1783 = vrsqrt.pop %v1775
  %v1784 = vmul.f32 %v1720, %v1776
  %v1785 = vmul.f32 %v1721, %v1777
  %v1786 = vmul.f32 %v1722, %v1778
  %v1787 = vmul.f32 %v1723, %v1779
  %v1788 = vmul.f32 %v1724, %v1780
  %v1789 = vmul.f32 %v1725, %v1781
  %v1790 = vmul.f32 %v1726, %v1782
  %v1791 = vmul.f32 %v1727, %v1783
  %v1793 = vsel %vm534, %v1784, 0
  %v1796 = vsel %vm534, %v1785, 0
  %v1799 = vsel %vm534, %v1786, 0
  %v1802 = vsel %vm534, %v1787, 0
  %v1805 = vsel %vm534, %v1788, 0
  %v1808 = vsel %vm534, %v1789, 0
  %v1811 = vsel %vm534, %v1790, 0
  %v1814 = vsel %vm534, %v1791, 0
  %1816 = vmatprep.subr.mxu0 0.0
  %1817 = vmatpush1.msra.mxu0 0.0
  %1818 = vmatprep.subr.mxu0 0.0
  %1819 = vmatpush1.msra.mxu0 0.0
  %1820 = vmatprep.subr.mxu0 0.0
  %1821 = vmatpush1.msra.mxu0 0.0
  %1822 = vmatprep.subr.mxu0 0.0
  %1823 = vmatpush1.msra.mxu0 0.0
  %1824 = vmatprep.subr.mxu0 0.0
  %1825 = vmatpush1.msra.mxu0 0.0
  %1826 = vmatprep.subr.mxu0 0.0
  %1827 = vmatpush1.msra.mxu0 0.0
  %1828 = vmatprep.subr.mxu0 0.0
  %1829 = vmatpush1.msra.mxu0 0.0
  %1830 = vmatprep.subr.mxu0 0.0
  %1831 = vmatpush1.msra.mxu0 0.0
  %1832 = vmatprep.subr.mxu0 0.0
  %1833 = vmatpush1.msra.mxu0 0.0
  %1834 = vmatprep.subr.mxu0 0.0
  %1835 = vmatpush1.msra.mxu0 0.0
  %1836 = vmatprep.subr.mxu0 0.0
  %1837 = vmatpush1.msra.mxu0 0.0
  %1838 = vmatprep.subr.mxu0 0.0
  %1839 = vmatpush1.msra.mxu0 0.0
  %1840 = vmatprep.subr.mxu0 0.0
  %1841 = vmatpush1.msra.mxu0 0.0
  %1842 = vmatprep.subr.mxu0 0.0
  %1843 = vmatpush1.msra.mxu0 %v802
  %1844 = vmatprep.subr.mxu0 0.0
  %1845 = vmatpush1.msra.mxu0 %v42
  %1846 = vmatprep.subr.mxu0 0.0
  %1847 = vmatpush1.msra.mxu0 %v41
  %1848 = vmatprep.subr.mxu0 0.0
  %1849 = vmatpush2.msra.mxu0 0.0
  %1850 = vmatprep.subr.mxu0 0.0
  %1851 = vmatpush2.msra.mxu0 0.0
  %1852 = vmatprep.subr.mxu0 0.0
  %1853 = vmatpush2.msra.mxu0 0.0
  %1854 = vmatprep.subr.mxu0 0.0
  %1855 = vmatpush2.msra.mxu0 0.0
  %1856 = vmatprep.subr.mxu0 0.0
  %1857 = vmatpush2.msra.mxu0 0.0
  %1858 = vmatprep.subr.mxu0 0.0
  %1859 = vmatpush2.msra.mxu0 0.0
  %1860 = vmatprep.subr.mxu0 0.0
  %1861 = vmatpush2.msra.mxu0 0.0
  %1862 = vmatprep.subr.mxu0 0.0
  %1863 = vmatpush2.msra.mxu0 0.0
  %1864 = vmatprep.subr.mxu0 0.0
  %1865 = vmatpush2.msra.mxu0 0.0
  %1866 = vmatprep.subr.mxu0 0.0
  %1867 = vmatpush2.msra.mxu0 0.0
  %1868 = vmatprep.subr.mxu0 0.0
  %1869 = vmatpush2.msra.mxu0 0.0
  %1870 = vmatprep.subr.mxu0 0.0
  %1871 = vmatpush2.msra.mxu0 0.0
  %1872 = vmatprep.subr.mxu0 0.0
  %1873 = vmatpush2.msra.mxu0 0.0
  %1874 = vmatprep.subr.mxu0 0.0
  %1875 = vmatpush2.msra.mxu0 0.0
  %1876 = vmatprep.subr.mxu0 0.0
  %1877 = vmatpush2.msra.mxu0 0.0
  %1878 = vmatprep.subr.mxu0 0.0
  %1879 = vmatpush2.msra.mxu0 0.0
  %1880 = vmatprep.mubr.f32.mxu0 0.0
  %1881 = vmatmul.mubr.f32.gmra.mxu0 %v1793
  %v1882 = vpop.f32.mrf.mxu0
  %v1883 = vadd.f32 %v776, %v1882
  %v1884 = vpop.f32.mrf.mxu0
  %1885 = vmatprep.mubr.f32.mxu0 0.0
  %1886 = vmatmul.mubr.f32.gmra.mxu0 %v1796
  %v1887 = vpop.f32.mrf.mxu0
  %v1888 = vadd.f32 %v776, %v1887
  %v1889 = vpop.f32.mrf.mxu0
  %1890 = vmatprep.mubr.f32.mxu0 0.0
  %1891 = vmatmul.mubr.f32.gmra.mxu0 %v1799
  %v1892 = vpop.f32.mrf.mxu0
  %v1893 = vadd.f32 %v776, %v1892
  %v1894 = vpop.f32.mrf.mxu0
  %1895 = vmatprep.mubr.f32.mxu0 0.0
  %1896 = vmatmul.mubr.f32.gmra.mxu0 %v1802
  %v1897 = vpop.f32.mrf.mxu0
  %v1898 = vadd.f32 %v776, %v1897
  %v1899 = vpop.f32.mrf.mxu0
  %1900 = vmatprep.mubr.f32.mxu0 0.0
  %1901 = vmatmul.mubr.f32.gmra.mxu0 %v1805
  %v1902 = vpop.f32.mrf.mxu0
  %v1903 = vadd.f32 %v776, %v1902
  %v1904 = vpop.f32.mrf.mxu0
  %1905 = vmatprep.mubr.f32.mxu0 0.0
  %1906 = vmatmul.mubr.f32.gmra.mxu0 %v1808
  %v1907 = vpop.f32.mrf.mxu0
  %v1908 = vadd.f32 %v776, %v1907
  %v1909 = vpop.f32.mrf.mxu0
  %1910 = vmatprep.mubr.f32.mxu0 0.0
  %1911 = vmatmul.mubr.f32.gmra.mxu0 %v1811
  %v1912 = vpop.f32.mrf.mxu0
  %v1913 = vadd.f32 %v776, %v1912
  %v1914 = vpop.f32.mrf.mxu0
  %1915 = vmatprep.mubr.f32.mxu0 0.0
  %1916 = vmatmul.mubr.f32.gmra.mxu0 %v1814
  %v1917 = vpop.f32.mrf.mxu0
  %v1918 = vadd.f32 %v776, %v1917
  %v1919 = vpop.f32.mrf.mxu0
  %1920 = vdwg.mxu0
  %v1921 = vmax.f32 %v1883, 0.0
  %v1922 = vmax.f32 %v1888, 0.0
  %v1923 = vmax.f32 %v1893, 0.0
  %v1924 = vmax.f32 %v1898, 0.0
  %v1925 = vmax.f32 %v1903, 0.0
  %v1926 = vmax.f32 %v1908, 0.0
  %v1927 = vmax.f32 %v1913, 0.0
  %v1928 = vmax.f32 %v1918, 0.0
  %v1929 = vld [vmem:[%s2 + $0x78] sm:$0xff]
  %v1930 = vld [vmem:[%s2 + $0x80] sm:$0xff]
  %v1931 = vld [vmem:[%s2 + $0x88] sm:$0xff]
  %v1932 = vld [vmem:[%s2 + $0x90] sm:$0xff]
  %v1934 = vsel %vm50, %v1921, 0
  %v1937 = vsel %vm50, %v1922, 0
  %v1940 = vsel %vm50, %v1923, 0
  %v1943 = vsel %vm50, %v1924, 0
  %v1946 = vsel %vm50, %v1925, 0
  %v1949 = vsel %vm50, %v1926, 0
  %v1952 = vsel %vm50, %v1927, 0
  %v1955 = vsel %vm50, %v1928, 0
  %1957 = vmatprep.subr.mxu0 0.0
  %1958 = vmatpush1.msra.mxu0 0.0
  %1959 = vmatprep.subr.mxu0 0.0
  %1960 = vmatpush1.msra.mxu0 0.0
  %1961 = vmatprep.subr.mxu0 0.0
  %1962 = vmatpush1.msra.mxu0 0.0
  %1963 = vmatprep.subr.mxu0 0.0
  %1964 = vmatpush1.msra.mxu0 0.0
  %1965 = vmatprep.subr.mxu0 0.0
  %1966 = vmatpush1.msra.mxu0 0.0
  %1967 = vmatprep.subr.mxu0 0.0
  %1968 = vmatpush1.msra.mxu0 0.0
  %1969 = vmatprep.subr.mxu0 0.0
  %1970 = vmatpush1.msra.mxu0 0.0
  %1971 = vmatprep.subr.mxu0 0.0
  %1972 = vmatpush1.msra.mxu0 0.0
  %1973 = vmatprep.subr.mxu0 0.0
  %1974 = vmatpush1.msra.mxu0 0.0
  %1975 = vmatprep.subr.mxu0 0.0
  %1976 = vmatpush1.msra.mxu0 0.0
  %1977 = vmatprep.subr.mxu0 0.0
  %1978 = vmatpush1.msra.mxu0 0.0
  %1979 = vmatprep.subr.mxu0 0.0
  %1980 = vmatpush1.msra.mxu0 0.0
  %1981 = vmatprep.subr.mxu0 0.0
  %1982 = vmatpush1.msra.mxu0 %v1932
  %1983 = vmatprep.subr.mxu0 0.0
  %1984 = vmatpush1.msra.mxu0 %v1931
  %1985 = vmatprep.subr.mxu0 0.0
  %1986 = vmatpush1.msra.mxu0 %v1930
  %1987 = vmatprep.subr.mxu0 0.0
  %1988 = vmatpush1.msra.mxu0 %v1929
  %1989 = vmatprep.subr.mxu0 0.0
  %1990 = vmatpush2.msra.mxu0 0.0
  %1991 = vmatprep.subr.mxu0 0.0
  %1992 = vmatpush2.msra.mxu0 0.0
  %1993 = vmatprep.subr.mxu0 0.0
  %1994 = vmatpush2.msra.mxu0 0.0
  %1995 = vmatprep.subr.mxu0 0.0
  %1996 = vmatpush2.msra.mxu0 0.0
  %1997 = vmatprep.subr.mxu0 0.0
  %1998 = vmatpush2.msra.mxu0 0.0
  %1999 = vmatprep.subr.mxu0 0.0
  %2000 = vmatpush2.msra.mxu0 0.0
  %2001 = vmatprep.subr.mxu0 0.0
  %2002 = vmatpush2.msra.mxu0 0.0
  %2003 = vmatprep.subr.mxu0 0.0
  %2004 = vmatpush2.msra.mxu0 0.0
  %2005 = vmatprep.subr.mxu0 0.0
  %2006 = vmatpush2.msra.mxu0 0.0
  %2007 = vmatprep.subr.mxu0 0.0
  %2008 = vmatpush2.msra.mxu0 0.0
  %2009 = vmatprep.subr.mxu0 0.0
  %2010 = vmatpush2.msra.mxu0 0.0
  %2011 = vmatprep.subr.mxu0 0.0
  %2012 = vmatpush2.msra.mxu0 0.0
  %2013 = vmatprep.subr.mxu0 0.0
  %2014 = vmatpush2.msra.mxu0 0.0
  %2015 = vmatprep.subr.mxu0 0.0
  %2016 = vmatpush2.msra.mxu0 0.0
  %2017 = vmatprep.subr.mxu0 0.0
  %2018 = vmatpush2.msra.mxu0 0.0
  %2019 = vmatprep.subr.mxu0 0.0
  %2020 = vmatpush2.msra.mxu0 0.0
  %2021 = vmatprep.mubr.f32.mxu0 0.0
  %2022 = vmatmul.mubr.f32.gmra.mxu0 %v1934
  %v2023 = vpop.f32.mrf.mxu0
  %v2024 = vadd.f32 0.0, %v2023
  %v2025 = vpop.f32.mrf.mxu0
  %2026 = vmatprep.mubr.f32.mxu0 0.0
  %2027 = vmatmul.mubr.f32.gmra.mxu0 %v1937
  %v2028 = vpop.f32.mrf.mxu0
  %v2029 = vadd.f32 0.0, %v2028
  %v2030 = vpop.f32.mrf.mxu0
  %2031 = vmatprep.mubr.f32.mxu0 0.0
  %2032 = vmatmul.mubr.f32.gmra.mxu0 %v1940
  %v2033 = vpop.f32.mrf.mxu0
  %v2034 = vadd.f32 0.0, %v2033
  %v2035 = vpop.f32.mrf.mxu0
  %2036 = vmatprep.mubr.f32.mxu0 0.0
  %2037 = vmatmul.mubr.f32.gmra.mxu0 %v1943
  %v2038 = vpop.f32.mrf.mxu0
  %v2039 = vadd.f32 0.0, %v2038
  %v2040 = vpop.f32.mrf.mxu0
  %2041 = vmatprep.mubr.f32.mxu0 0.0
  %2042 = vmatmul.mubr.f32.gmra.mxu0 %v1946
  %v2043 = vpop.f32.mrf.mxu0
  %v2044 = vadd.f32 0.0, %v2043
  %v2045 = vpop.f32.mrf.mxu0
  %2046 = vmatprep.mubr.f32.mxu0 0.0
  %2047 = vmatmul.mubr.f32.gmra.mxu0 %v1949
  %v2048 = vpop.f32.mrf.mxu0
  %v2049 = vadd.f32 0.0, %v2048
  %v2050 = vpop.f32.mrf.mxu0
  %2051 = vmatprep.mubr.f32.mxu0 0.0
  %2052 = vmatmul.mubr.f32.gmra.mxu0 %v1952
  %v2053 = vpop.f32.mrf.mxu0
  %v2054 = vadd.f32 0.0, %v2053
  %v2055 = vpop.f32.mrf.mxu0
  %2056 = vmatprep.mubr.f32.mxu0 0.0
  %2057 = vmatmul.mubr.f32.gmra.mxu0 %v1955
  %v2058 = vpop.f32.mrf.mxu0
  %v2059 = vadd.f32 0.0, %v2058
  %v2060 = vpop.f32.mrf.mxu0
  %2061 = vdwg.mxu0
  %v2063 = vsel %vm50, %v909, 0
  %v2066 = vsel %vm50, %v910, 0
  %v2069 = vsel %vm50, %v911, 0
  %v2072 = vsel %vm50, %v912, 0
  %v2075 = vsel %vm50, %v913, 0
  %v2078 = vsel %vm50, %v914, 0
  %v2081 = vsel %vm50, %v915, 0
  %v2084 = vsel %vm50, %v916, 0
  %2086 = vmatprep.subr.mxu0 0.0
  %2087 = vmatpush1.msra.mxu0 0.0
  %2088 = vmatprep.subr.mxu0 0.0
  %2089 = vmatpush1.msra.mxu0 0.0
  %2090 = vmatprep.subr.mxu0 0.0
  %2091 = vmatpush1.msra.mxu0 0.0
  %2092 = vmatprep.subr.mxu0 0.0
  %2093 = vmatpush1.msra.mxu0 0.0
  %2094 = vmatprep.subr.mxu0 0.0
  %2095 = vmatpush1.msra.mxu0 0.0
  %2096 = vmatprep.subr.mxu0 0.0
  %2097 = vmatpush1.msra.mxu0 0.0
  %2098 = vmatprep.subr.mxu0 0.0
  %2099 = vmatpush1.msra.mxu0 0.0
  %2100 = vmatprep.subr.mxu0 0.0
  %2101 = vmatpush1.msra.mxu0 0.0
  %2102 = vmatprep.subr.mxu0 0.0
  %2103 = vmatpush1.msra.mxu0 0.0
  %2104 = vmatprep.subr.mxu0 0.0
  %2105 = vmatpush1.msra.mxu0 0.0
  %2106 = vmatprep.subr.mxu0 0.0
  %2107 = vmatpush1.msra.mxu0 0.0
  %2108 = vmatprep.subr.mxu0 0.0
  %2109 = vmatpush1.msra.mxu0 0.0
  %2110 = vmatprep.subr.mxu0 0.0
  %2111 = vmatpush1.msra.mxu0 %v920
  %2112 = vmatprep.subr.mxu0 0.0
  %2113 = vmatpush1.msra.mxu0 %v919
  %2114 = vmatprep.subr.mxu0 0.0
  %2115 = vmatpush1.msra.mxu0 %v918
  %2116 = vmatprep.subr.mxu0 0.0
  %2117 = vmatpush1.msra.mxu0 %v917
  %2118 = vmatprep.subr.mxu0 0.0
  %2119 = vmatpush2.msra.mxu0 0.0
  %2120 = vmatprep.subr.mxu0 0.0
  %2121 = vmatpush2.msra.mxu0 0.0
  %2122 = vmatprep.subr.mxu0 0.0
  %2123 = vmatpush2.msra.mxu0 0.0
  %2124 = vmatprep.subr.mxu0 0.0
  %2125 = vmatpush2.msra.mxu0 0.0
  %2126 = vmatprep.subr.mxu0 0.0
  %2127 = vmatpush2.msra.mxu0 0.0
  %2128 = vmatprep.subr.mxu0 0.0
  %2129 = vmatpush2.msra.mxu0 0.0
  %2130 = vmatprep.subr.mxu0 0.0
  %2131 = vmatpush2.msra.mxu0 0.0
  %2132 = vmatprep.subr.mxu0 0.0
  %2133 = vmatpush2.msra.mxu0 0.0
  %2134 = vmatprep.subr.mxu0 0.0
  %2135 = vmatpush2.msra.mxu0 0.0
  %2136 = vmatprep.subr.mxu0 0.0
  %2137 = vmatpush2.msra.mxu0 0.0
  %2138 = vmatprep.subr.mxu0 0.0
  %2139 = vmatpush2.msra.mxu0 0.0
  %2140 = vmatprep.subr.mxu0 0.0
  %2141 = vmatpush2.msra.mxu0 0.0
  %2142 = vmatprep.subr.mxu0 0.0
  %2143 = vmatpush2.msra.mxu0 0.0
  %2144 = vmatprep.subr.mxu0 0.0
  %2145 = vmatpush2.msra.mxu0 0.0
  %2146 = vmatprep.subr.mxu0 0.0
  %2147 = vmatpush2.msra.mxu0 0.0
  %2148 = vmatprep.subr.mxu0 0.0
  %2149 = vmatpush2.msra.mxu0 0.0
  %2150 = vmatprep.mubr.f32.mxu0 0.0
  %2151 = vmatmul.mubr.f32.gmra.mxu0 %v2063
  %v2152 = vpop.f32.mrf.mxu0
  %v2153 = vadd.f32 %v2024, %v2152
  %v2154 = vpop.f32.mrf.mxu0
  %2155 = vmatprep.mubr.f32.mxu0 0.0
  %2156 = vmatmul.mubr.f32.gmra.mxu0 %v2066
  %v2157 = vpop.f32.mrf.mxu0
  %v2158 = vadd.f32 %v2029, %v2157
  %v2159 = vpop.f32.mrf.mxu0
  %2160 = vmatprep.mubr.f32.mxu0 0.0
  %2161 = vmatmul.mubr.f32.gmra.mxu0 %v2069
  %v2162 = vpop.f32.mrf.mxu0
  %v2163 = vadd.f32 %v2034, %v2162
  %v2164 = vpop.f32.mrf.mxu0
  %2165 = vmatprep.mubr.f32.mxu0 0.0
  %2166 = vmatmul.mubr.f32.gmra.mxu0 %v2072
  %v2167 = vpop.f32.mrf.mxu0
  %v2168 = vadd.f32 %v2039, %v2167
  %v2169 = vpop.f32.mrf.mxu0
  %2170 = vmatprep.mubr.f32.mxu0 0.0
  %2171 = vmatmul.mubr.f32.gmra.mxu0 %v2075
  %v2172 = vpop.f32.mrf.mxu0
  %v2173 = vadd.f32 %v2044, %v2172
  %v2174 = vpop.f32.mrf.mxu0
  %2175 = vmatprep.mubr.f32.mxu0 0.0
  %2176 = vmatmul.mubr.f32.gmra.mxu0 %v2078
  %v2177 = vpop.f32.mrf.mxu0
  %v2178 = vadd.f32 %v2049, %v2177
  %v2179 = vpop.f32.mrf.mxu0
  %2180 = vmatprep.mubr.f32.mxu0 0.0
  %2181 = vmatmul.mubr.f32.gmra.mxu0 %v2081
  %v2182 = vpop.f32.mrf.mxu0
  %v2183 = vadd.f32 %v2054, %v2182
  %v2184 = vpop.f32.mrf.mxu0
  %2185 = vmatprep.mubr.f32.mxu0 0.0
  %2186 = vmatmul.mubr.f32.gmra.mxu0 %v2084
  %v2187 = vpop.f32.mrf.mxu0
  %v2188 = vadd.f32 %v2059, %v2187
  %v2189 = vpop.f32.mrf.mxu0
  %2190 = vdwg.mxu0
  %2191 = vrot.lane.b32.xlu0 %v17, 64
  %v2192 = vpop.permute.xlu0 %2191
  %2193 = vrot.lane.b32.xlu0 %v18, 64
  %v2194 = vpop.permute.xlu0 %2193
  %2195 = vrot.lane.b32.xlu0 %v19, 64
  %v2196 = vpop.permute.xlu0 %2195
  %2197 = vrot.lane.b32.xlu0 %v20, 64
  %v2198 = vpop.permute.xlu0 %2197
  %2199 = vrot.lane.b32.xlu0 %v21, 64
  %v2200 = vpop.permute.xlu0 %2199
  %2201 = vrot.lane.b32.xlu0 %v22, 64
  %v2202 = vpop.permute.xlu0 %2201
  %2203 = vrot.lane.b32.xlu0 %v23, 64
  %v2204 = vpop.permute.xlu0 %2203
  %2205 = vrot.lane.b32.xlu0 %v24, 64
  %v2206 = vpop.permute.xlu0 %2205
  %v2215 = vsel %vm50, %v2192, 0.0
  %2216 = vadd.xlane.f32.xlu0 %v2215
  %v2217 = vpop.xlane.xlu0 %2216
  %v2218 = vsel %vm50, %v2194, 0.0
  %2219 = vadd.xlane.f32.xlu0 %v2218
  %v2220 = vpop.xlane.xlu0 %2219
  %v2221 = vsel %vm50, %v2196, 0.0
  %2222 = vadd.xlane.f32.xlu0 %v2221
  %v2223 = vpop.xlane.xlu0 %2222
  %v2224 = vsel %vm50, %v2198, 0.0
  %2225 = vadd.xlane.f32.xlu0 %v2224
  %v2226 = vpop.xlane.xlu0 %2225
  %v2227 = vsel %vm50, %v2200, 0.0
  %2228 = vadd.xlane.f32.xlu0 %v2227
  %v2229 = vpop.xlane.xlu0 %2228
  %v2230 = vsel %vm50, %v2202, 0.0
  %2231 = vadd.xlane.f32.xlu0 %v2230
  %v2232 = vpop.xlane.xlu0 %2231
  %v2233 = vsel %vm50, %v2204, 0.0
  %2234 = vadd.xlane.f32.xlu0 %v2233
  %v2235 = vpop.xlane.xlu0 %2234
  %v2236 = vsel %vm50, %v2206, 0.0
  %2237 = vadd.xlane.f32.xlu0 %v2236
  %v2238 = vpop.xlane.xlu0 %2237
  %2239 = vrot.lane.b32.xlu0 %v25, 112
  %v2240 = vpop.permute.xlu0 %2239
  %2241 = vrot.lane.b32.xlu0 %v26, 112
  %v2242 = vpop.permute.xlu0 %2241
  %2243 = vrot.lane.b32.xlu0 %v27, 112
  %v2244 = vpop.permute.xlu0 %2243
  %2245 = vrot.lane.b32.xlu0 %v28, 112
  %v2246 = vpop.permute.xlu0 %2245
  %2247 = vrot.lane.b32.xlu0 %v29, 112
  %v2248 = vpop.permute.xlu0 %2247
  %2249 = vrot.lane.b32.xlu0 %v30, 112
  %v2250 = vpop.permute.xlu0 %2249
  %2251 = vrot.lane.b32.xlu0 %v31, 112
  %v2252 = vpop.permute.xlu0 %2251
  %2253 = vrot.lane.b32.xlu0 %v32, 112
  %v2254 = vpop.permute.xlu0 %2253
  %v2263 = vsel %vm75, %v2240, 0.0
  %2264 = vadd.xlane.f32.xlu0 %v2263
  %v2265 = vpop.xlane.xlu0 %2264
  %v2266 = vsel %vm75, %v2242, 0.0
  %2267 = vadd.xlane.f32.xlu0 %v2266
  %v2268 = vpop.xlane.xlu0 %2267
  %v2269 = vsel %vm75, %v2244, 0.0
  %2270 = vadd.xlane.f32.xlu0 %v2269
  %v2271 = vpop.xlane.xlu0 %2270
  %v2272 = vsel %vm75, %v2246, 0.0
  %2273 = vadd.xlane.f32.xlu0 %v2272
  %v2274 = vpop.xlane.xlu0 %2273
  %v2275 = vsel %vm75, %v2248, 0.0
  %2276 = vadd.xlane.f32.xlu0 %v2275
  %v2277 = vpop.xlane.xlu0 %2276
  %v2278 = vsel %vm75, %v2250, 0.0
  %2279 = vadd.xlane.f32.xlu0 %v2278
  %v2280 = vpop.xlane.xlu0 %2279
  %v2281 = vsel %vm75, %v2252, 0.0
  %2282 = vadd.xlane.f32.xlu0 %v2281
  %v2283 = vpop.xlane.xlu0 %2282
  %v2284 = vsel %vm75, %v2254, 0.0
  %2285 = vadd.xlane.f32.xlu0 %v2284
  %v2286 = vpop.xlane.xlu0 %2285
  %v2287 = vadd.f32 %v2217, %v2265
  %v2288 = vadd.f32 %v2220, %v2268
  %v2289 = vadd.f32 %v2223, %v2271
  %v2290 = vadd.f32 %v2226, %v2274
  %v2291 = vadd.f32 %v2229, %v2277
  %v2292 = vadd.f32 %v2232, %v2280
  %v2293 = vadd.f32 %v2235, %v2283
  %v2294 = vadd.f32 %v2238, %v2286
  %v2295 = vmul.f32 %v2287, 0.02631579
  %v2296 = vmul.f32 %v2288, 0.02631579
  %v2297 = vmul.f32 %v2289, 0.02631579
  %v2298 = vmul.f32 %v2290, 0.02631579
  %v2299 = vmul.f32 %v2291, 0.02631579
  %v2300 = vmul.f32 %v2292, 0.02631579
  %v2301 = vmul.f32 %v2293, 0.02631579
  %v2302 = vmul.f32 %v2294, 0.02631579
  %v2303 = vsub.f32 %v17, %v2295
  %v2304 = vsub.f32 %v18, %v2296
  %v2305 = vsub.f32 %v19, %v2297
  %v2306 = vsub.f32 %v20, %v2298
  %v2307 = vsub.f32 %v21, %v2299
  %v2308 = vsub.f32 %v22, %v2300
  %v2309 = vsub.f32 %v23, %v2301
  %v2310 = vsub.f32 %v24, %v2302
  %v2311 = vsub.f32 %v25, %v2295
  %v2312 = vsub.f32 %v26, %v2296
  %v2313 = vsub.f32 %v27, %v2297
  %v2314 = vsub.f32 %v28, %v2298
  %v2315 = vsub.f32 %v29, %v2299
  %v2316 = vsub.f32 %v30, %v2300
  %v2317 = vsub.f32 %v31, %v2301
  %v2318 = vsub.f32 %v32, %v2302
  %2319 = vrot.lane.b32.xlu0 %v49, 16
  %v2320 = vpop.permute.xlu0 %2319
  %v2322 = vmul.f32 %v2311, %v2320
  %v2323 = vmul.f32 %v2312, %v2320
  %v2324 = vmul.f32 %v2313, %v2320
  %v2325 = vmul.f32 %v2314, %v2320
  %v2326 = vmul.f32 %v2315, %v2320
  %v2327 = vmul.f32 %v2316, %v2320
  %v2328 = vmul.f32 %v2317, %v2320
  %v2329 = vmul.f32 %v2318, %v2320
  %v2330 = vmul.f32 %v2303, %v2303
  %v2331 = vmul.f32 %v2304, %v2304
  %v2332 = vmul.f32 %v2305, %v2305
  %v2333 = vmul.f32 %v2306, %v2306
  %v2334 = vmul.f32 %v2307, %v2307
  %v2335 = vmul.f32 %v2308, %v2308
  %v2336 = vmul.f32 %v2309, %v2309
  %v2337 = vmul.f32 %v2310, %v2310
  %2346 = vrot.lane.b32.xlu0 %v2330, 64
  %v2347 = vpop.permute.xlu0 %2346
  %2348 = vrot.lane.b32.xlu0 %v2331, 64
  %v2349 = vpop.permute.xlu0 %2348
  %2350 = vrot.lane.b32.xlu0 %v2332, 64
  %v2351 = vpop.permute.xlu0 %2350
  %2352 = vrot.lane.b32.xlu0 %v2333, 64
  %v2353 = vpop.permute.xlu0 %2352
  %2354 = vrot.lane.b32.xlu0 %v2334, 64
  %v2355 = vpop.permute.xlu0 %2354
  %2356 = vrot.lane.b32.xlu0 %v2335, 64
  %v2357 = vpop.permute.xlu0 %2356
  %2358 = vrot.lane.b32.xlu0 %v2336, 64
  %v2359 = vpop.permute.xlu0 %2358
  %2360 = vrot.lane.b32.xlu0 %v2337, 64
  %v2361 = vpop.permute.xlu0 %2360
  %v2370 = vsel %vm50, %v2347, 0.0
  %2371 = vadd.xlane.f32.xlu0 %v2370
  %v2372 = vpop.xlane.xlu0 %2371
  %v2373 = vsel %vm50, %v2349, 0.0
  %2374 = vadd.xlane.f32.xlu0 %v2373
  %v2375 = vpop.xlane.xlu0 %2374
  %v2376 = vsel %vm50, %v2351, 0.0
  %2377 = vadd.xlane.f32.xlu0 %v2376
  %v2378 = vpop.xlane.xlu0 %2377
  %v2379 = vsel %vm50, %v2353, 0.0
  %2380 = vadd.xlane.f32.xlu0 %v2379
  %v2381 = vpop.xlane.xlu0 %2380
  %v2382 = vsel %vm50, %v2355, 0.0
  %2383 = vadd.xlane.f32.xlu0 %v2382
  %v2384 = vpop.xlane.xlu0 %2383
  %v2385 = vsel %vm50, %v2357, 0.0
  %2386 = vadd.xlane.f32.xlu0 %v2385
  %v2387 = vpop.xlane.xlu0 %2386
  %v2388 = vsel %vm50, %v2359, 0.0
  %2389 = vadd.xlane.f32.xlu0 %v2388
  %v2390 = vpop.xlane.xlu0 %2389
  %v2391 = vsel %vm50, %v2361, 0.0
  %2392 = vadd.xlane.f32.xlu0 %v2391
  %v2393 = vpop.xlane.xlu0 %2392
  %v2394 = vmul.f32 %v2322, %v2322
  %v2395 = vmul.f32 %v2323, %v2323
  %v2396 = vmul.f32 %v2324, %v2324
  %v2397 = vmul.f32 %v2325, %v2325
  %v2398 = vmul.f32 %v2326, %v2326
  %v2399 = vmul.f32 %v2327, %v2327
  %v2400 = vmul.f32 %v2328, %v2328
  %v2401 = vmul.f32 %v2329, %v2329
  %2410 = vrot.lane.b32.xlu0 %v2394, 112
  %v2411 = vpop.permute.xlu0 %2410
  %2412 = vrot.lane.b32.xlu0 %v2395, 112
  %v2413 = vpop.permute.xlu0 %2412
  %2414 = vrot.lane.b32.xlu0 %v2396, 112
  %v2415 = vpop.permute.xlu0 %2414
  %2416 = vrot.lane.b32.xlu0 %v2397, 112
  %v2417 = vpop.permute.xlu0 %2416
  %2418 = vrot.lane.b32.xlu0 %v2398, 112
  %v2419 = vpop.permute.xlu0 %2418
  %2420 = vrot.lane.b32.xlu0 %v2399, 112
  %v2421 = vpop.permute.xlu0 %2420
  %2422 = vrot.lane.b32.xlu0 %v2400, 112
  %v2423 = vpop.permute.xlu0 %2422
  %2424 = vrot.lane.b32.xlu0 %v2401, 112
  %v2425 = vpop.permute.xlu0 %2424
  %v2434 = vsel %vm75, %v2411, 0.0
  %2435 = vadd.xlane.f32.xlu0 %v2434
  %v2436 = vpop.xlane.xlu0 %2435
  %v2437 = vsel %vm75, %v2413, 0.0
  %2438 = vadd.xlane.f32.xlu0 %v2437
  %v2439 = vpop.xlane.xlu0 %2438
  %v2440 = vsel %vm75, %v2415, 0.0
  %2441 = vadd.xlane.f32.xlu0 %v2440
  %v2442 = vpop.xlane.xlu0 %2441
  %v2443 = vsel %vm75, %v2417, 0.0
  %2444 = vadd.xlane.f32.xlu0 %v2443
  %v2445 = vpop.xlane.xlu0 %2444
  %v2446 = vsel %vm75, %v2419, 0.0
  %2447 = vadd.xlane.f32.xlu0 %v2446
  %v2448 = vpop.xlane.xlu0 %2447
  %v2449 = vsel %vm75, %v2421, 0.0
  %2450 = vadd.xlane.f32.xlu0 %v2449
  %v2451 = vpop.xlane.xlu0 %2450
  %v2452 = vsel %vm75, %v2423, 0.0
  %2453 = vadd.xlane.f32.xlu0 %v2452
  %v2454 = vpop.xlane.xlu0 %2453
  %v2455 = vsel %vm75, %v2425, 0.0
  %2456 = vadd.xlane.f32.xlu0 %v2455
  %v2457 = vpop.xlane.xlu0 %2456
  %v2458 = vadd.f32 %v2372, %v2436
  %v2459 = vadd.f32 %v2375, %v2439
  %v2460 = vadd.f32 %v2378, %v2442
  %v2461 = vadd.f32 %v2381, %v2445
  %v2462 = vadd.f32 %v2384, %v2448
  %v2463 = vadd.f32 %v2387, %v2451
  %v2464 = vadd.f32 %v2390, %v2454
  %v2465 = vadd.f32 %v2393, %v2457
  %v2466 = vmul.f32 %v2458, 0.02631579
  %v2467 = vmul.f32 %v2459, 0.02631579
  %v2468 = vmul.f32 %v2460, 0.02631579
  %v2469 = vmul.f32 %v2461, 0.02631579
  %v2470 = vmul.f32 %v2462, 0.02631579
  %v2471 = vmul.f32 %v2463, 0.02631579
  %v2472 = vmul.f32 %v2464, 0.02631579
  %v2473 = vmul.f32 %v2465, 0.02631579
  %v2474 = vadd.f32 %v2466, 1e-06
  %v2475 = vadd.f32 %v2467, 1e-06
  %v2476 = vadd.f32 %v2468, 1e-06
  %v2477 = vadd.f32 %v2469, 1e-06
  %v2478 = vadd.f32 %v2470, 1e-06
  %v2479 = vadd.f32 %v2471, 1e-06
  %v2480 = vadd.f32 %v2472, 1e-06
  %v2481 = vadd.f32 %v2473, 1e-06
  %v2482 = vrsqrt.pop %v2474
  %v2483 = vrsqrt.pop %v2475
  %v2484 = vrsqrt.pop %v2476
  %v2485 = vrsqrt.pop %v2477
  %v2486 = vrsqrt.pop %v2478
  %v2487 = vrsqrt.pop %v2479
  %v2488 = vrsqrt.pop %v2480
  %v2489 = vrsqrt.pop %v2481
  %v2490 = vmul.f32 %v2303, %v2482
  %v2491 = vmul.f32 %v2304, %v2483
  %v2492 = vmul.f32 %v2305, %v2484
  %v2493 = vmul.f32 %v2306, %v2485
  %v2494 = vmul.f32 %v2307, %v2486
  %v2495 = vmul.f32 %v2308, %v2487
  %v2496 = vmul.f32 %v2309, %v2488
  %v2497 = vmul.f32 %v2310, %v2489
  %v2498 = vmul.f32 %v2322, %v2482
  %v2499 = vmul.f32 %v2323, %v2483
  %v2500 = vmul.f32 %v2324, %v2484
  %v2501 = vmul.f32 %v2325, %v2485
  %v2502 = vmul.f32 %v2326, %v2486
  %v2503 = vmul.f32 %v2327, %v2487
  %v2504 = vmul.f32 %v2328, %v2488
  %v2505 = vmul.f32 %v2329, %v2489
  %2514 = vrot.lane.b32.xlu0 %v2498, 112
  %v2515 = vpop.permute.xlu0 %2514
  %2516 = vrot.lane.b32.xlu0 %v2499, 112
  %v2517 = vpop.permute.xlu0 %2516
  %2518 = vrot.lane.b32.xlu0 %v2500, 112
  %v2519 = vpop.permute.xlu0 %2518
  %2520 = vrot.lane.b32.xlu0 %v2501, 112
  %v2521 = vpop.permute.xlu0 %2520
  %2522 = vrot.lane.b32.xlu0 %v2502, 112
  %v2523 = vpop.permute.xlu0 %2522
  %2524 = vrot.lane.b32.xlu0 %v2503, 112
  %v2525 = vpop.permute.xlu0 %2524
  %2526 = vrot.lane.b32.xlu0 %v2504, 112
  %v2527 = vpop.permute.xlu0 %2526
  %2528 = vrot.lane.b32.xlu0 %v2505, 112
  %v2529 = vpop.permute.xlu0 %2528
  %v2530 = vsel %vm75, %v2515, 0
  %v2532 = vsel %vm75, %v2517, 0
  %v2534 = vsel %vm75, %v2519, 0
  %v2536 = vsel %vm75, %v2521, 0
  %v2538 = vsel %vm75, %v2523, 0
  %v2540 = vsel %vm75, %v2525, 0
  %v2542 = vsel %vm75, %v2527, 0
  %v2544 = vsel %vm75, %v2529, 0
  %2546 = vmatprep.subr.mxu0 0.0
  %2547 = vmatpush1.msra.mxu0 0.0
  %2548 = vmatprep.subr.mxu0 0.0
  %2549 = vmatpush1.msra.mxu0 0.0
  %2550 = vmatprep.subr.mxu0 0.0
  %2551 = vmatpush1.msra.mxu0 0.0
  %2552 = vmatprep.subr.mxu0 0.0
  %2553 = vmatpush1.msra.mxu0 0.0
  %2554 = vmatprep.subr.mxu0 0.0
  %2555 = vmatpush1.msra.mxu0 0.0
  %2556 = vmatprep.subr.mxu0 0.0
  %2557 = vmatpush1.msra.mxu0 0.0
  %2558 = vmatprep.subr.mxu0 0.0
  %2559 = vmatpush1.msra.mxu0 0.0
  %2560 = vmatprep.subr.mxu0 0.0
  %2561 = vmatpush1.msra.mxu0 0.0
  %2562 = vmatprep.subr.mxu0 0.0
  %2563 = vmatpush1.msra.mxu0 0.0
  %2564 = vmatprep.subr.mxu0 0.0
  %2565 = vmatpush1.msra.mxu0 0.0
  %2566 = vmatprep.subr.mxu0 0.0
  %2567 = vmatpush1.msra.mxu0 0.0
  %2568 = vmatprep.subr.mxu0 0.0
  %2569 = vmatpush1.msra.mxu0 0.0
  %2570 = vmatprep.subr.mxu0 0.0
  %2571 = vmatpush1.msra.mxu0 0.0
  %2572 = vmatprep.subr.mxu0 0.0
  %2573 = vmatpush1.msra.mxu0 0.0
  %2574 = vmatprep.subr.mxu0 0.0
  %2575 = vmatpush1.msra.mxu0 0.0
  %2576 = vmatprep.subr.mxu0 0.0
  %2577 = vmatpush1.msra.mxu0 %v37
  %2578 = vmatprep.subr.mxu0 0.0
  %2579 = vmatpush2.msra.mxu0 0.0
  %2580 = vmatprep.subr.mxu0 0.0
  %2581 = vmatpush2.msra.mxu0 0.0
  %2582 = vmatprep.subr.mxu0 0.0
  %2583 = vmatpush2.msra.mxu0 0.0
  %2584 = vmatprep.subr.mxu0 0.0
  %2585 = vmatpush2.msra.mxu0 0.0
  %2586 = vmatprep.subr.mxu0 0.0
  %2587 = vmatpush2.msra.mxu0 0.0
  %2588 = vmatprep.subr.mxu0 0.0
  %2589 = vmatpush2.msra.mxu0 0.0
  %2590 = vmatprep.subr.mxu0 0.0
  %2591 = vmatpush2.msra.mxu0 0.0
  %2592 = vmatprep.subr.mxu0 0.0
  %2593 = vmatpush2.msra.mxu0 0.0
  %2594 = vmatprep.subr.mxu0 0.0
  %2595 = vmatpush2.msra.mxu0 0.0
  %2596 = vmatprep.subr.mxu0 0.0
  %2597 = vmatpush2.msra.mxu0 0.0
  %2598 = vmatprep.subr.mxu0 0.0
  %2599 = vmatpush2.msra.mxu0 0.0
  %2600 = vmatprep.subr.mxu0 0.0
  %2601 = vmatpush2.msra.mxu0 0.0
  %2602 = vmatprep.subr.mxu0 0.0
  %2603 = vmatpush2.msra.mxu0 0.0
  %2604 = vmatprep.subr.mxu0 0.0
  %2605 = vmatpush2.msra.mxu0 0.0
  %2606 = vmatprep.subr.mxu0 0.0
  %2607 = vmatpush2.msra.mxu0 0.0
  %2608 = vmatprep.subr.mxu0 0.0
  %2609 = vmatpush2.msra.mxu0 0.0
  %2610 = vmatprep.mubr.f32.mxu0 0.0
  %2611 = vmatmul.mubr.f32.gmra.mxu0 %v2530
  %v2612 = vpop.f32.mrf.mxu0
  %v2613 = vadd.f32 0.0, %v2612
  %v2614 = vpop.f32.mrf.mxu0
  %2615 = vmatprep.mubr.f32.mxu0 0.0
  %2616 = vmatmul.mubr.f32.gmra.mxu0 %v2532
  %v2617 = vpop.f32.mrf.mxu0
  %v2618 = vadd.f32 0.0, %v2617
  %v2619 = vpop.f32.mrf.mxu0
  %2620 = vmatprep.mubr.f32.mxu0 0.0
  %2621 = vmatmul.mubr.f32.gmra.mxu0 %v2534
  %v2622 = vpop.f32.mrf.mxu0
  %v2623 = vadd.f32 0.0, %v2622
  %v2624 = vpop.f32.mrf.mxu0
  %2625 = vmatprep.mubr.f32.mxu0 0.0
  %2626 = vmatmul.mubr.f32.gmra.mxu0 %v2536
  %v2627 = vpop.f32.mrf.mxu0
  %v2628 = vadd.f32 0.0, %v2627
  %v2629 = vpop.f32.mrf.mxu0
  %2630 = vmatprep.mubr.f32.mxu0 0.0
  %2631 = vmatmul.mubr.f32.gmra.mxu0 %v2538
  %v2632 = vpop.f32.mrf.mxu0
  %v2633 = vadd.f32 0.0, %v2632
  %v2634 = vpop.f32.mrf.mxu0
  %2635 = vmatprep.mubr.f32.mxu0 0.0
  %2636 = vmatmul.mubr.f32.gmra.mxu0 %v2540
  %v2637 = vpop.f32.mrf.mxu0
  %v2638 = vadd.f32 0.0, %v2637
  %v2639 = vpop.f32.mrf.mxu0
  %2640 = vmatprep.mubr.f32.mxu0 0.0
  %2641 = vmatmul.mubr.f32.gmra.mxu0 %v2542
  %v2642 = vpop.f32.mrf.mxu0
  %v2643 = vadd.f32 0.0, %v2642
  %v2644 = vpop.f32.mrf.mxu0
  %2645 = vmatprep.mubr.f32.mxu0 0.0
  %2646 = vmatmul.mubr.f32.gmra.mxu0 %v2544
  %v2647 = vpop.f32.mrf.mxu0
  %v2648 = vadd.f32 0.0, %v2647
  %v2649 = vpop.f32.mrf.mxu0
  %2650 = vdwg.mxu0
  %2659 = vrot.lane.b32.xlu0 %v2490, 64
  %v2660 = vpop.permute.xlu0 %2659
  %2661 = vrot.lane.b32.xlu0 %v2491, 64
  %v2662 = vpop.permute.xlu0 %2661
  %2663 = vrot.lane.b32.xlu0 %v2492, 64
  %v2664 = vpop.permute.xlu0 %2663
  %2665 = vrot.lane.b32.xlu0 %v2493, 64
  %v2666 = vpop.permute.xlu0 %2665
  %2667 = vrot.lane.b32.xlu0 %v2494, 64
  %v2668 = vpop.permute.xlu0 %2667
  %2669 = vrot.lane.b32.xlu0 %v2495, 64
  %v2670 = vpop.permute.xlu0 %2669
  %2671 = vrot.lane.b32.xlu0 %v2496, 64
  %v2672 = vpop.permute.xlu0 %2671
  %2673 = vrot.lane.b32.xlu0 %v2497, 64
  %v2674 = vpop.permute.xlu0 %2673
  %v2675 = vsel %vm50, %v2660, 0
  %v2677 = vsel %vm50, %v2662, 0
  %v2679 = vsel %vm50, %v2664, 0
  %v2681 = vsel %vm50, %v2666, 0
  %v2683 = vsel %vm50, %v2668, 0
  %v2685 = vsel %vm50, %v2670, 0
  %v2687 = vsel %vm50, %v2672, 0
  %v2689 = vsel %vm50, %v2674, 0
  %2691 = vmatprep.subr.mxu0 0.0
  %2692 = vmatpush1.msra.mxu0 0.0
  %2693 = vmatprep.subr.mxu0 0.0
  %2694 = vmatpush1.msra.mxu0 0.0
  %2695 = vmatprep.subr.mxu0 0.0
  %2696 = vmatpush1.msra.mxu0 0.0
  %2697 = vmatprep.subr.mxu0 0.0
  %2698 = vmatpush1.msra.mxu0 0.0
  %2699 = vmatprep.subr.mxu0 0.0
  %2700 = vmatpush1.msra.mxu0 0.0
  %2701 = vmatprep.subr.mxu0 0.0
  %2702 = vmatpush1.msra.mxu0 0.0
  %2703 = vmatprep.subr.mxu0 0.0
  %2704 = vmatpush1.msra.mxu0 0.0
  %2705 = vmatprep.subr.mxu0 0.0
  %2706 = vmatpush1.msra.mxu0 0.0
  %2707 = vmatprep.subr.mxu0 0.0
  %2708 = vmatpush1.msra.mxu0 0.0
  %2709 = vmatprep.subr.mxu0 0.0
  %2710 = vmatpush1.msra.mxu0 0.0
  %2711 = vmatprep.subr.mxu0 0.0
  %2712 = vmatpush1.msra.mxu0 0.0
  %2713 = vmatprep.subr.mxu0 0.0
  %2714 = vmatpush1.msra.mxu0 0.0
  %2715 = vmatprep.subr.mxu0 0.0
  %2716 = vmatpush1.msra.mxu0 %v36
  %2717 = vmatprep.subr.mxu0 0.0
  %2718 = vmatpush1.msra.mxu0 %v35
  %2719 = vmatprep.subr.mxu0 0.0
  %2720 = vmatpush1.msra.mxu0 %v34
  %2721 = vmatprep.subr.mxu0 0.0
  %2722 = vmatpush1.msra.mxu0 %v33
  %2723 = vmatprep.subr.mxu0 0.0
  %2724 = vmatpush2.msra.mxu0 0.0
  %2725 = vmatprep.subr.mxu0 0.0
  %2726 = vmatpush2.msra.mxu0 0.0
  %2727 = vmatprep.subr.mxu0 0.0
  %2728 = vmatpush2.msra.mxu0 0.0
  %2729 = vmatprep.subr.mxu0 0.0
  %2730 = vmatpush2.msra.mxu0 0.0
  %2731 = vmatprep.subr.mxu0 0.0
  %2732 = vmatpush2.msra.mxu0 0.0
  %2733 = vmatprep.subr.mxu0 0.0
  %2734 = vmatpush2.msra.mxu0 0.0
  %2735 = vmatprep.subr.mxu0 0.0
  %2736 = vmatpush2.msra.mxu0 0.0
  %2737 = vmatprep.subr.mxu0 0.0
  %2738 = vmatpush2.msra.mxu0 0.0
  %2739 = vmatprep.subr.mxu0 0.0
  %2740 = vmatpush2.msra.mxu0 0.0
  %2741 = vmatprep.subr.mxu0 0.0
  %2742 = vmatpush2.msra.mxu0 0.0
  %2743 = vmatprep.subr.mxu0 0.0
  %2744 = vmatpush2.msra.mxu0 0.0
  %2745 = vmatprep.subr.mxu0 0.0
  %2746 = vmatpush2.msra.mxu0 0.0
  %2747 = vmatprep.subr.mxu0 0.0
  %2748 = vmatpush2.msra.mxu0 0.0
  %2749 = vmatprep.subr.mxu0 0.0
  %2750 = vmatpush2.msra.mxu0 0.0
  %2751 = vmatprep.subr.mxu0 0.0
  %2752 = vmatpush2.msra.mxu0 0.0
  %2753 = vmatprep.subr.mxu0 0.0
  %2754 = vmatpush2.msra.mxu0 0.0
  %2755 = vmatprep.mubr.f32.mxu0 0.0
  %2756 = vmatmul.mubr.f32.gmra.mxu0 %v2675
  %v2757 = vpop.f32.mrf.mxu0
  %v2758 = vadd.f32 %v2613, %v2757
  %v2759 = vpop.f32.mrf.mxu0
  %2760 = vmatprep.mubr.f32.mxu0 0.0
  %2761 = vmatmul.mubr.f32.gmra.mxu0 %v2677
  %v2762 = vpop.f32.mrf.mxu0
  %v2763 = vadd.f32 %v2618, %v2762
  %v2764 = vpop.f32.mrf.mxu0
  %2765 = vmatprep.mubr.f32.mxu0 0.0
  %2766 = vmatmul.mubr.f32.gmra.mxu0 %v2679
  %v2767 = vpop.f32.mrf.mxu0
  %v2768 = vadd.f32 %v2623, %v2767
  %v2769 = vpop.f32.mrf.mxu0
  %2770 = vmatprep.mubr.f32.mxu0 0.0
  %2771 = vmatmul.mubr.f32.gmra.mxu0 %v2681
  %v2772 = vpop.f32.mrf.mxu0
  %v2773 = vadd.f32 %v2628, %v2772
  %v2774 = vpop.f32.mrf.mxu0
  %2775 = vmatprep.mubr.f32.mxu0 0.0
  %2776 = vmatmul.mubr.f32.gmra.mxu0 %v2683
  %v2777 = vpop.f32.mrf.mxu0
  %v2778 = vadd.f32 %v2633, %v2777
  %v2779 = vpop.f32.mrf.mxu0
  %2780 = vmatprep.mubr.f32.mxu0 0.0
  %2781 = vmatmul.mubr.f32.gmra.mxu0 %v2685
  %v2782 = vpop.f32.mrf.mxu0
  %v2783 = vadd.f32 %v2638, %v2782
  %v2784 = vpop.f32.mrf.mxu0
  %2785 = vmatprep.mubr.f32.mxu0 0.0
  %2786 = vmatmul.mubr.f32.gmra.mxu0 %v2687
  %v2787 = vpop.f32.mrf.mxu0
  %v2788 = vadd.f32 %v2643, %v2787
  %v2789 = vpop.f32.mrf.mxu0
  %2790 = vmatprep.mubr.f32.mxu0 0.0
  %2791 = vmatmul.mubr.f32.gmra.mxu0 %v2689
  %v2792 = vpop.f32.mrf.mxu0
  %v2793 = vadd.f32 %v2648, %v2792
  %v2794 = vpop.f32.mrf.mxu0
  %2795 = vdwg.mxu0
  %v2796 = vadd.f32 %v2758, %v513
  %v2797 = vadd.f32 %v2763, %v513
  %v2798 = vadd.f32 %v2768, %v513
  %v2799 = vadd.f32 %v2773, %v513
  %v2800 = vadd.f32 %v2778, %v513
  %v2801 = vadd.f32 %v2783, %v513
  %v2802 = vadd.f32 %v2788, %v513
  %v2803 = vadd.f32 %v2793, %v513
  %v2804 = vmax.f32 %v2796, 0.0
  %v2805 = vmax.f32 %v2797, 0.0
  %v2806 = vmax.f32 %v2798, 0.0
  %v2807 = vmax.f32 %v2799, 0.0
  %v2808 = vmax.f32 %v2800, 0.0
  %v2809 = vmax.f32 %v2801, 0.0
  %v2810 = vmax.f32 %v2802, 0.0
  %v2811 = vmax.f32 %v2803, 0.0
  %v2813 = vsel %vm534, %v2804, 0
  %v2816 = vsel %vm534, %v2805, 0
  %v2819 = vsel %vm534, %v2806, 0
  %v2822 = vsel %vm534, %v2807, 0
  %v2825 = vsel %vm534, %v2808, 0
  %v2828 = vsel %vm534, %v2809, 0
  %v2831 = vsel %vm534, %v2810, 0
  %v2834 = vsel %vm534, %v2811, 0
  %2836 = vmatprep.subr.mxu0 0.0
  %2837 = vmatpush1.msra.mxu0 0.0
  %2838 = vmatprep.subr.mxu0 0.0
  %2839 = vmatpush1.msra.mxu0 0.0
  %2840 = vmatprep.subr.mxu0 0.0
  %2841 = vmatpush1.msra.mxu0 0.0
  %2842 = vmatprep.subr.mxu0 0.0
  %2843 = vmatpush1.msra.mxu0 0.0
  %2844 = vmatprep.subr.mxu0 0.0
  %2845 = vmatpush1.msra.mxu0 0.0
  %2846 = vmatprep.subr.mxu0 0.0
  %2847 = vmatpush1.msra.mxu0 0.0
  %2848 = vmatprep.subr.mxu0 0.0
  %2849 = vmatpush1.msra.mxu0 0.0
  %2850 = vmatprep.subr.mxu0 0.0
  %2851 = vmatpush1.msra.mxu0 0.0
  %2852 = vmatprep.subr.mxu0 0.0
  %2853 = vmatpush1.msra.mxu0 0.0
  %2854 = vmatprep.subr.mxu0 0.0
  %2855 = vmatpush1.msra.mxu0 0.0
  %2856 = vmatprep.subr.mxu0 0.0
  %2857 = vmatpush1.msra.mxu0 0.0
  %2858 = vmatprep.subr.mxu0 0.0
  %2859 = vmatpush1.msra.mxu0 0.0
  %2860 = vmatprep.subr.mxu0 0.0
  %2861 = vmatpush1.msra.mxu0 0.0
  %2862 = vmatprep.subr.mxu0 0.0
  %2863 = vmatpush1.msra.mxu0 %v561
  %2864 = vmatprep.subr.mxu0 0.0
  %2865 = vmatpush1.msra.mxu0 %v39
  %2866 = vmatprep.subr.mxu0 0.0
  %2867 = vmatpush1.msra.mxu0 %v38
  %2868 = vmatprep.subr.mxu0 0.0
  %2869 = vmatpush2.msra.mxu0 0.0
  %2870 = vmatprep.subr.mxu0 0.0
  %2871 = vmatpush2.msra.mxu0 0.0
  %2872 = vmatprep.subr.mxu0 0.0
  %2873 = vmatpush2.msra.mxu0 0.0
  %2874 = vmatprep.subr.mxu0 0.0
  %2875 = vmatpush2.msra.mxu0 0.0
  %2876 = vmatprep.subr.mxu0 0.0
  %2877 = vmatpush2.msra.mxu0 0.0
  %2878 = vmatprep.subr.mxu0 0.0
  %2879 = vmatpush2.msra.mxu0 0.0
  %2880 = vmatprep.subr.mxu0 0.0
  %2881 = vmatpush2.msra.mxu0 0.0
  %2882 = vmatprep.subr.mxu0 0.0
  %2883 = vmatpush2.msra.mxu0 0.0
  %2884 = vmatprep.subr.mxu0 0.0
  %2885 = vmatpush2.msra.mxu0 0.0
  %2886 = vmatprep.subr.mxu0 0.0
  %2887 = vmatpush2.msra.mxu0 0.0
  %2888 = vmatprep.subr.mxu0 0.0
  %2889 = vmatpush2.msra.mxu0 0.0
  %2890 = vmatprep.subr.mxu0 0.0
  %2891 = vmatpush2.msra.mxu0 0.0
  %2892 = vmatprep.subr.mxu0 0.0
  %2893 = vmatpush2.msra.mxu0 0.0
  %2894 = vmatprep.subr.mxu0 0.0
  %2895 = vmatpush2.msra.mxu0 0.0
  %2896 = vmatprep.subr.mxu0 0.0
  %2897 = vmatpush2.msra.mxu0 0.0
  %2898 = vmatprep.subr.mxu0 0.0
  %2899 = vmatpush2.msra.mxu0 0.0
  %2900 = vmatprep.mubr.f32.mxu0 0.0
  %2901 = vmatmul.mubr.f32.gmra.mxu0 %v2813
  %v2902 = vpop.f32.mrf.mxu0
  %v2903 = vadd.f32 %v533, %v2902
  %v2904 = vpop.f32.mrf.mxu0
  %2905 = vmatprep.mubr.f32.mxu0 0.0
  %2906 = vmatmul.mubr.f32.gmra.mxu0 %v2816
  %v2907 = vpop.f32.mrf.mxu0
  %v2908 = vadd.f32 %v533, %v2907
  %v2909 = vpop.f32.mrf.mxu0
  %2910 = vmatprep.mubr.f32.mxu0 0.0
  %2911 = vmatmul.mubr.f32.gmra.mxu0 %v2819
  %v2912 = vpop.f32.mrf.mxu0
  %v2913 = vadd.f32 %v533, %v2912
  %v2914 = vpop.f32.mrf.mxu0
  %2915 = vmatprep.mubr.f32.mxu0 0.0
  %2916 = vmatmul.mubr.f32.gmra.mxu0 %v2822
  %v2917 = vpop.f32.mrf.mxu0
  %v2918 = vadd.f32 %v533, %v2917
  %v2919 = vpop.f32.mrf.mxu0
  %2920 = vmatprep.mubr.f32.mxu0 0.0
  %2921 = vmatmul.mubr.f32.gmra.mxu0 %v2825
  %v2922 = vpop.f32.mrf.mxu0
  %v2923 = vadd.f32 %v533, %v2922
  %v2924 = vpop.f32.mrf.mxu0
  %2925 = vmatprep.mubr.f32.mxu0 0.0
  %2926 = vmatmul.mubr.f32.gmra.mxu0 %v2828
  %v2927 = vpop.f32.mrf.mxu0
  %v2928 = vadd.f32 %v533, %v2927
  %v2929 = vpop.f32.mrf.mxu0
  %2930 = vmatprep.mubr.f32.mxu0 0.0
  %2931 = vmatmul.mubr.f32.gmra.mxu0 %v2831
  %v2932 = vpop.f32.mrf.mxu0
  %v2933 = vadd.f32 %v533, %v2932
  %v2934 = vpop.f32.mrf.mxu0
  %2935 = vmatprep.mubr.f32.mxu0 0.0
  %2936 = vmatmul.mubr.f32.gmra.mxu0 %v2834
  %v2937 = vpop.f32.mrf.mxu0
  %v2938 = vadd.f32 %v533, %v2937
  %v2939 = vpop.f32.mrf.mxu0
  %2940 = vdwg.mxu0
  %v2941 = vsel %vm534, %v2903, 0.0
  %2942 = vadd.xlane.f32.xlu0 %v2941
  %v2943 = vpop.xlane.xlu0 %2942
  %v2944 = vsel %vm534, %v2908, 0.0
  %2945 = vadd.xlane.f32.xlu0 %v2944
  %v2946 = vpop.xlane.xlu0 %2945
  %v2947 = vsel %vm534, %v2913, 0.0
  %2948 = vadd.xlane.f32.xlu0 %v2947
  %v2949 = vpop.xlane.xlu0 %2948
  %v2950 = vsel %vm534, %v2918, 0.0
  %2951 = vadd.xlane.f32.xlu0 %v2950
  %v2952 = vpop.xlane.xlu0 %2951
  %v2953 = vsel %vm534, %v2923, 0.0
  %2954 = vadd.xlane.f32.xlu0 %v2953
  %v2955 = vpop.xlane.xlu0 %2954
  %v2956 = vsel %vm534, %v2928, 0.0
  %2957 = vadd.xlane.f32.xlu0 %v2956
  %v2958 = vpop.xlane.xlu0 %2957
  %v2959 = vsel %vm534, %v2933, 0.0
  %2960 = vadd.xlane.f32.xlu0 %v2959
  %v2961 = vpop.xlane.xlu0 %2960
  %v2962 = vsel %vm534, %v2938, 0.0
  %2963 = vadd.xlane.f32.xlu0 %v2962
  %v2964 = vpop.xlane.xlu0 %2963
  %v2965 = vmul.f32 %v2943, %v692
  %v2966 = vmul.f32 %v2946, %v692
  %v2967 = vmul.f32 %v2949, %v692
  %v2968 = vmul.f32 %v2952, %v692
  %v2969 = vmul.f32 %v2955, %v692
  %v2970 = vmul.f32 %v2958, %v692
  %v2971 = vmul.f32 %v2961, %v692
  %v2972 = vmul.f32 %v2964, %v692
  %v2973 = vsub.f32 %v2903, %v2965
  %v2974 = vsub.f32 %v2908, %v2966
  %v2975 = vsub.f32 %v2913, %v2967
  %v2976 = vsub.f32 %v2918, %v2968
  %v2977 = vsub.f32 %v2923, %v2969
  %v2978 = vsub.f32 %v2928, %v2970
  %v2979 = vsub.f32 %v2933, %v2971
  %v2980 = vsub.f32 %v2938, %v2972
  %v2981 = vmul.f32 %v2973, %v2973
  %v2982 = vmul.f32 %v2974, %v2974
  %v2983 = vmul.f32 %v2975, %v2975
  %v2984 = vmul.f32 %v2976, %v2976
  %v2985 = vmul.f32 %v2977, %v2977
  %v2986 = vmul.f32 %v2978, %v2978
  %v2987 = vmul.f32 %v2979, %v2979
  %v2988 = vmul.f32 %v2980, %v2980
  %v2989 = vsel %vm534, %v2981, 0.0
  %2990 = vadd.xlane.f32.xlu0 %v2989
  %v2991 = vpop.xlane.xlu0 %2990
  %v2992 = vsel %vm534, %v2982, 0.0
  %2993 = vadd.xlane.f32.xlu0 %v2992
  %v2994 = vpop.xlane.xlu0 %2993
  %v2995 = vsel %vm534, %v2983, 0.0
  %2996 = vadd.xlane.f32.xlu0 %v2995
  %v2997 = vpop.xlane.xlu0 %2996
  %v2998 = vsel %vm534, %v2984, 0.0
  %2999 = vadd.xlane.f32.xlu0 %v2998
  %v3000 = vpop.xlane.xlu0 %2999
  %v3001 = vsel %vm534, %v2985, 0.0
  %3002 = vadd.xlane.f32.xlu0 %v3001
  %v3003 = vpop.xlane.xlu0 %3002
  %v3004 = vsel %vm534, %v2986, 0.0
  %3005 = vadd.xlane.f32.xlu0 %v3004
  %v3006 = vpop.xlane.xlu0 %3005
  %v3007 = vsel %vm534, %v2987, 0.0
  %3008 = vadd.xlane.f32.xlu0 %v3007
  %v3009 = vpop.xlane.xlu0 %3008
  %v3010 = vsel %vm534, %v2988, 0.0
  %3011 = vadd.xlane.f32.xlu0 %v3010
  %v3012 = vpop.xlane.xlu0 %3011
  %v3013 = vmul.f32 %v2991, %v692
  %v3014 = vmul.f32 %v2994, %v692
  %v3015 = vmul.f32 %v2997, %v692
  %v3016 = vmul.f32 %v3000, %v692
  %v3017 = vmul.f32 %v3003, %v692
  %v3018 = vmul.f32 %v3006, %v692
  %v3019 = vmul.f32 %v3009, %v692
  %v3020 = vmul.f32 %v3012, %v692
  %v3021 = vadd.f32 %v3013, 1e-06
  %v3022 = vadd.f32 %v3014, 1e-06
  %v3023 = vadd.f32 %v3015, 1e-06
  %v3024 = vadd.f32 %v3016, 1e-06
  %v3025 = vadd.f32 %v3017, 1e-06
  %v3026 = vadd.f32 %v3018, 1e-06
  %v3027 = vadd.f32 %v3019, 1e-06
  %v3028 = vadd.f32 %v3020, 1e-06
  %v3029 = vrsqrt.pop %v3021
  %v3030 = vrsqrt.pop %v3022
  %v3031 = vrsqrt.pop %v3023
  %v3032 = vrsqrt.pop %v3024
  %v3033 = vrsqrt.pop %v3025
  %v3034 = vrsqrt.pop %v3026
  %v3035 = vrsqrt.pop %v3027
  %v3036 = vrsqrt.pop %v3028
  %v3037 = vmul.f32 %v2973, %v3029
  %v3038 = vmul.f32 %v2974, %v3030
  %v3039 = vmul.f32 %v2975, %v3031
  %v3040 = vmul.f32 %v2976, %v3032
  %v3041 = vmul.f32 %v2977, %v3033
  %v3042 = vmul.f32 %v2978, %v3034
  %v3043 = vmul.f32 %v2979, %v3035
  %v3044 = vmul.f32 %v2980, %v3036
  %v3046 = vsel %vm534, %v3037, 0
  %v3049 = vsel %vm534, %v3038, 0
  %v3052 = vsel %vm534, %v3039, 0
  %v3055 = vsel %vm534, %v3040, 0
  %v3058 = vsel %vm534, %v3041, 0
  %v3061 = vsel %vm534, %v3042, 0
  %v3064 = vsel %vm534, %v3043, 0
  %v3067 = vsel %vm534, %v3044, 0
  %3069 = vmatprep.subr.mxu0 0.0
  %3070 = vmatpush1.msra.mxu0 0.0
  %3071 = vmatprep.subr.mxu0 0.0
  %3072 = vmatpush1.msra.mxu0 0.0
  %3073 = vmatprep.subr.mxu0 0.0
  %3074 = vmatpush1.msra.mxu0 0.0
  %3075 = vmatprep.subr.mxu0 0.0
  %3076 = vmatpush1.msra.mxu0 0.0
  %3077 = vmatprep.subr.mxu0 0.0
  %3078 = vmatpush1.msra.mxu0 0.0
  %3079 = vmatprep.subr.mxu0 0.0
  %3080 = vmatpush1.msra.mxu0 0.0
  %3081 = vmatprep.subr.mxu0 0.0
  %3082 = vmatpush1.msra.mxu0 0.0
  %3083 = vmatprep.subr.mxu0 0.0
  %3084 = vmatpush1.msra.mxu0 0.0
  %3085 = vmatprep.subr.mxu0 0.0
  %3086 = vmatpush1.msra.mxu0 0.0
  %3087 = vmatprep.subr.mxu0 0.0
  %3088 = vmatpush1.msra.mxu0 0.0
  %3089 = vmatprep.subr.mxu0 0.0
  %3090 = vmatpush1.msra.mxu0 0.0
  %3091 = vmatprep.subr.mxu0 0.0
  %3092 = vmatpush1.msra.mxu0 0.0
  %3093 = vmatprep.subr.mxu0 0.0
  %3094 = vmatpush1.msra.mxu0 0.0
  %3095 = vmatprep.subr.mxu0 0.0
  %3096 = vmatpush1.msra.mxu0 %v802
  %3097 = vmatprep.subr.mxu0 0.0
  %3098 = vmatpush1.msra.mxu0 %v42
  %3099 = vmatprep.subr.mxu0 0.0
  %3100 = vmatpush1.msra.mxu0 %v41
  %3101 = vmatprep.subr.mxu0 0.0
  %3102 = vmatpush2.msra.mxu0 0.0
  %3103 = vmatprep.subr.mxu0 0.0
  %3104 = vmatpush2.msra.mxu0 0.0
  %3105 = vmatprep.subr.mxu0 0.0
  %3106 = vmatpush2.msra.mxu0 0.0
  %3107 = vmatprep.subr.mxu0 0.0
  %3108 = vmatpush2.msra.mxu0 0.0
  %3109 = vmatprep.subr.mxu0 0.0
  %3110 = vmatpush2.msra.mxu0 0.0
  %3111 = vmatprep.subr.mxu0 0.0
  %3112 = vmatpush2.msra.mxu0 0.0
  %3113 = vmatprep.subr.mxu0 0.0
  %3114 = vmatpush2.msra.mxu0 0.0
  %3115 = vmatprep.subr.mxu0 0.0
  %3116 = vmatpush2.msra.mxu0 0.0
  %3117 = vmatprep.subr.mxu0 0.0
  %3118 = vmatpush2.msra.mxu0 0.0
  %3119 = vmatprep.subr.mxu0 0.0
  %3120 = vmatpush2.msra.mxu0 0.0
  %3121 = vmatprep.subr.mxu0 0.0
  %3122 = vmatpush2.msra.mxu0 0.0
  %3123 = vmatprep.subr.mxu0 0.0
  %3124 = vmatpush2.msra.mxu0 0.0
  %3125 = vmatprep.subr.mxu0 0.0
  %3126 = vmatpush2.msra.mxu0 0.0
  %3127 = vmatprep.subr.mxu0 0.0
  %3128 = vmatpush2.msra.mxu0 0.0
  %3129 = vmatprep.subr.mxu0 0.0
  %3130 = vmatpush2.msra.mxu0 0.0
  %3131 = vmatprep.subr.mxu0 0.0
  %3132 = vmatpush2.msra.mxu0 0.0
  %3133 = vmatprep.mubr.f32.mxu0 0.0
  %3134 = vmatmul.mubr.f32.gmra.mxu0 %v3046
  %v3135 = vpop.f32.mrf.mxu0
  %v3136 = vadd.f32 %v776, %v3135
  %v3137 = vpop.f32.mrf.mxu0
  %3138 = vmatprep.mubr.f32.mxu0 0.0
  %3139 = vmatmul.mubr.f32.gmra.mxu0 %v3049
  %v3140 = vpop.f32.mrf.mxu0
  %v3141 = vadd.f32 %v776, %v3140
  %v3142 = vpop.f32.mrf.mxu0
  %3143 = vmatprep.mubr.f32.mxu0 0.0
  %3144 = vmatmul.mubr.f32.gmra.mxu0 %v3052
  %v3145 = vpop.f32.mrf.mxu0
  %v3146 = vadd.f32 %v776, %v3145
  %v3147 = vpop.f32.mrf.mxu0
  %3148 = vmatprep.mubr.f32.mxu0 0.0
  %3149 = vmatmul.mubr.f32.gmra.mxu0 %v3055
  %v3150 = vpop.f32.mrf.mxu0
  %v3151 = vadd.f32 %v776, %v3150
  %v3152 = vpop.f32.mrf.mxu0
  %3153 = vmatprep.mubr.f32.mxu0 0.0
  %3154 = vmatmul.mubr.f32.gmra.mxu0 %v3058
  %v3155 = vpop.f32.mrf.mxu0
  %v3156 = vadd.f32 %v776, %v3155
  %v3157 = vpop.f32.mrf.mxu0
  %3158 = vmatprep.mubr.f32.mxu0 0.0
  %3159 = vmatmul.mubr.f32.gmra.mxu0 %v3061
  %v3160 = vpop.f32.mrf.mxu0
  %v3161 = vadd.f32 %v776, %v3160
  %v3162 = vpop.f32.mrf.mxu0
  %3163 = vmatprep.mubr.f32.mxu0 0.0
  %3164 = vmatmul.mubr.f32.gmra.mxu0 %v3064
  %v3165 = vpop.f32.mrf.mxu0
  %v3166 = vadd.f32 %v776, %v3165
  %v3167 = vpop.f32.mrf.mxu0
  %3168 = vmatprep.mubr.f32.mxu0 0.0
  %3169 = vmatmul.mubr.f32.gmra.mxu0 %v3067
  %v3170 = vpop.f32.mrf.mxu0
  %v3171 = vadd.f32 %v776, %v3170
  %v3172 = vpop.f32.mrf.mxu0
  %3173 = vdwg.mxu0
  %v3174 = vmax.f32 %v3136, 0.0
  %v3175 = vmax.f32 %v3141, 0.0
  %v3176 = vmax.f32 %v3146, 0.0
  %v3177 = vmax.f32 %v3151, 0.0
  %v3178 = vmax.f32 %v3156, 0.0
  %v3179 = vmax.f32 %v3161, 0.0
  %v3180 = vmax.f32 %v3166, 0.0
  %v3181 = vmax.f32 %v3171, 0.0
  %v3182 = vld [vmem:[%s2 + $0x98] sm:$0xff]
  %v3183 = vld [vmem:[%s2 + $0xa0] sm:$0xff]
  %v3184 = vld [vmem:[%s2 + $0xa8] sm:$0xff]
  %v3185 = vld [vmem:[%s2 + $0xb0] sm:$0xff]
  %v3187 = vsel %vm50, %v3174, 0
  %v3190 = vsel %vm50, %v3175, 0
  %v3193 = vsel %vm50, %v3176, 0
  %v3196 = vsel %vm50, %v3177, 0
  %v3199 = vsel %vm50, %v3178, 0
  %v3202 = vsel %vm50, %v3179, 0
  %v3205 = vsel %vm50, %v3180, 0
  %v3208 = vsel %vm50, %v3181, 0
  %3210 = vmatprep.subr.mxu0 0.0
  %3211 = vmatpush1.msra.mxu0 0.0
  %3212 = vmatprep.subr.mxu0 0.0
  %3213 = vmatpush1.msra.mxu0 0.0
  %3214 = vmatprep.subr.mxu0 0.0
  %3215 = vmatpush1.msra.mxu0 0.0
  %3216 = vmatprep.subr.mxu0 0.0
  %3217 = vmatpush1.msra.mxu0 0.0
  %3218 = vmatprep.subr.mxu0 0.0
  %3219 = vmatpush1.msra.mxu0 0.0
  %3220 = vmatprep.subr.mxu0 0.0
  %3221 = vmatpush1.msra.mxu0 0.0
  %3222 = vmatprep.subr.mxu0 0.0
  %3223 = vmatpush1.msra.mxu0 0.0
  %3224 = vmatprep.subr.mxu0 0.0
  %3225 = vmatpush1.msra.mxu0 0.0
  %3226 = vmatprep.subr.mxu0 0.0
  %3227 = vmatpush1.msra.mxu0 0.0
  %3228 = vmatprep.subr.mxu0 0.0
  %3229 = vmatpush1.msra.mxu0 0.0
  %3230 = vmatprep.subr.mxu0 0.0
  %3231 = vmatpush1.msra.mxu0 0.0
  %3232 = vmatprep.subr.mxu0 0.0
  %3233 = vmatpush1.msra.mxu0 0.0
  %3234 = vmatprep.subr.mxu0 0.0
  %3235 = vmatpush1.msra.mxu0 %v3185
  %3236 = vmatprep.subr.mxu0 0.0
  %3237 = vmatpush1.msra.mxu0 %v3184
  %3238 = vmatprep.subr.mxu0 0.0
  %3239 = vmatpush1.msra.mxu0 %v3183
  %3240 = vmatprep.subr.mxu0 0.0
  %3241 = vmatpush1.msra.mxu0 %v3182
  %3242 = vmatprep.subr.mxu0 0.0
  %3243 = vmatpush2.msra.mxu0 0.0
  %3244 = vmatprep.subr.mxu0 0.0
  %3245 = vmatpush2.msra.mxu0 0.0
  %3246 = vmatprep.subr.mxu0 0.0
  %3247 = vmatpush2.msra.mxu0 0.0
  %3248 = vmatprep.subr.mxu0 0.0
  %3249 = vmatpush2.msra.mxu0 0.0
  %3250 = vmatprep.subr.mxu0 0.0
  %3251 = vmatpush2.msra.mxu0 0.0
  %3252 = vmatprep.subr.mxu0 0.0
  %3253 = vmatpush2.msra.mxu0 0.0
  %3254 = vmatprep.subr.mxu0 0.0
  %3255 = vmatpush2.msra.mxu0 0.0
  %3256 = vmatprep.subr.mxu0 0.0
  %3257 = vmatpush2.msra.mxu0 0.0
  %3258 = vmatprep.subr.mxu0 0.0
  %3259 = vmatpush2.msra.mxu0 0.0
  %3260 = vmatprep.subr.mxu0 0.0
  %3261 = vmatpush2.msra.mxu0 0.0
  %3262 = vmatprep.subr.mxu0 0.0
  %3263 = vmatpush2.msra.mxu0 0.0
  %3264 = vmatprep.subr.mxu0 0.0
  %3265 = vmatpush2.msra.mxu0 0.0
  %3266 = vmatprep.subr.mxu0 0.0
  %3267 = vmatpush2.msra.mxu0 0.0
  %3268 = vmatprep.subr.mxu0 0.0
  %3269 = vmatpush2.msra.mxu0 0.0
  %3270 = vmatprep.subr.mxu0 0.0
  %3271 = vmatpush2.msra.mxu0 0.0
  %3272 = vmatprep.subr.mxu0 0.0
  %3273 = vmatpush2.msra.mxu0 0.0
  %3274 = vmatprep.mubr.f32.mxu0 0.0
  %3275 = vmatmul.mubr.f32.gmra.mxu0 %v3187
  %v3276 = vpop.f32.mrf.mxu0
  %v3277 = vadd.f32 0.0, %v3276
  %v3278 = vpop.f32.mrf.mxu0
  %3279 = vmatprep.mubr.f32.mxu0 0.0
  %3280 = vmatmul.mubr.f32.gmra.mxu0 %v3190
  %v3281 = vpop.f32.mrf.mxu0
  %v3282 = vadd.f32 0.0, %v3281
  %v3283 = vpop.f32.mrf.mxu0
  %3284 = vmatprep.mubr.f32.mxu0 0.0
  %3285 = vmatmul.mubr.f32.gmra.mxu0 %v3193
  %v3286 = vpop.f32.mrf.mxu0
  %v3287 = vadd.f32 0.0, %v3286
  %v3288 = vpop.f32.mrf.mxu0
  %3289 = vmatprep.mubr.f32.mxu0 0.0
  %3290 = vmatmul.mubr.f32.gmra.mxu0 %v3196
  %v3291 = vpop.f32.mrf.mxu0
  %v3292 = vadd.f32 0.0, %v3291
  %v3293 = vpop.f32.mrf.mxu0
  %3294 = vmatprep.mubr.f32.mxu0 0.0
  %3295 = vmatmul.mubr.f32.gmra.mxu0 %v3199
  %v3296 = vpop.f32.mrf.mxu0
  %v3297 = vadd.f32 0.0, %v3296
  %v3298 = vpop.f32.mrf.mxu0
  %3299 = vmatprep.mubr.f32.mxu0 0.0
  %3300 = vmatmul.mubr.f32.gmra.mxu0 %v3202
  %v3301 = vpop.f32.mrf.mxu0
  %v3302 = vadd.f32 0.0, %v3301
  %v3303 = vpop.f32.mrf.mxu0
  %3304 = vmatprep.mubr.f32.mxu0 0.0
  %3305 = vmatmul.mubr.f32.gmra.mxu0 %v3205
  %v3306 = vpop.f32.mrf.mxu0
  %v3307 = vadd.f32 0.0, %v3306
  %v3308 = vpop.f32.mrf.mxu0
  %3309 = vmatprep.mubr.f32.mxu0 0.0
  %3310 = vmatmul.mubr.f32.gmra.mxu0 %v3208
  %v3311 = vpop.f32.mrf.mxu0
  %v3312 = vadd.f32 0.0, %v3311
  %v3313 = vpop.f32.mrf.mxu0
  %3314 = vdwg.mxu0
  %v3315 = vadd.f32 %v2153, %v3277
  %v3316 = vadd.f32 %v2158, %v3282
  %v3317 = vadd.f32 %v2163, %v3287
  %v3318 = vadd.f32 %v2168, %v3292
  %v3319 = vadd.f32 %v2173, %v3297
  %v3320 = vadd.f32 %v2178, %v3302
  %v3321 = vadd.f32 %v2183, %v3307
  %v3322 = vadd.f32 %v2188, %v3312
  %3323 = vrot.lane.b32.xlu0 %v17, 32
  %v3324 = vpop.permute.xlu0 %3323
  %3325 = vrot.lane.b32.xlu0 %v18, 32
  %v3326 = vpop.permute.xlu0 %3325
  %3327 = vrot.lane.b32.xlu0 %v19, 32
  %v3328 = vpop.permute.xlu0 %3327
  %3329 = vrot.lane.b32.xlu0 %v20, 32
  %v3330 = vpop.permute.xlu0 %3329
  %3331 = vrot.lane.b32.xlu0 %v21, 32
  %v3332 = vpop.permute.xlu0 %3331
  %3333 = vrot.lane.b32.xlu0 %v22, 32
  %v3334 = vpop.permute.xlu0 %3333
  %3335 = vrot.lane.b32.xlu0 %v23, 32
  %v3336 = vpop.permute.xlu0 %3335
  %3337 = vrot.lane.b32.xlu0 %v24, 32
  %v3338 = vpop.permute.xlu0 %3337
  %v3347 = vsel %vm50, %v3324, 0.0
  %3348 = vadd.xlane.f32.xlu0 %v3347
  %v3349 = vpop.xlane.xlu0 %3348
  %v3350 = vsel %vm50, %v3326, 0.0
  %3351 = vadd.xlane.f32.xlu0 %v3350
  %v3352 = vpop.xlane.xlu0 %3351
  %v3353 = vsel %vm50, %v3328, 0.0
  %3354 = vadd.xlane.f32.xlu0 %v3353
  %v3355 = vpop.xlane.xlu0 %3354
  %v3356 = vsel %vm50, %v3330, 0.0
  %3357 = vadd.xlane.f32.xlu0 %v3356
  %v3358 = vpop.xlane.xlu0 %3357
  %v3359 = vsel %vm50, %v3332, 0.0
  %3360 = vadd.xlane.f32.xlu0 %v3359
  %v3361 = vpop.xlane.xlu0 %3360
  %v3362 = vsel %vm50, %v3334, 0.0
  %3363 = vadd.xlane.f32.xlu0 %v3362
  %v3364 = vpop.xlane.xlu0 %3363
  %v3365 = vsel %vm50, %v3336, 0.0
  %3366 = vadd.xlane.f32.xlu0 %v3365
  %v3367 = vpop.xlane.xlu0 %3366
  %v3368 = vsel %vm50, %v3338, 0.0
  %3369 = vadd.xlane.f32.xlu0 %v3368
  %v3370 = vpop.xlane.xlu0 %3369
  %3371 = vrot.lane.b32.xlu0 %v25, 104
  %v3372 = vpop.permute.xlu0 %3371
  %3373 = vrot.lane.b32.xlu0 %v26, 104
  %v3374 = vpop.permute.xlu0 %3373
  %3375 = vrot.lane.b32.xlu0 %v27, 104
  %v3376 = vpop.permute.xlu0 %3375
  %3377 = vrot.lane.b32.xlu0 %v28, 104
  %v3378 = vpop.permute.xlu0 %3377
  %3379 = vrot.lane.b32.xlu0 %v29, 104
  %v3380 = vpop.permute.xlu0 %3379
  %3381 = vrot.lane.b32.xlu0 %v30, 104
  %v3382 = vpop.permute.xlu0 %3381
  %3383 = vrot.lane.b32.xlu0 %v31, 104
  %v3384 = vpop.permute.xlu0 %3383
  %3385 = vrot.lane.b32.xlu0 %v32, 104
  %v3386 = vpop.permute.xlu0 %3385
  %v3395 = vsel %vm75, %v3372, 0.0
  %3396 = vadd.xlane.f32.xlu0 %v3395
  %v3397 = vpop.xlane.xlu0 %3396
  %v3398 = vsel %vm75, %v3374, 0.0
  %3399 = vadd.xlane.f32.xlu0 %v3398
  %v3400 = vpop.xlane.xlu0 %3399
  %v3401 = vsel %vm75, %v3376, 0.0
  %3402 = vadd.xlane.f32.xlu0 %v3401
  %v3403 = vpop.xlane.xlu0 %3402
  %v3404 = vsel %vm75, %v3378, 0.0
  %3405 = vadd.xlane.f32.xlu0 %v3404
  %v3406 = vpop.xlane.xlu0 %3405
  %v3407 = vsel %vm75, %v3380, 0.0
  %3408 = vadd.xlane.f32.xlu0 %v3407
  %v3409 = vpop.xlane.xlu0 %3408
  %v3410 = vsel %vm75, %v3382, 0.0
  %3411 = vadd.xlane.f32.xlu0 %v3410
  %v3412 = vpop.xlane.xlu0 %3411
  %v3413 = vsel %vm75, %v3384, 0.0
  %3414 = vadd.xlane.f32.xlu0 %v3413
  %v3415 = vpop.xlane.xlu0 %3414
  %v3416 = vsel %vm75, %v3386, 0.0
  %3417 = vadd.xlane.f32.xlu0 %v3416
  %v3418 = vpop.xlane.xlu0 %3417
  %v3419 = vadd.f32 %v3349, %v3397
  %v3420 = vadd.f32 %v3352, %v3400
  %v3421 = vadd.f32 %v3355, %v3403
  %v3422 = vadd.f32 %v3358, %v3406
  %v3423 = vadd.f32 %v3361, %v3409
  %v3424 = vadd.f32 %v3364, %v3412
  %v3425 = vadd.f32 %v3367, %v3415
  %v3426 = vadd.f32 %v3370, %v3418
  %v3427 = vmul.f32 %v3419, 0.02631579
  %v3428 = vmul.f32 %v3420, 0.02631579
  %v3429 = vmul.f32 %v3421, 0.02631579
  %v3430 = vmul.f32 %v3422, 0.02631579
  %v3431 = vmul.f32 %v3423, 0.02631579
  %v3432 = vmul.f32 %v3424, 0.02631579
  %v3433 = vmul.f32 %v3425, 0.02631579
  %v3434 = vmul.f32 %v3426, 0.02631579
  %v3435 = vsub.f32 %v17, %v3427
  %v3436 = vsub.f32 %v18, %v3428
  %v3437 = vsub.f32 %v19, %v3429
  %v3438 = vsub.f32 %v20, %v3430
  %v3439 = vsub.f32 %v21, %v3431
  %v3440 = vsub.f32 %v22, %v3432
  %v3441 = vsub.f32 %v23, %v3433
  %v3442 = vsub.f32 %v24, %v3434
  %v3443 = vsub.f32 %v25, %v3427
  %v3444 = vsub.f32 %v26, %v3428
  %v3445 = vsub.f32 %v27, %v3429
  %v3446 = vsub.f32 %v28, %v3430
  %v3447 = vsub.f32 %v29, %v3431
  %v3448 = vsub.f32 %v30, %v3432
  %v3449 = vsub.f32 %v31, %v3433
  %v3450 = vsub.f32 %v32, %v3434
  %3451 = vrot.lane.b32.xlu0 %v49, 24
  %v3452 = vpop.permute.xlu0 %3451
  %v3454 = vmul.f32 %v3443, %v3452
  %v3455 = vmul.f32 %v3444, %v3452
  %v3456 = vmul.f32 %v3445, %v3452
  %v3457 = vmul.f32 %v3446, %v3452
  %v3458 = vmul.f32 %v3447, %v3452
  %v3459 = vmul.f32 %v3448, %v3452
  %v3460 = vmul.f32 %v3449, %v3452
  %v3461 = vmul.f32 %v3450, %v3452
  %v3462 = vmul.f32 %v3435, %v3435
  %v3463 = vmul.f32 %v3436, %v3436
  %v3464 = vmul.f32 %v3437, %v3437
  %v3465 = vmul.f32 %v3438, %v3438
  %v3466 = vmul.f32 %v3439, %v3439
  %v3467 = vmul.f32 %v3440, %v3440
  %v3468 = vmul.f32 %v3441, %v3441
  %v3469 = vmul.f32 %v3442, %v3442
  %3478 = vrot.lane.b32.xlu0 %v3462, 32
  %v3479 = vpop.permute.xlu0 %3478
  %3480 = vrot.lane.b32.xlu0 %v3463, 32
  %v3481 = vpop.permute.xlu0 %3480
  %3482 = vrot.lane.b32.xlu0 %v3464, 32
  %v3483 = vpop.permute.xlu0 %3482
  %3484 = vrot.lane.b32.xlu0 %v3465, 32
  %v3485 = vpop.permute.xlu0 %3484
  %3486 = vrot.lane.b32.xlu0 %v3466, 32
  %v3487 = vpop.permute.xlu0 %3486
  %3488 = vrot.lane.b32.xlu0 %v3467, 32
  %v3489 = vpop.permute.xlu0 %3488
  %3490 = vrot.lane.b32.xlu0 %v3468, 32
  %v3491 = vpop.permute.xlu0 %3490
  %3492 = vrot.lane.b32.xlu0 %v3469, 32
  %v3493 = vpop.permute.xlu0 %3492
  %v3502 = vsel %vm50, %v3479, 0.0
  %3503 = vadd.xlane.f32.xlu0 %v3502
  %v3504 = vpop.xlane.xlu0 %3503
  %v3505 = vsel %vm50, %v3481, 0.0
  %3506 = vadd.xlane.f32.xlu0 %v3505
  %v3507 = vpop.xlane.xlu0 %3506
  %v3508 = vsel %vm50, %v3483, 0.0
  %3509 = vadd.xlane.f32.xlu0 %v3508
  %v3510 = vpop.xlane.xlu0 %3509
  %v3511 = vsel %vm50, %v3485, 0.0
  %3512 = vadd.xlane.f32.xlu0 %v3511
  %v3513 = vpop.xlane.xlu0 %3512
  %v3514 = vsel %vm50, %v3487, 0.0
  %3515 = vadd.xlane.f32.xlu0 %v3514
  %v3516 = vpop.xlane.xlu0 %3515
  %v3517 = vsel %vm50, %v3489, 0.0
  %3518 = vadd.xlane.f32.xlu0 %v3517
  %v3519 = vpop.xlane.xlu0 %3518
  %v3520 = vsel %vm50, %v3491, 0.0
  %3521 = vadd.xlane.f32.xlu0 %v3520
  %v3522 = vpop.xlane.xlu0 %3521
  %v3523 = vsel %vm50, %v3493, 0.0
  %3524 = vadd.xlane.f32.xlu0 %v3523
  %v3525 = vpop.xlane.xlu0 %3524
  %v3526 = vmul.f32 %v3454, %v3454
  %v3527 = vmul.f32 %v3455, %v3455
  %v3528 = vmul.f32 %v3456, %v3456
  %v3529 = vmul.f32 %v3457, %v3457
  %v3530 = vmul.f32 %v3458, %v3458
  %v3531 = vmul.f32 %v3459, %v3459
  %v3532 = vmul.f32 %v3460, %v3460
  %v3533 = vmul.f32 %v3461, %v3461
  %3542 = vrot.lane.b32.xlu0 %v3526, 104
  %v3543 = vpop.permute.xlu0 %3542
  %3544 = vrot.lane.b32.xlu0 %v3527, 104
  %v3545 = vpop.permute.xlu0 %3544
  %3546 = vrot.lane.b32.xlu0 %v3528, 104
  %v3547 = vpop.permute.xlu0 %3546
  %3548 = vrot.lane.b32.xlu0 %v3529, 104
  %v3549 = vpop.permute.xlu0 %3548
  %3550 = vrot.lane.b32.xlu0 %v3530, 104
  %v3551 = vpop.permute.xlu0 %3550
  %3552 = vrot.lane.b32.xlu0 %v3531, 104
  %v3553 = vpop.permute.xlu0 %3552
  %3554 = vrot.lane.b32.xlu0 %v3532, 104
  %v3555 = vpop.permute.xlu0 %3554
  %3556 = vrot.lane.b32.xlu0 %v3533, 104
  %v3557 = vpop.permute.xlu0 %3556
  %v3566 = vsel %vm75, %v3543, 0.0
  %3567 = vadd.xlane.f32.xlu0 %v3566
  %v3568 = vpop.xlane.xlu0 %3567
  %v3569 = vsel %vm75, %v3545, 0.0
  %3570 = vadd.xlane.f32.xlu0 %v3569
  %v3571 = vpop.xlane.xlu0 %3570
  %v3572 = vsel %vm75, %v3547, 0.0
  %3573 = vadd.xlane.f32.xlu0 %v3572
  %v3574 = vpop.xlane.xlu0 %3573
  %v3575 = vsel %vm75, %v3549, 0.0
  %3576 = vadd.xlane.f32.xlu0 %v3575
  %v3577 = vpop.xlane.xlu0 %3576
  %v3578 = vsel %vm75, %v3551, 0.0
  %3579 = vadd.xlane.f32.xlu0 %v3578
  %v3580 = vpop.xlane.xlu0 %3579
  %v3581 = vsel %vm75, %v3553, 0.0
  %3582 = vadd.xlane.f32.xlu0 %v3581
  %v3583 = vpop.xlane.xlu0 %3582
  %v3584 = vsel %vm75, %v3555, 0.0
  %3585 = vadd.xlane.f32.xlu0 %v3584
  %v3586 = vpop.xlane.xlu0 %3585
  %v3587 = vsel %vm75, %v3557, 0.0
  %3588 = vadd.xlane.f32.xlu0 %v3587
  %v3589 = vpop.xlane.xlu0 %3588
  %v3590 = vadd.f32 %v3504, %v3568
  %v3591 = vadd.f32 %v3507, %v3571
  %v3592 = vadd.f32 %v3510, %v3574
  %v3593 = vadd.f32 %v3513, %v3577
  %v3594 = vadd.f32 %v3516, %v3580
  %v3595 = vadd.f32 %v3519, %v3583
  %v3596 = vadd.f32 %v3522, %v3586
  %v3597 = vadd.f32 %v3525, %v3589
  %v3598 = vmul.f32 %v3590, 0.02631579
  %v3599 = vmul.f32 %v3591, 0.02631579
  %v3600 = vmul.f32 %v3592, 0.02631579
  %v3601 = vmul.f32 %v3593, 0.02631579
  %v3602 = vmul.f32 %v3594, 0.02631579
  %v3603 = vmul.f32 %v3595, 0.02631579
  %v3604 = vmul.f32 %v3596, 0.02631579
  %v3605 = vmul.f32 %v3597, 0.02631579
  %v3606 = vadd.f32 %v3598, 1e-06
  %v3607 = vadd.f32 %v3599, 1e-06
  %v3608 = vadd.f32 %v3600, 1e-06
  %v3609 = vadd.f32 %v3601, 1e-06
  %v3610 = vadd.f32 %v3602, 1e-06
  %v3611 = vadd.f32 %v3603, 1e-06
  %v3612 = vadd.f32 %v3604, 1e-06
  %v3613 = vadd.f32 %v3605, 1e-06
  %v3614 = vrsqrt.pop %v3606
  %v3615 = vrsqrt.pop %v3607
  %v3616 = vrsqrt.pop %v3608
  %v3617 = vrsqrt.pop %v3609
  %v3618 = vrsqrt.pop %v3610
  %v3619 = vrsqrt.pop %v3611
  %v3620 = vrsqrt.pop %v3612
  %v3621 = vrsqrt.pop %v3613
  %v3622 = vmul.f32 %v3435, %v3614
  %v3623 = vmul.f32 %v3436, %v3615
  %v3624 = vmul.f32 %v3437, %v3616
  %v3625 = vmul.f32 %v3438, %v3617
  %v3626 = vmul.f32 %v3439, %v3618
  %v3627 = vmul.f32 %v3440, %v3619
  %v3628 = vmul.f32 %v3441, %v3620
  %v3629 = vmul.f32 %v3442, %v3621
  %v3630 = vmul.f32 %v3454, %v3614
  %v3631 = vmul.f32 %v3455, %v3615
  %v3632 = vmul.f32 %v3456, %v3616
  %v3633 = vmul.f32 %v3457, %v3617
  %v3634 = vmul.f32 %v3458, %v3618
  %v3635 = vmul.f32 %v3459, %v3619
  %v3636 = vmul.f32 %v3460, %v3620
  %v3637 = vmul.f32 %v3461, %v3621
  %3646 = vrot.lane.b32.xlu0 %v3630, 104
  %v3647 = vpop.permute.xlu0 %3646
  %3648 = vrot.lane.b32.xlu0 %v3631, 104
  %v3649 = vpop.permute.xlu0 %3648
  %3650 = vrot.lane.b32.xlu0 %v3632, 104
  %v3651 = vpop.permute.xlu0 %3650
  %3652 = vrot.lane.b32.xlu0 %v3633, 104
  %v3653 = vpop.permute.xlu0 %3652
  %3654 = vrot.lane.b32.xlu0 %v3634, 104
  %v3655 = vpop.permute.xlu0 %3654
  %3656 = vrot.lane.b32.xlu0 %v3635, 104
  %v3657 = vpop.permute.xlu0 %3656
  %3658 = vrot.lane.b32.xlu0 %v3636, 104
  %v3659 = vpop.permute.xlu0 %3658
  %3660 = vrot.lane.b32.xlu0 %v3637, 104
  %v3661 = vpop.permute.xlu0 %3660
  %v3662 = vsel %vm75, %v3647, 0
  %v3664 = vsel %vm75, %v3649, 0
  %v3666 = vsel %vm75, %v3651, 0
  %v3668 = vsel %vm75, %v3653, 0
  %v3670 = vsel %vm75, %v3655, 0
  %v3672 = vsel %vm75, %v3657, 0
  %v3674 = vsel %vm75, %v3659, 0
  %v3676 = vsel %vm75, %v3661, 0
  %3678 = vmatprep.subr.mxu0 0.0
  %3679 = vmatpush1.msra.mxu0 0.0
  %3680 = vmatprep.subr.mxu0 0.0
  %3681 = vmatpush1.msra.mxu0 0.0
  %3682 = vmatprep.subr.mxu0 0.0
  %3683 = vmatpush1.msra.mxu0 0.0
  %3684 = vmatprep.subr.mxu0 0.0
  %3685 = vmatpush1.msra.mxu0 0.0
  %3686 = vmatprep.subr.mxu0 0.0
  %3687 = vmatpush1.msra.mxu0 0.0
  %3688 = vmatprep.subr.mxu0 0.0
  %3689 = vmatpush1.msra.mxu0 0.0
  %3690 = vmatprep.subr.mxu0 0.0
  %3691 = vmatpush1.msra.mxu0 0.0
  %3692 = vmatprep.subr.mxu0 0.0
  %3693 = vmatpush1.msra.mxu0 0.0
  %3694 = vmatprep.subr.mxu0 0.0
  %3695 = vmatpush1.msra.mxu0 0.0
  %3696 = vmatprep.subr.mxu0 0.0
  %3697 = vmatpush1.msra.mxu0 0.0
  %3698 = vmatprep.subr.mxu0 0.0
  %3699 = vmatpush1.msra.mxu0 0.0
  %3700 = vmatprep.subr.mxu0 0.0
  %3701 = vmatpush1.msra.mxu0 0.0
  %3702 = vmatprep.subr.mxu0 0.0
  %3703 = vmatpush1.msra.mxu0 0.0
  %3704 = vmatprep.subr.mxu0 0.0
  %3705 = vmatpush1.msra.mxu0 0.0
  %3706 = vmatprep.subr.mxu0 0.0
  %3707 = vmatpush1.msra.mxu0 0.0
  %3708 = vmatprep.subr.mxu0 0.0
  %3709 = vmatpush1.msra.mxu0 %v37
  %3710 = vmatprep.subr.mxu0 0.0
  %3711 = vmatpush2.msra.mxu0 0.0
  %3712 = vmatprep.subr.mxu0 0.0
  %3713 = vmatpush2.msra.mxu0 0.0
  %3714 = vmatprep.subr.mxu0 0.0
  %3715 = vmatpush2.msra.mxu0 0.0
  %3716 = vmatprep.subr.mxu0 0.0
  %3717 = vmatpush2.msra.mxu0 0.0
  %3718 = vmatprep.subr.mxu0 0.0
  %3719 = vmatpush2.msra.mxu0 0.0
  %3720 = vmatprep.subr.mxu0 0.0
  %3721 = vmatpush2.msra.mxu0 0.0
  %3722 = vmatprep.subr.mxu0 0.0
  %3723 = vmatpush2.msra.mxu0 0.0
  %3724 = vmatprep.subr.mxu0 0.0
  %3725 = vmatpush2.msra.mxu0 0.0
  %3726 = vmatprep.subr.mxu0 0.0
  %3727 = vmatpush2.msra.mxu0 0.0
  %3728 = vmatprep.subr.mxu0 0.0
  %3729 = vmatpush2.msra.mxu0 0.0
  %3730 = vmatprep.subr.mxu0 0.0
  %3731 = vmatpush2.msra.mxu0 0.0
  %3732 = vmatprep.subr.mxu0 0.0
  %3733 = vmatpush2.msra.mxu0 0.0
  %3734 = vmatprep.subr.mxu0 0.0
  %3735 = vmatpush2.msra.mxu0 0.0
  %3736 = vmatprep.subr.mxu0 0.0
  %3737 = vmatpush2.msra.mxu0 0.0
  %3738 = vmatprep.subr.mxu0 0.0
  %3739 = vmatpush2.msra.mxu0 0.0
  %3740 = vmatprep.subr.mxu0 0.0
  %3741 = vmatpush2.msra.mxu0 0.0
  %3742 = vmatprep.mubr.f32.mxu0 0.0
  %3743 = vmatmul.mubr.f32.gmra.mxu0 %v3662
  %v3744 = vpop.f32.mrf.mxu0
  %v3745 = vadd.f32 0.0, %v3744
  %v3746 = vpop.f32.mrf.mxu0
  %3747 = vmatprep.mubr.f32.mxu0 0.0
  %3748 = vmatmul.mubr.f32.gmra.mxu0 %v3664
  %v3749 = vpop.f32.mrf.mxu0
  %v3750 = vadd.f32 0.0, %v3749
  %v3751 = vpop.f32.mrf.mxu0
  %3752 = vmatprep.mubr.f32.mxu0 0.0
  %3753 = vmatmul.mubr.f32.gmra.mxu0 %v3666
  %v3754 = vpop.f32.mrf.mxu0
  %v3755 = vadd.f32 0.0, %v3754
  %v3756 = vpop.f32.mrf.mxu0
  %3757 = vmatprep.mubr.f32.mxu0 0.0
  %3758 = vmatmul.mubr.f32.gmra.mxu0 %v3668
  %v3759 = vpop.f32.mrf.mxu0
  %v3760 = vadd.f32 0.0, %v3759
  %v3761 = vpop.f32.mrf.mxu0
  %3762 = vmatprep.mubr.f32.mxu0 0.0
  %3763 = vmatmul.mubr.f32.gmra.mxu0 %v3670
  %v3764 = vpop.f32.mrf.mxu0
  %v3765 = vadd.f32 0.0, %v3764
  %v3766 = vpop.f32.mrf.mxu0
  %3767 = vmatprep.mubr.f32.mxu0 0.0
  %3768 = vmatmul.mubr.f32.gmra.mxu0 %v3672
  %v3769 = vpop.f32.mrf.mxu0
  %v3770 = vadd.f32 0.0, %v3769
  %v3771 = vpop.f32.mrf.mxu0
  %3772 = vmatprep.mubr.f32.mxu0 0.0
  %3773 = vmatmul.mubr.f32.gmra.mxu0 %v3674
  %v3774 = vpop.f32.mrf.mxu0
  %v3775 = vadd.f32 0.0, %v3774
  %v3776 = vpop.f32.mrf.mxu0
  %3777 = vmatprep.mubr.f32.mxu0 0.0
  %3778 = vmatmul.mubr.f32.gmra.mxu0 %v3676
  %v3779 = vpop.f32.mrf.mxu0
  %v3780 = vadd.f32 0.0, %v3779
  %v3781 = vpop.f32.mrf.mxu0
  %3782 = vdwg.mxu0
  %3791 = vrot.lane.b32.xlu0 %v3622, 32
  %v3792 = vpop.permute.xlu0 %3791
  %3793 = vrot.lane.b32.xlu0 %v3623, 32
  %v3794 = vpop.permute.xlu0 %3793
  %3795 = vrot.lane.b32.xlu0 %v3624, 32
  %v3796 = vpop.permute.xlu0 %3795
  %3797 = vrot.lane.b32.xlu0 %v3625, 32
  %v3798 = vpop.permute.xlu0 %3797
  %3799 = vrot.lane.b32.xlu0 %v3626, 32
  %v3800 = vpop.permute.xlu0 %3799
  %3801 = vrot.lane.b32.xlu0 %v3627, 32
  %v3802 = vpop.permute.xlu0 %3801
  %3803 = vrot.lane.b32.xlu0 %v3628, 32
  %v3804 = vpop.permute.xlu0 %3803
  %3805 = vrot.lane.b32.xlu0 %v3629, 32
  %v3806 = vpop.permute.xlu0 %3805
  %v3807 = vsel %vm50, %v3792, 0
  %v3809 = vsel %vm50, %v3794, 0
  %v3811 = vsel %vm50, %v3796, 0
  %v3813 = vsel %vm50, %v3798, 0
  %v3815 = vsel %vm50, %v3800, 0
  %v3817 = vsel %vm50, %v3802, 0
  %v3819 = vsel %vm50, %v3804, 0
  %v3821 = vsel %vm50, %v3806, 0
  %3823 = vmatprep.subr.mxu0 0.0
  %3824 = vmatpush1.msra.mxu0 0.0
  %3825 = vmatprep.subr.mxu0 0.0
  %3826 = vmatpush1.msra.mxu0 0.0
  %3827 = vmatprep.subr.mxu0 0.0
  %3828 = vmatpush1.msra.mxu0 0.0
  %3829 = vmatprep.subr.mxu0 0.0
  %3830 = vmatpush1.msra.mxu0 0.0
  %3831 = vmatprep.subr.mxu0 0.0
  %3832 = vmatpush1.msra.mxu0 0.0
  %3833 = vmatprep.subr.mxu0 0.0
  %3834 = vmatpush1.msra.mxu0 0.0
  %3835 = vmatprep.subr.mxu0 0.0
  %3836 = vmatpush1.msra.mxu0 0.0
  %3837 = vmatprep.subr.mxu0 0.0
  %3838 = vmatpush1.msra.mxu0 0.0
  %3839 = vmatprep.subr.mxu0 0.0
  %3840 = vmatpush1.msra.mxu0 0.0
  %3841 = vmatprep.subr.mxu0 0.0
  %3842 = vmatpush1.msra.mxu0 0.0
  %3843 = vmatprep.subr.mxu0 0.0
  %3844 = vmatpush1.msra.mxu0 0.0
  %3845 = vmatprep.subr.mxu0 0.0
  %3846 = vmatpush1.msra.mxu0 0.0
  %3847 = vmatprep.subr.mxu0 0.0
  %3848 = vmatpush1.msra.mxu0 %v36
  %3849 = vmatprep.subr.mxu0 0.0
  %3850 = vmatpush1.msra.mxu0 %v35
  %3851 = vmatprep.subr.mxu0 0.0
  %3852 = vmatpush1.msra.mxu0 %v34
  %3853 = vmatprep.subr.mxu0 0.0
  %3854 = vmatpush1.msra.mxu0 %v33
  %3855 = vmatprep.subr.mxu0 0.0
  %3856 = vmatpush2.msra.mxu0 0.0
  %3857 = vmatprep.subr.mxu0 0.0
  %3858 = vmatpush2.msra.mxu0 0.0
  %3859 = vmatprep.subr.mxu0 0.0
  %3860 = vmatpush2.msra.mxu0 0.0
  %3861 = vmatprep.subr.mxu0 0.0
  %3862 = vmatpush2.msra.mxu0 0.0
  %3863 = vmatprep.subr.mxu0 0.0
  %3864 = vmatpush2.msra.mxu0 0.0
  %3865 = vmatprep.subr.mxu0 0.0
  %3866 = vmatpush2.msra.mxu0 0.0
  %3867 = vmatprep.subr.mxu0 0.0
  %3868 = vmatpush2.msra.mxu0 0.0
  %3869 = vmatprep.subr.mxu0 0.0
  %3870 = vmatpush2.msra.mxu0 0.0
  %3871 = vmatprep.subr.mxu0 0.0
  %3872 = vmatpush2.msra.mxu0 0.0
  %3873 = vmatprep.subr.mxu0 0.0
  %3874 = vmatpush2.msra.mxu0 0.0
  %3875 = vmatprep.subr.mxu0 0.0
  %3876 = vmatpush2.msra.mxu0 0.0
  %3877 = vmatprep.subr.mxu0 0.0
  %3878 = vmatpush2.msra.mxu0 0.0
  %3879 = vmatprep.subr.mxu0 0.0
  %3880 = vmatpush2.msra.mxu0 0.0
  %3881 = vmatprep.subr.mxu0 0.0
  %3882 = vmatpush2.msra.mxu0 0.0
  %3883 = vmatprep.subr.mxu0 0.0
  %3884 = vmatpush2.msra.mxu0 0.0
  %3885 = vmatprep.subr.mxu0 0.0
  %3886 = vmatpush2.msra.mxu0 0.0
  %3887 = vmatprep.mubr.f32.mxu0 0.0
  %3888 = vmatmul.mubr.f32.gmra.mxu0 %v3807
  %v3889 = vpop.f32.mrf.mxu0
  %v3890 = vadd.f32 %v3745, %v3889
  %v3891 = vpop.f32.mrf.mxu0
  %3892 = vmatprep.mubr.f32.mxu0 0.0
  %3893 = vmatmul.mubr.f32.gmra.mxu0 %v3809
  %v3894 = vpop.f32.mrf.mxu0
  %v3895 = vadd.f32 %v3750, %v3894
  %v3896 = vpop.f32.mrf.mxu0
  %3897 = vmatprep.mubr.f32.mxu0 0.0
  %3898 = vmatmul.mubr.f32.gmra.mxu0 %v3811
  %v3899 = vpop.f32.mrf.mxu0
  %v3900 = vadd.f32 %v3755, %v3899
  %v3901 = vpop.f32.mrf.mxu0
  %3902 = vmatprep.mubr.f32.mxu0 0.0
  %3903 = vmatmul.mubr.f32.gmra.mxu0 %v3813
  %v3904 = vpop.f32.mrf.mxu0
  %v3905 = vadd.f32 %v3760, %v3904
  %v3906 = vpop.f32.mrf.mxu0
  %3907 = vmatprep.mubr.f32.mxu0 0.0
  %3908 = vmatmul.mubr.f32.gmra.mxu0 %v3815
  %v3909 = vpop.f32.mrf.mxu0
  %v3910 = vadd.f32 %v3765, %v3909
  %v3911 = vpop.f32.mrf.mxu0
  %3912 = vmatprep.mubr.f32.mxu0 0.0
  %3913 = vmatmul.mubr.f32.gmra.mxu0 %v3817
  %v3914 = vpop.f32.mrf.mxu0
  %v3915 = vadd.f32 %v3770, %v3914
  %v3916 = vpop.f32.mrf.mxu0
  %3917 = vmatprep.mubr.f32.mxu0 0.0
  %3918 = vmatmul.mubr.f32.gmra.mxu0 %v3819
  %v3919 = vpop.f32.mrf.mxu0
  %v3920 = vadd.f32 %v3775, %v3919
  %v3921 = vpop.f32.mrf.mxu0
  %3922 = vmatprep.mubr.f32.mxu0 0.0
  %3923 = vmatmul.mubr.f32.gmra.mxu0 %v3821
  %v3924 = vpop.f32.mrf.mxu0
  %v3925 = vadd.f32 %v3780, %v3924
  %v3926 = vpop.f32.mrf.mxu0
  %3927 = vdwg.mxu0
  %v3928 = vadd.f32 %v3890, %v513
  %v3929 = vadd.f32 %v3895, %v513
  %v3930 = vadd.f32 %v3900, %v513
  %v3931 = vadd.f32 %v3905, %v513
  %v3932 = vadd.f32 %v3910, %v513
  %v3933 = vadd.f32 %v3915, %v513
  %v3934 = vadd.f32 %v3920, %v513
  %v3935 = vadd.f32 %v3925, %v513
  %v3936 = vmax.f32 %v3928, 0.0
  %v3937 = vmax.f32 %v3929, 0.0
  %v3938 = vmax.f32 %v3930, 0.0
  %v3939 = vmax.f32 %v3931, 0.0
  %v3940 = vmax.f32 %v3932, 0.0
  %v3941 = vmax.f32 %v3933, 0.0
  %v3942 = vmax.f32 %v3934, 0.0
  %v3943 = vmax.f32 %v3935, 0.0
  %v3945 = vsel %vm534, %v3936, 0
  %v3948 = vsel %vm534, %v3937, 0
  %v3951 = vsel %vm534, %v3938, 0
  %v3954 = vsel %vm534, %v3939, 0
  %v3957 = vsel %vm534, %v3940, 0
  %v3960 = vsel %vm534, %v3941, 0
  %v3963 = vsel %vm534, %v3942, 0
  %v3966 = vsel %vm534, %v3943, 0
  %3968 = vmatprep.subr.mxu0 0.0
  %3969 = vmatpush1.msra.mxu0 0.0
  %3970 = vmatprep.subr.mxu0 0.0
  %3971 = vmatpush1.msra.mxu0 0.0
  %3972 = vmatprep.subr.mxu0 0.0
  %3973 = vmatpush1.msra.mxu0 0.0
  %3974 = vmatprep.subr.mxu0 0.0
  %3975 = vmatpush1.msra.mxu0 0.0
  %3976 = vmatprep.subr.mxu0 0.0
  %3977 = vmatpush1.msra.mxu0 0.0
  %3978 = vmatprep.subr.mxu0 0.0
  %3979 = vmatpush1.msra.mxu0 0.0
  %3980 = vmatprep.subr.mxu0 0.0
  %3981 = vmatpush1.msra.mxu0 0.0
  %3982 = vmatprep.subr.mxu0 0.0
  %3983 = vmatpush1.msra.mxu0 0.0
  %3984 = vmatprep.subr.mxu0 0.0
  %3985 = vmatpush1.msra.mxu0 0.0
  %3986 = vmatprep.subr.mxu0 0.0
  %3987 = vmatpush1.msra.mxu0 0.0
  %3988 = vmatprep.subr.mxu0 0.0
  %3989 = vmatpush1.msra.mxu0 0.0
  %3990 = vmatprep.subr.mxu0 0.0
  %3991 = vmatpush1.msra.mxu0 0.0
  %3992 = vmatprep.subr.mxu0 0.0
  %3993 = vmatpush1.msra.mxu0 0.0
  %3994 = vmatprep.subr.mxu0 0.0
  %3995 = vmatpush1.msra.mxu0 %v561
  %3996 = vmatprep.subr.mxu0 0.0
  %3997 = vmatpush1.msra.mxu0 %v39
  %3998 = vmatprep.subr.mxu0 0.0
  %3999 = vmatpush1.msra.mxu0 %v38
  %4000 = vmatprep.subr.mxu0 0.0
  %4001 = vmatpush2.msra.mxu0 0.0
  %4002 = vmatprep.subr.mxu0 0.0
  %4003 = vmatpush2.msra.mxu0 0.0
  %4004 = vmatprep.subr.mxu0 0.0
  %4005 = vmatpush2.msra.mxu0 0.0
  %4006 = vmatprep.subr.mxu0 0.0
  %4007 = vmatpush2.msra.mxu0 0.0
  %4008 = vmatprep.subr.mxu0 0.0
  %4009 = vmatpush2.msra.mxu0 0.0
  %4010 = vmatprep.subr.mxu0 0.0
  %4011 = vmatpush2.msra.mxu0 0.0
  %4012 = vmatprep.subr.mxu0 0.0
  %4013 = vmatpush2.msra.mxu0 0.0
  %4014 = vmatprep.subr.mxu0 0.0
  %4015 = vmatpush2.msra.mxu0 0.0
  %4016 = vmatprep.subr.mxu0 0.0
  %4017 = vmatpush2.msra.mxu0 0.0
  %4018 = vmatprep.subr.mxu0 0.0
  %4019 = vmatpush2.msra.mxu0 0.0
  %4020 = vmatprep.subr.mxu0 0.0
  %4021 = vmatpush2.msra.mxu0 0.0
  %4022 = vmatprep.subr.mxu0 0.0
  %4023 = vmatpush2.msra.mxu0 0.0
  %4024 = vmatprep.subr.mxu0 0.0
  %4025 = vmatpush2.msra.mxu0 0.0
  %4026 = vmatprep.subr.mxu0 0.0
  %4027 = vmatpush2.msra.mxu0 0.0
  %4028 = vmatprep.subr.mxu0 0.0
  %4029 = vmatpush2.msra.mxu0 0.0
  %4030 = vmatprep.subr.mxu0 0.0
  %4031 = vmatpush2.msra.mxu0 0.0
  %4032 = vmatprep.mubr.f32.mxu0 0.0
  %4033 = vmatmul.mubr.f32.gmra.mxu0 %v3945
  %v4034 = vpop.f32.mrf.mxu0
  %v4035 = vadd.f32 %v533, %v4034
  %v4036 = vpop.f32.mrf.mxu0
  %4037 = vmatprep.mubr.f32.mxu0 0.0
  %4038 = vmatmul.mubr.f32.gmra.mxu0 %v3948
  %v4039 = vpop.f32.mrf.mxu0
  %v4040 = vadd.f32 %v533, %v4039
  %v4041 = vpop.f32.mrf.mxu0
  %4042 = vmatprep.mubr.f32.mxu0 0.0
  %4043 = vmatmul.mubr.f32.gmra.mxu0 %v3951
  %v4044 = vpop.f32.mrf.mxu0
  %v4045 = vadd.f32 %v533, %v4044
  %v4046 = vpop.f32.mrf.mxu0
  %4047 = vmatprep.mubr.f32.mxu0 0.0
  %4048 = vmatmul.mubr.f32.gmra.mxu0 %v3954
  %v4049 = vpop.f32.mrf.mxu0
  %v4050 = vadd.f32 %v533, %v4049
  %v4051 = vpop.f32.mrf.mxu0
  %4052 = vmatprep.mubr.f32.mxu0 0.0
  %4053 = vmatmul.mubr.f32.gmra.mxu0 %v3957
  %v4054 = vpop.f32.mrf.mxu0
  %v4055 = vadd.f32 %v533, %v4054
  %v4056 = vpop.f32.mrf.mxu0
  %4057 = vmatprep.mubr.f32.mxu0 0.0
  %4058 = vmatmul.mubr.f32.gmra.mxu0 %v3960
  %v4059 = vpop.f32.mrf.mxu0
  %v4060 = vadd.f32 %v533, %v4059
  %v4061 = vpop.f32.mrf.mxu0
  %4062 = vmatprep.mubr.f32.mxu0 0.0
  %4063 = vmatmul.mubr.f32.gmra.mxu0 %v3963
  %v4064 = vpop.f32.mrf.mxu0
  %v4065 = vadd.f32 %v533, %v4064
  %v4066 = vpop.f32.mrf.mxu0
  %4067 = vmatprep.mubr.f32.mxu0 0.0
  %4068 = vmatmul.mubr.f32.gmra.mxu0 %v3966
  %v4069 = vpop.f32.mrf.mxu0
  %v4070 = vadd.f32 %v533, %v4069
  %v4071 = vpop.f32.mrf.mxu0
  %4072 = vdwg.mxu0
  %v4073 = vsel %vm534, %v4035, 0.0
  %4074 = vadd.xlane.f32.xlu0 %v4073
  %v4075 = vpop.xlane.xlu0 %4074
  %v4076 = vsel %vm534, %v4040, 0.0
  %4077 = vadd.xlane.f32.xlu0 %v4076
  %v4078 = vpop.xlane.xlu0 %4077
  %v4079 = vsel %vm534, %v4045, 0.0
  %4080 = vadd.xlane.f32.xlu0 %v4079
  %v4081 = vpop.xlane.xlu0 %4080
  %v4082 = vsel %vm534, %v4050, 0.0
  %4083 = vadd.xlane.f32.xlu0 %v4082
  %v4084 = vpop.xlane.xlu0 %4083
  %v4085 = vsel %vm534, %v4055, 0.0
  %4086 = vadd.xlane.f32.xlu0 %v4085
  %v4087 = vpop.xlane.xlu0 %4086
  %v4088 = vsel %vm534, %v4060, 0.0
  %4089 = vadd.xlane.f32.xlu0 %v4088
  %v4090 = vpop.xlane.xlu0 %4089
  %v4091 = vsel %vm534, %v4065, 0.0
  %4092 = vadd.xlane.f32.xlu0 %v4091
  %v4093 = vpop.xlane.xlu0 %4092
  %v4094 = vsel %vm534, %v4070, 0.0
  %4095 = vadd.xlane.f32.xlu0 %v4094
  %v4096 = vpop.xlane.xlu0 %4095
  %v4097 = vmul.f32 %v4075, %v692
  %v4098 = vmul.f32 %v4078, %v692
  %v4099 = vmul.f32 %v4081, %v692
  %v4100 = vmul.f32 %v4084, %v692
  %v4101 = vmul.f32 %v4087, %v692
  %v4102 = vmul.f32 %v4090, %v692
  %v4103 = vmul.f32 %v4093, %v692
  %v4104 = vmul.f32 %v4096, %v692
  %v4105 = vsub.f32 %v4035, %v4097
  %v4106 = vsub.f32 %v4040, %v4098
  %v4107 = vsub.f32 %v4045, %v4099
  %v4108 = vsub.f32 %v4050, %v4100
  %v4109 = vsub.f32 %v4055, %v4101
  %v4110 = vsub.f32 %v4060, %v4102
  %v4111 = vsub.f32 %v4065, %v4103
  %v4112 = vsub.f32 %v4070, %v4104
  %v4113 = vmul.f32 %v4105, %v4105
  %v4114 = vmul.f32 %v4106, %v4106
  %v4115 = vmul.f32 %v4107, %v4107
  %v4116 = vmul.f32 %v4108, %v4108
  %v4117 = vmul.f32 %v4109, %v4109
  %v4118 = vmul.f32 %v4110, %v4110
  %v4119 = vmul.f32 %v4111, %v4111
  %v4120 = vmul.f32 %v4112, %v4112
  %v4121 = vsel %vm534, %v4113, 0.0
  %4122 = vadd.xlane.f32.xlu0 %v4121
  %v4123 = vpop.xlane.xlu0 %4122
  %v4124 = vsel %vm534, %v4114, 0.0
  %4125 = vadd.xlane.f32.xlu0 %v4124
  %v4126 = vpop.xlane.xlu0 %4125
  %v4127 = vsel %vm534, %v4115, 0.0
  %4128 = vadd.xlane.f32.xlu0 %v4127
  %v4129 = vpop.xlane.xlu0 %4128
  %v4130 = vsel %vm534, %v4116, 0.0
  %4131 = vadd.xlane.f32.xlu0 %v4130
  %v4132 = vpop.xlane.xlu0 %4131
  %v4133 = vsel %vm534, %v4117, 0.0
  %4134 = vadd.xlane.f32.xlu0 %v4133
  %v4135 = vpop.xlane.xlu0 %4134
  %v4136 = vsel %vm534, %v4118, 0.0
  %4137 = vadd.xlane.f32.xlu0 %v4136
  %v4138 = vpop.xlane.xlu0 %4137
  %v4139 = vsel %vm534, %v4119, 0.0
  %4140 = vadd.xlane.f32.xlu0 %v4139
  %v4141 = vpop.xlane.xlu0 %4140
  %v4142 = vsel %vm534, %v4120, 0.0
  %4143 = vadd.xlane.f32.xlu0 %v4142
  %v4144 = vpop.xlane.xlu0 %4143
  %v4145 = vmul.f32 %v4123, %v692
  %v4146 = vmul.f32 %v4126, %v692
  %v4147 = vmul.f32 %v4129, %v692
  %v4148 = vmul.f32 %v4132, %v692
  %v4149 = vmul.f32 %v4135, %v692
  %v4150 = vmul.f32 %v4138, %v692
  %v4151 = vmul.f32 %v4141, %v692
  %v4152 = vmul.f32 %v4144, %v692
  %v4153 = vadd.f32 %v4145, 1e-06
  %v4154 = vadd.f32 %v4146, 1e-06
  %v4155 = vadd.f32 %v4147, 1e-06
  %v4156 = vadd.f32 %v4148, 1e-06
  %v4157 = vadd.f32 %v4149, 1e-06
  %v4158 = vadd.f32 %v4150, 1e-06
  %v4159 = vadd.f32 %v4151, 1e-06
  %v4160 = vadd.f32 %v4152, 1e-06
  %v4161 = vrsqrt.pop %v4153
  %v4162 = vrsqrt.pop %v4154
  %v4163 = vrsqrt.pop %v4155
  %v4164 = vrsqrt.pop %v4156
  %v4165 = vrsqrt.pop %v4157
  %v4166 = vrsqrt.pop %v4158
  %v4167 = vrsqrt.pop %v4159
  %v4168 = vrsqrt.pop %v4160
  %v4169 = vmul.f32 %v4105, %v4161
  %v4170 = vmul.f32 %v4106, %v4162
  %v4171 = vmul.f32 %v4107, %v4163
  %v4172 = vmul.f32 %v4108, %v4164
  %v4173 = vmul.f32 %v4109, %v4165
  %v4174 = vmul.f32 %v4110, %v4166
  %v4175 = vmul.f32 %v4111, %v4167
  %v4176 = vmul.f32 %v4112, %v4168
  %v4178 = vsel %vm534, %v4169, 0
  %v4181 = vsel %vm534, %v4170, 0
  %v4184 = vsel %vm534, %v4171, 0
  %v4187 = vsel %vm534, %v4172, 0
  %v4190 = vsel %vm534, %v4173, 0
  %v4193 = vsel %vm534, %v4174, 0
  %v4196 = vsel %vm534, %v4175, 0
  %v4199 = vsel %vm534, %v4176, 0
  %4201 = vmatprep.subr.mxu0 0.0
  %4202 = vmatpush1.msra.mxu0 0.0
  %4203 = vmatprep.subr.mxu0 0.0
  %4204 = vmatpush1.msra.mxu0 0.0
  %4205 = vmatprep.subr.mxu0 0.0
  %4206 = vmatpush1.msra.mxu0 0.0
  %4207 = vmatprep.subr.mxu0 0.0
  %4208 = vmatpush1.msra.mxu0 0.0
  %4209 = vmatprep.subr.mxu0 0.0
  %4210 = vmatpush1.msra.mxu0 0.0
  %4211 = vmatprep.subr.mxu0 0.0
  %4212 = vmatpush1.msra.mxu0 0.0
  %4213 = vmatprep.subr.mxu0 0.0
  %4214 = vmatpush1.msra.mxu0 0.0
  %4215 = vmatprep.subr.mxu0 0.0
  %4216 = vmatpush1.msra.mxu0 0.0
  %4217 = vmatprep.subr.mxu0 0.0
  %4218 = vmatpush1.msra.mxu0 0.0
  %4219 = vmatprep.subr.mxu0 0.0
  %4220 = vmatpush1.msra.mxu0 0.0
  %4221 = vmatprep.subr.mxu0 0.0
  %4222 = vmatpush1.msra.mxu0 0.0
  %4223 = vmatprep.subr.mxu0 0.0
  %4224 = vmatpush1.msra.mxu0 0.0
  %4225 = vmatprep.subr.mxu0 0.0
  %4226 = vmatpush1.msra.mxu0 0.0
  %4227 = vmatprep.subr.mxu0 0.0
  %4228 = vmatpush1.msra.mxu0 %v802
  %4229 = vmatprep.subr.mxu0 0.0
  %4230 = vmatpush1.msra.mxu0 %v42
  %4231 = vmatprep.subr.mxu0 0.0
  %4232 = vmatpush1.msra.mxu0 %v41
  %4233 = vmatprep.subr.mxu0 0.0
  %4234 = vmatpush2.msra.mxu0 0.0
  %4235 = vmatprep.subr.mxu0 0.0
  %4236 = vmatpush2.msra.mxu0 0.0
  %4237 = vmatprep.subr.mxu0 0.0
  %4238 = vmatpush2.msra.mxu0 0.0
  %4239 = vmatprep.subr.mxu0 0.0
  %4240 = vmatpush2.msra.mxu0 0.0
  %4241 = vmatprep.subr.mxu0 0.0
  %4242 = vmatpush2.msra.mxu0 0.0
  %4243 = vmatprep.subr.mxu0 0.0
  %4244 = vmatpush2.msra.mxu0 0.0
  %4245 = vmatprep.subr.mxu0 0.0
  %4246 = vmatpush2.msra.mxu0 0.0
  %4247 = vmatprep.subr.mxu0 0.0
  %4248 = vmatpush2.msra.mxu0 0.0
  %4249 = vmatprep.subr.mxu0 0.0
  %4250 = vmatpush2.msra.mxu0 0.0
  %4251 = vmatprep.subr.mxu0 0.0
  %4252 = vmatpush2.msra.mxu0 0.0
  %4253 = vmatprep.subr.mxu0 0.0
  %4254 = vmatpush2.msra.mxu0 0.0
  %4255 = vmatprep.subr.mxu0 0.0
  %4256 = vmatpush2.msra.mxu0 0.0
  %4257 = vmatprep.subr.mxu0 0.0
  %4258 = vmatpush2.msra.mxu0 0.0
  %4259 = vmatprep.subr.mxu0 0.0
  %4260 = vmatpush2.msra.mxu0 0.0
  %4261 = vmatprep.subr.mxu0 0.0
  %4262 = vmatpush2.msra.mxu0 0.0
  %4263 = vmatprep.subr.mxu0 0.0
  %4264 = vmatpush2.msra.mxu0 0.0
  %4265 = vmatprep.mubr.f32.mxu0 0.0
  %4266 = vmatmul.mubr.f32.gmra.mxu0 %v4178
  %v4267 = vpop.f32.mrf.mxu0
  %v4268 = vadd.f32 %v776, %v4267
  %v4269 = vpop.f32.mrf.mxu0
  %4270 = vmatprep.mubr.f32.mxu0 0.0
  %4271 = vmatmul.mubr.f32.gmra.mxu0 %v4181
  %v4272 = vpop.f32.mrf.mxu0
  %v4273 = vadd.f32 %v776, %v4272
  %v4274 = vpop.f32.mrf.mxu0
  %4275 = vmatprep.mubr.f32.mxu0 0.0
  %4276 = vmatmul.mubr.f32.gmra.mxu0 %v4184
  %v4277 = vpop.f32.mrf.mxu0
  %v4278 = vadd.f32 %v776, %v4277
  %v4279 = vpop.f32.mrf.mxu0
  %4280 = vmatprep.mubr.f32.mxu0 0.0
  %4281 = vmatmul.mubr.f32.gmra.mxu0 %v4187
  %v4282 = vpop.f32.mrf.mxu0
  %v4283 = vadd.f32 %v776, %v4282
  %v4284 = vpop.f32.mrf.mxu0
  %4285 = vmatprep.mubr.f32.mxu0 0.0
  %4286 = vmatmul.mubr.f32.gmra.mxu0 %v4190
  %v4287 = vpop.f32.mrf.mxu0
  %v4288 = vadd.f32 %v776, %v4287
  %v4289 = vpop.f32.mrf.mxu0
  %4290 = vmatprep.mubr.f32.mxu0 0.0
  %4291 = vmatmul.mubr.f32.gmra.mxu0 %v4193
  %v4292 = vpop.f32.mrf.mxu0
  %v4293 = vadd.f32 %v776, %v4292
  %v4294 = vpop.f32.mrf.mxu0
  %4295 = vmatprep.mubr.f32.mxu0 0.0
  %4296 = vmatmul.mubr.f32.gmra.mxu0 %v4196
  %v4297 = vpop.f32.mrf.mxu0
  %v4298 = vadd.f32 %v776, %v4297
  %v4299 = vpop.f32.mrf.mxu0
  %4300 = vmatprep.mubr.f32.mxu0 0.0
  %4301 = vmatmul.mubr.f32.gmra.mxu0 %v4199
  %v4302 = vpop.f32.mrf.mxu0
  %v4303 = vadd.f32 %v776, %v4302
  %v4304 = vpop.f32.mrf.mxu0
  %4305 = vdwg.mxu0
  %v4306 = vmax.f32 %v4268, 0.0
  %v4307 = vmax.f32 %v4273, 0.0
  %v4308 = vmax.f32 %v4278, 0.0
  %v4309 = vmax.f32 %v4283, 0.0
  %v4310 = vmax.f32 %v4288, 0.0
  %v4311 = vmax.f32 %v4293, 0.0
  %v4312 = vmax.f32 %v4298, 0.0
  %v4313 = vmax.f32 %v4303, 0.0
  %v4314 = vld [vmem:[%s2 + $0xb8] sm:$0xff]
  %v4315 = vld [vmem:[%s2 + $0xc0] sm:$0xff]
  %v4316 = vld [vmem:[%s2 + $0xc8] sm:$0xff]
  %v4317 = vld [vmem:[%s2 + $0xd0] sm:$0xff]
  %v4319 = vsel %vm50, %v4306, 0
  %v4322 = vsel %vm50, %v4307, 0
  %v4325 = vsel %vm50, %v4308, 0
  %v4328 = vsel %vm50, %v4309, 0
  %v4331 = vsel %vm50, %v4310, 0
  %v4334 = vsel %vm50, %v4311, 0
  %v4337 = vsel %vm50, %v4312, 0
  %v4340 = vsel %vm50, %v4313, 0
  %4342 = vmatprep.subr.mxu0 0.0
  %4343 = vmatpush1.msra.mxu0 0.0
  %4344 = vmatprep.subr.mxu0 0.0
  %4345 = vmatpush1.msra.mxu0 0.0
  %4346 = vmatprep.subr.mxu0 0.0
  %4347 = vmatpush1.msra.mxu0 0.0
  %4348 = vmatprep.subr.mxu0 0.0
  %4349 = vmatpush1.msra.mxu0 0.0
  %4350 = vmatprep.subr.mxu0 0.0
  %4351 = vmatpush1.msra.mxu0 0.0
  %4352 = vmatprep.subr.mxu0 0.0
  %4353 = vmatpush1.msra.mxu0 0.0
  %4354 = vmatprep.subr.mxu0 0.0
  %4355 = vmatpush1.msra.mxu0 0.0
  %4356 = vmatprep.subr.mxu0 0.0
  %4357 = vmatpush1.msra.mxu0 0.0
  %4358 = vmatprep.subr.mxu0 0.0
  %4359 = vmatpush1.msra.mxu0 0.0
  %4360 = vmatprep.subr.mxu0 0.0
  %4361 = vmatpush1.msra.mxu0 0.0
  %4362 = vmatprep.subr.mxu0 0.0
  %4363 = vmatpush1.msra.mxu0 0.0
  %4364 = vmatprep.subr.mxu0 0.0
  %4365 = vmatpush1.msra.mxu0 0.0
  %4366 = vmatprep.subr.mxu0 0.0
  %4367 = vmatpush1.msra.mxu0 %v4317
  %4368 = vmatprep.subr.mxu0 0.0
  %4369 = vmatpush1.msra.mxu0 %v4316
  %4370 = vmatprep.subr.mxu0 0.0
  %4371 = vmatpush1.msra.mxu0 %v4315
  %4372 = vmatprep.subr.mxu0 0.0
  %4373 = vmatpush1.msra.mxu0 %v4314
  %4374 = vmatprep.subr.mxu0 0.0
  %4375 = vmatpush2.msra.mxu0 0.0
  %4376 = vmatprep.subr.mxu0 0.0
  %4377 = vmatpush2.msra.mxu0 0.0
  %4378 = vmatprep.subr.mxu0 0.0
  %4379 = vmatpush2.msra.mxu0 0.0
  %4380 = vmatprep.subr.mxu0 0.0
  %4381 = vmatpush2.msra.mxu0 0.0
  %4382 = vmatprep.subr.mxu0 0.0
  %4383 = vmatpush2.msra.mxu0 0.0
  %4384 = vmatprep.subr.mxu0 0.0
  %4385 = vmatpush2.msra.mxu0 0.0
  %4386 = vmatprep.subr.mxu0 0.0
  %4387 = vmatpush2.msra.mxu0 0.0
  %4388 = vmatprep.subr.mxu0 0.0
  %4389 = vmatpush2.msra.mxu0 0.0
  %4390 = vmatprep.subr.mxu0 0.0
  %4391 = vmatpush2.msra.mxu0 0.0
  %4392 = vmatprep.subr.mxu0 0.0
  %4393 = vmatpush2.msra.mxu0 0.0
  %4394 = vmatprep.subr.mxu0 0.0
  %4395 = vmatpush2.msra.mxu0 0.0
  %4396 = vmatprep.subr.mxu0 0.0
  %4397 = vmatpush2.msra.mxu0 0.0
  %4398 = vmatprep.subr.mxu0 0.0
  %4399 = vmatpush2.msra.mxu0 0.0
  %4400 = vmatprep.subr.mxu0 0.0
  %4401 = vmatpush2.msra.mxu0 0.0
  %4402 = vmatprep.subr.mxu0 0.0
  %4403 = vmatpush2.msra.mxu0 0.0
  %4404 = vmatprep.subr.mxu0 0.0
  %4405 = vmatpush2.msra.mxu0 0.0
  %4406 = vmatprep.mubr.f32.mxu0 0.0
  %4407 = vmatmul.mubr.f32.gmra.mxu0 %v4319
  %v4408 = vpop.f32.mrf.mxu0
  %v4409 = vadd.f32 0.0, %v4408
  %v4410 = vpop.f32.mrf.mxu0
  %4411 = vmatprep.mubr.f32.mxu0 0.0
  %4412 = vmatmul.mubr.f32.gmra.mxu0 %v4322
  %v4413 = vpop.f32.mrf.mxu0
  %v4414 = vadd.f32 0.0, %v4413
  %v4415 = vpop.f32.mrf.mxu0
  %4416 = vmatprep.mubr.f32.mxu0 0.0
  %4417 = vmatmul.mubr.f32.gmra.mxu0 %v4325
  %v4418 = vpop.f32.mrf.mxu0
  %v4419 = vadd.f32 0.0, %v4418
  %v4420 = vpop.f32.mrf.mxu0
  %4421 = vmatprep.mubr.f32.mxu0 0.0
  %4422 = vmatmul.mubr.f32.gmra.mxu0 %v4328
  %v4423 = vpop.f32.mrf.mxu0
  %v4424 = vadd.f32 0.0, %v4423
  %v4425 = vpop.f32.mrf.mxu0
  %4426 = vmatprep.mubr.f32.mxu0 0.0
  %4427 = vmatmul.mubr.f32.gmra.mxu0 %v4331
  %v4428 = vpop.f32.mrf.mxu0
  %v4429 = vadd.f32 0.0, %v4428
  %v4430 = vpop.f32.mrf.mxu0
  %4431 = vmatprep.mubr.f32.mxu0 0.0
  %4432 = vmatmul.mubr.f32.gmra.mxu0 %v4334
  %v4433 = vpop.f32.mrf.mxu0
  %v4434 = vadd.f32 0.0, %v4433
  %v4435 = vpop.f32.mrf.mxu0
  %4436 = vmatprep.mubr.f32.mxu0 0.0
  %4437 = vmatmul.mubr.f32.gmra.mxu0 %v4337
  %v4438 = vpop.f32.mrf.mxu0
  %v4439 = vadd.f32 0.0, %v4438
  %v4440 = vpop.f32.mrf.mxu0
  %4441 = vmatprep.mubr.f32.mxu0 0.0
  %4442 = vmatmul.mubr.f32.gmra.mxu0 %v4340
  %v4443 = vpop.f32.mrf.mxu0
  %v4444 = vadd.f32 0.0, %v4443
  %v4445 = vpop.f32.mrf.mxu0
  %4446 = vdwg.mxu0
  %v4447 = vadd.f32 %v3315, %v4409
  %v4448 = vadd.f32 %v3316, %v4414
  %v4449 = vadd.f32 %v3317, %v4419
  %v4450 = vadd.f32 %v3318, %v4424
  %v4451 = vadd.f32 %v3319, %v4429
  %v4452 = vadd.f32 %v3320, %v4434
  %v4453 = vadd.f32 %v3321, %v4439
  %v4454 = vadd.f32 %v3322, %v4444
  %v4455 = vlaneseq
  %v4456 = vshrl.u32 %v4455, 7
  %v4457 = vsub.s32 3, %v4456
  %v4458 = vrot.slane %v44, %v4457
  %v4459 = vadd.f32 %v4447, %v4458
  %v4460 = vadd.f32 %v4448, %v4458
  %v4461 = vadd.f32 %v4449, %v4458
  %v4462 = vadd.f32 %v4450, %v4458
  %v4463 = vadd.f32 %v4451, %v4458
  %v4464 = vadd.f32 %v4452, %v4458
  %v4465 = vadd.f32 %v4453, %v4458
  %v4466 = vadd.f32 %v4454, %v4458
  %4467 = vst [vmem:[%s4] sm:$0xff] %v4459
  %4468 = vst [vmem:[%s4 + $0x8] sm:$0xff] %v4460
  %4469 = vst [vmem:[%s4 + $0x10] sm:$0xff] %v4461
  %4470 = vst [vmem:[%s4 + $0x18] sm:$0xff] %v4462
  %4471 = vst [vmem:[%s4 + $0x20] sm:$0xff] %v4463
  %4472 = vst [vmem:[%s4 + $0x28] sm:$0xff] %v4464
  %4473 = vst [vmem:[%s4 + $0x30] sm:$0xff] %v4465
  %4474 = vst [vmem:[%s4 + $0x38] sm:$0xff] %v4466
  // Predicated region
  $region18: #{vert_inter_info_forward.1} parent=0 // pred_check
    _
  $region19: #{vert_inter_info_forward.1} parent=0 // pred_check_branch
    %4476 = sbr.rel (0) target = $region21
  $region20: #{vert_inter_info_forward.1} parent=0 // pred_region
    _
  $region21: #{vert_inter_info_forward.1} parent=0 // pred_fallthru
    _
  // Predicated region
  $region22: #{vert_inter_info_forward.1} parent=0 // pred_check
    _
  $region23: #{vert_inter_info_forward.1} parent=0 // pred_check_branch
    %4478 = sbr.rel (0) target = $region25
  $region24: #{vert_inter_info_forward.1} parent=0 // pred_region
    _
  $region25: #{vert_inter_info_forward.1} parent=0 // pred_fallthru
    _

</llo_original>
